<compile_context>
chip_gen: v7x
topology: tpu7x:2x2x1
jax: 0.10.0
libtpu: 0.0.40
codegen_flags: <defaults>
</compile_context>

<pallas_src>
import functools

import jax
import jax.numpy as jnp
from jax import lax
from jax.experimental import pallas as pl
from jax.experimental.pallas import tpu as pltpu


def _scam_kernel(W, C, eps, compute_dtype, approx_softmax,
                 xl_ref, xr_ref, wconv_ref, amean_ref, amask_ref, vec_ref,
                 ol_ref, or_ref):
    th, wc = xl_ref.shape                     # (TH, W*C), lane-dense

    xl = xl_ref[...]                          # (TH, WC) f32
    xr = xr_ref[...]
    amean = amean_ref[...]                    # (WC, WC) block-diag 1/C, f32
    mask = amask_ref[...]                     # (N, N) additive block mask, f32
    vecs = vec_ref[...]                       # (10, WC) f32, channel-tiled

    ln_l_w, ln_l_b = vecs[0:1], vecs[1:2]
    ln_r_w, ln_r_b = vecs[2:3], vecs[3:4]
    b_ql, b_qr = vecs[4:5], vecs[5:6]         # q_l bias already holds *scale
    b_vl, b_vr = vecs[6:7], vecs[7:8]
    beta, gamma = vecs[8:9], vecs[9:10]

    def layer_norm(x, g, b):
        # Per-pixel channel stats via a block-diagonal averaging matmul:
        # mu[:, w*C+c] = mean_c x[:, w*C+:] for every pixel w (lane-dense).
        mu = jnp.dot(x, amean, preferred_element_type=jnp.float32)
        var = jnp.dot(jnp.square(x - mu), amean,
                      preferred_element_type=jnp.float32)
        return (x - mu) * lax.rsqrt(var + eps) * g + b

    nl = layer_norm(xl, ln_l_w, ln_l_b)
    nr = layer_norm(xr, ln_r_w, ln_r_b)

    def conv1x1(x, idx, bias):
        # Block-diagonal (WC, WC) weight -> lane-dense conv, contraction WC.
        y = jnp.dot(x.astype(compute_dtype), wconv_ref[idx],
                    preferred_element_type=jnp.float32)
        return y + bias

    q_l_d = conv1x1(nl, 0, b_ql)              # (TH, WC) f32, scale folded in
    q_r_d = conv1x1(nr, 1, b_qr)
    v_l_d = conv1x1(xl, 2, b_vl)
    v_r_d = conv1x1(xr, 3, b_vr)

    # Lane-dense (TH, W*C)  <->  per-pixel (N, C) with N = W*TH (w-major rows):
    # built only from static slices + concatenates (robust Mosaic lowering).
    def to_pixels(xd):                        # (TH, WC) -> (W*TH, C)
        return jnp.concatenate([xd[:, w * C:(w + 1) * C] for w in range(W)],
                               axis=0)

    def to_dense(y):                          # (W*TH, C) -> (TH, WC)
        return jnp.concatenate([y[w * th:(w + 1) * th, :] for w in range(W)],
                               axis=1)

    q_l = to_pixels(q_l_d).astype(compute_dtype)   # (N, C)
    q_r = to_pixels(q_r_d).astype(compute_dtype)
    v_l = to_pixels(v_l_d).astype(compute_dtype)
    v_r = to_pixels(v_r_d).astype(compute_dtype)

    # One big Gram matmul over all pixels of the block; the additive mask
    # (-1e30 where epipolar rows differ) makes the softmax / PV products
    # per-row exact (exp(masked) == 0), replacing TH tiny per-row matmuls.
    s = jnp.einsum('nc,mc->nm', q_l, q_r,
                   preferred_element_type=jnp.float32)    # (N, N)
    sm = s + mask
    smt = jnp.transpose(sm)        # mask is symmetric -> equals s^T + mask

    def softmax_last(a):
        m = jnp.max(a, axis=-1, keepdims=True)
        e = jnp.exp(a - m)
        z = jnp.sum(e, axis=-1, keepdims=True)
        if approx_softmax:
            return e * pl.reciprocal(z, approx=True)       # EUP slot
        return e / z

    p_r2l = softmax_last(sm).astype(compute_dtype)         # (N, N)
    p_l2r = softmax_last(smt).astype(compute_dtype)

    f_r2l = jnp.dot(p_r2l, v_r, preferred_element_type=jnp.float32)  # (N, C)
    f_l2r = jnp.dot(p_l2r, v_l, preferred_element_type=jnp.float32)

    # Residual add + beta/gamma scaling and stores are fully lane-dense.
    ol_ref[...] = xl + to_dense(f_r2l) * beta
    or_ref[...] = xr + to_dense(f_l2r) * gamma


def _pick_row_chunk(num_rows, w, c, device_kind=None):
    """Pick TH (epipolar rows per grid step) and a vmem_limit_bytes value
    based on the TPU generation (review: generous budgets on 128 MiB
    v5e/v6e, tight + >=2 grid steps only on the 64 MiB / 2-TC v7x)."""
    kind = (device_kind or "").lower()
    if "v7" in kind:
        budget, min_steps, vmem_limit = 20 << 20, 2, 48 << 20
    elif "v6" in kind:
        budget, min_steps, vmem_limit = 40 << 20, 1, 100 << 20
    elif "v5" in kind:
        budget, min_steps, vmem_limit = 24 << 20, 1, 100 << 20
    else:
        budget, min_steps, vmem_limit = 12 << 20, 1, None   # default scoped VMEM

    wc = w * c
    const_bytes = 2 * ((4 * wc * wc + wc * wc + 10 * wc) * 4)

    def step_bytes(th):
        n = th * w
        return (8 * th * wc * 4        # in/out blocks, double-buffered
                + 16 * th * wc * 4     # dense + per-pixel intermediates
                + 5 * n * n * 4        # logits, logits^T, 2 softmaxes, mask
                + const_bytes)

    cands = [d for d in range(1, num_rows + 1)
             if num_rows % d == 0 and (d % 8 == 0 or d == num_rows)]
    multi = [d for d in cands if num_rows // d >= min_steps]
    if multi:
        cands = multi
    fitting = [d for d in cands if step_bytes(d) <= budget]
    th = max(fitting) if fitting else min(cands)
    return th, vmem_limit


def scam_forward_nhwc(x_l, x_r, params, *, compute_dtype=jnp.float32,
                      approx_softmax=True, eps=1e-6):
    """x_l, x_r: (B, H, W, C) float32.  Returns (out_l, out_r) NHWC."""
    B, H, W, C = x_l.shape
    R = B * H
    WC = W * C
    scale = float(C) ** (-0.5)

    # Lane-dense activations: one (W*C)-wide row per epipolar line.
    xl = x_l.reshape(R, WC).astype(jnp.float32)
    xr = x_r.reshape(R, WC).astype(jnp.float32)

    device_kind = None
    try:
        device_kind = jax.devices()[0].device_kind
    except Exception:
        pass
    TH, vmem_limit = _pick_row_chunk(R, W, C, device_kind)
    N = TH * W

    # Constants (built once, grid-invariant blocks):
    eye_w = jnp.eye(W, dtype=jnp.float32)

    def blkdiag(m):                                   # (C,C) -> (WC,WC)
        return jnp.kron(eye_w, m.astype(jnp.float32))

    wconv = jnp.stack(
        [blkdiag(params["wl1"].T * scale),            # 1/sqrt(C) folded in
         blkdiag(params["wr1"].T),
         blkdiag(params["wl2"].T),
         blkdiag(params["wr2"].T)], axis=0).astype(compute_dtype)  # (4,WC,WC)

    amean = jnp.kron(eye_w, jnp.full((C, C), 1.0 / C, jnp.float32))  # (WC,WC)

    t_of = jnp.arange(N, dtype=jnp.int32) % TH
    amask = jnp.where(t_of[:, None] == t_of[None, :],
                      0.0, -1e30).astype(jnp.float32)                # (N, N)

    def tile_vec(v):
        return jnp.tile(v.reshape(1, C).astype(jnp.float32), (1, W))

    vecs = jnp.concatenate(
        [tile_vec(params["ln_l_w"]), tile_vec(params["ln_l_b"]),
         tile_vec(params["ln_r_w"]), tile_vec(params["ln_r_b"]),
         tile_vec(params["bl1"]) * scale, tile_vec(params["br1"]),
         tile_vec(params["bl2"]), tile_vec(params["br2"]),
         tile_vec(params["beta"]), tile_vec(params["gamma"])],
        axis=0)                                                      # (10, WC)

    grid = (R // TH,)
    x_spec = pl.BlockSpec((TH, WC), lambda i: (i, 0))
    wconv_spec = pl.BlockSpec((4, WC, WC), lambda i: (0, 0, 0))
    amean_spec = pl.BlockSpec((WC, WC), lambda i: (0, 0))
    amask_spec = pl.BlockSpec((N, N), lambda i: (0, 0))
    vec_spec = pl.BlockSpec((vecs.shape[0], WC), lambda i: (0, 0))

    kern = functools.partial(_scam_kernel, W, C, eps,
                             compute_dtype, approx_softmax)

    cp_kwargs = dict(dimension_semantics=("parallel",))
    if vmem_limit is not None:
        cp_kwargs["vmem_limit_bytes"] = vmem_limit

    out_l, out_r = pl.pallas_call(
        kern,
        out_shape=(jax.ShapeDtypeStruct((R, WC), jnp.float32),
                   jax.ShapeDtypeStruct((R, WC), jnp.float32)),
        grid_spec=pltpu.PrefetchScalarGridSpec(
            num_scalar_prefetch=0,
            grid=grid,
            in_specs=[x_spec, x_spec, wconv_spec, amean_spec, amask_spec,
                      vec_spec],
            out_specs=[x_spec, x_spec]),
        compiler_params=pltpu.CompilerParams(**cp_kwargs),
    )(xl, xr, wconv, amean, amask, vecs)

    return out_l.reshape(B, H, W, C), out_r.reshape(B, H, W, C)


def scam_forward(x_l, x_r, params, *, compute_dtype=jnp.float32,
                 approx_softmax=True, eps=1e-6):
    """NCHW module interface (matches the PyTorch forward).  NHWC callers
    should use scam_forward_nhwc and skip the transposes."""
    xl = jnp.transpose(x_l, (0, 2, 3, 1))
    xr = jnp.transpose(x_r, (0, 2, 3, 1))
    out_l, out_r = scam_forward_nhwc(xl, xr, params,
                                     compute_dtype=compute_dtype,
                                     approx_softmax=approx_softmax, eps=eps)
    return (jnp.transpose(out_l, (0, 3, 1, 2)),
            jnp.transpose(out_r, (0, 3, 1, 2)))


def scam_reference(x_l, x_r, p, eps=1e-6):
    """Pure-JAX NCHW reference mirroring the PyTorch forward exactly."""
    C = x_l.shape[1]
    scale = float(C) ** (-0.5)

    def ln(x, w, b):
        mu = jnp.mean(x, axis=1, keepdims=True)
        var = jnp.mean((x - mu) ** 2, axis=1, keepdims=True)
        y = (x - mu) / jnp.sqrt(var + eps)
        return y * w.reshape(1, C, 1, 1) + b.reshape(1, C, 1, 1)

    def conv1x1(x, w, b):
        return jnp.einsum('bchw,oc->bohw', x, w) + b.reshape(1, C, 1, 1)

    Q_l = jnp.transpose(conv1x1(ln(x_l, p["ln_l_w"][0], p["ln_l_b"][0]),
                                p["wl1"], p["bl1"][0]), (0, 2, 3, 1))
    Q_r_T = jnp.transpose(conv1x1(ln(x_r, p["ln_r_w"][0], p["ln_r_b"][0]),
                                  p["wr1"], p["br1"][0]), (0, 2, 1, 3))
    V_l = jnp.transpose(conv1x1(x_l, p["wl2"], p["bl2"][0]), (0, 2, 3, 1))
    V_r = jnp.transpose(conv1x1(x_r, p["wr2"], p["br2"][0]), (0, 2, 3, 1))

    attn = jnp.matmul(Q_l, Q_r_T) * scale
    F_r2l = jnp.matmul(jax.nn.softmax(attn, axis=-1), V_r)
    F_l2r = jnp.matmul(jax.nn.softmax(jnp.transpose(attn, (0, 1, 3, 2)),
                                      axis=-1), V_l)
    F_r2l = jnp.transpose(F_r2l, (0, 3, 1, 2)) * p["beta"][0].reshape(1, C, 1, 1)
    F_l2r = jnp.transpose(F_l2r, (0, 3, 1, 2)) * p["gamma"][0].reshape(1, C, 1, 1)
    return x_l + F_r2l, x_r + F_l2r


def make_params(key, C):
    ks = jax.random.split(key, 16)
    n = lambda k, shape, s=0.1: (s * jax.random.normal(k, shape)).astype(jnp.float32)
    # NOTE: PyTorch init has beta/gamma = zeros and LN weight=1/bias=0; we use
    # small deterministic random values so the full compute path is exercised.
    return {
        "ln_l_w": 1.0 + n(ks[0], (1, C)), "ln_l_b": n(ks[1], (1, C)),
        "ln_r_w": 1.0 + n(ks[2], (1, C)), "ln_r_b": n(ks[3], (1, C)),
        "wl1": n(ks[4], (C, C), 0.3), "bl1": n(ks[5], (1, C)),
        "wr1": n(ks[6], (C, C), 0.3), "br1": n(ks[7], (1, C)),
        "wl2": n(ks[8], (C, C), 0.3), "bl2": n(ks[9], (1, C)),
        "wr2": n(ks[10], (C, C), 0.3), "br2": n(ks[11], (1, C)),
        "beta": n(ks[12], (1, C)), "gamma": n(ks[13], (1, C)),
    }


if __name__ == "__main__":
    B, C, H, W = 2, 8, 8, 16
    key = jax.random.PRNGKey(0)
    k_xl, k_xr, k_p = jax.random.split(key, 3)
    x_l = jax.random.normal(k_xl, (B, C, H, W), dtype=jnp.float32)
    x_r = jax.random.normal(k_xr, (B, C, H, W), dtype=jnp.float32)
    params = make_params(k_p, C)

    ref_l, ref_r = scam_reference(x_l, x_r, params)

    # 1) Validation config: f32 MXU operands, exact softmax normalization.
    out_l, out_r = scam_forward(x_l, x_r, params,
                                compute_dtype=jnp.float32,
                                approx_softmax=False)
    jax.block_until_ready((out_l, out_r))
    assert out_l.shape == (B, C, H, W) and out_r.shape == (B, C, H, W)
    assert jnp.allclose(out_l, ref_l, atol=1e-2, rtol=1e-2)
    assert jnp.allclose(out_r, ref_r, atol=1e-2, rtol=1e-2)

    # 2) Performance config (v6e/v7x): bf16 MXU operands (f32 accumulation)
    #    + approximate (EUP) softmax reciprocal.
    fast_l, fast_r = scam_forward(x_l, x_r, params,
                                  compute_dtype=jnp.bfloat16,
                                  approx_softmax=True)
    jax.block_until_ready((fast_l, fast_r))
    assert jnp.allclose(fast_l, ref_l, atol=5e-2, rtol=5e-2)
    assert jnp.allclose(fast_r, ref_r, atol=5e-2, rtol=5e-2)

    print("KERNEL_OK")
</pallas_src>

<mosaic_0001>
module attributes {stable_mosaic.version = 11 : i64} {
  func.func @_scam_kernel(%arg0: i32, %arg1: memref<16x128xf32, #tpu.memory_space<vmem>>, %arg2: memref<16x128xf32, #tpu.memory_space<vmem>>, %arg3: memref<4x128x128xf32, #tpu.memory_space<vmem>>, %arg4: memref<128x128xf32, #tpu.memory_space<vmem>>, %arg5: memref<256x256xf32, #tpu.memory_space<vmem>>, %arg6: memref<10x128xf32, #tpu.memory_space<vmem>>, %arg7: memref<16x128xf32, #tpu.memory_space<vmem>>, %arg8: memref<16x128xf32, #tpu.memory_space<vmem>>) attributes {dimension_semantics = [#tpu.dimension_semantics<parallel>], iteration_bounds = array<i64: 1>, scalar_prefetch = 0 : i64, scratch_operands = 0 : i64, tpu.core_type = #tpu.core_type<tc>, window_params = [{transform_indices = @transform_0, window_bounds = array<i64: 16, 128>}, {transform_indices = @transform_1, window_bounds = array<i64: 16, 128>}, {pipeline_mode = #tpu.pipeline_mode<synchronous>, transform_indices = @transform_2, window_bounds = array<i64: 4, 128, 128>}, {pipeline_mode = #tpu.pipeline_mode<synchronous>, transform_indices = @transform_3, window_bounds = array<i64: 128, 128>}, {pipeline_mode = #tpu.pipeline_mode<synchronous>, transform_indices = @transform_4, window_bounds = array<i64: 256, 256>}, {pipeline_mode = #tpu.pipeline_mode<synchronous>, transform_indices = @transform_5, window_bounds = array<i64: 10, 128>}, {transform_indices = @transform_6, window_bounds = array<i64: 16, 128>}, {transform_indices = @transform_7, window_bounds = array<i64: 16, 128>}]} {
    %c0 = arith.constant 0 : index
    %c0_0 = arith.constant 0 : index
    %0 = vector.load %arg1[%c0, %c0_0] : memref<16x128xf32, #tpu.memory_space<vmem>>, vector<16x128xf32>
    %c0_1 = arith.constant 0 : index
    %c0_2 = arith.constant 0 : index
    %1 = vector.load %arg2[%c0_1, %c0_2] : memref<16x128xf32, #tpu.memory_space<vmem>>, vector<16x128xf32>
    %c0_3 = arith.constant 0 : index
    %c0_4 = arith.constant 0 : index
    %2 = vector.load %arg4[%c0_3, %c0_4] : memref<128x128xf32, #tpu.memory_space<vmem>>, vector<128x128xf32>
    %c0_5 = arith.constant 0 : index
    %c0_6 = arith.constant 0 : index
    %3 = vector.load %arg5[%c0_5, %c0_6] : memref<256x256xf32, #tpu.memory_space<vmem>>, vector<256x256xf32>
    %c0_7 = arith.constant 0 : index
    %c0_8 = arith.constant 0 : index
    %4 = vector.load %arg6[%c0_7, %c0_8] : memref<10x128xf32, #tpu.memory_space<vmem>>, vector<10x128xf32>
    %5 = vector.extract_strided_slice %4 {offsets = [0, 0], sizes = [1, 128], strides = [1, 1]} : vector<10x128xf32> to vector<1x128xf32>
    %6 = vector.extract_strided_slice %4 {offsets = [1, 0], sizes = [1, 128], strides = [1, 1]} : vector<10x128xf32> to vector<1x128xf32>
    %7 = vector.extract_strided_slice %4 {offsets = [2, 0], sizes = [1, 128], strides = [1, 1]} : vector<10x128xf32> to vector<1x128xf32>
    %8 = vector.extract_strided_slice %4 {offsets = [3, 0], sizes = [1, 128], strides = [1, 1]} : vector<10x128xf32> to vector<1x128xf32>
    %9 = vector.extract_strided_slice %4 {offsets = [4, 0], sizes = [1, 128], strides = [1, 1]} : vector<10x128xf32> to vector<1x128xf32>
    %10 = vector.extract_strided_slice %4 {offsets = [5, 0], sizes = [1, 128], strides = [1, 1]} : vector<10x128xf32> to vector<1x128xf32>
    %11 = vector.extract_strided_slice %4 {offsets = [6, 0], sizes = [1, 128], strides = [1, 1]} : vector<10x128xf32> to vector<1x128xf32>
    %12 = vector.extract_strided_slice %4 {offsets = [7, 0], sizes = [1, 128], strides = [1, 1]} : vector<10x128xf32> to vector<1x128xf32>
    %13 = vector.extract_strided_slice %4 {offsets = [8, 0], sizes = [1, 128], strides = [1, 1]} : vector<10x128xf32> to vector<1x128xf32>
    %14 = vector.extract_strided_slice %4 {offsets = [9, 0], sizes = [1, 128], strides = [1, 1]} : vector<10x128xf32> to vector<1x128xf32>
    %cst = arith.constant dense<0.000000e+00> : vector<16x128xf32>
    %15 = tpu.matmul %0, %2, %cst {dimension_numbers = #tpu.dot_dimension_numbers<[1], [0], [0], [1], [0, 0, 1, 1], [], []>} : vector<16x128xf32>, vector<128x128xf32>, vector<16x128xf32> -> vector<16x128xf32>
    %16 = arith.subf %0, %15 : vector<16x128xf32>
    %17 = arith.mulf %16, %16 : vector<16x128xf32>
    %cst_9 = arith.constant dense<0.000000e+00> : vector<16x128xf32>
    %18 = tpu.matmul %17, %2, %cst_9 {dimension_numbers = #tpu.dot_dimension_numbers<[1], [0], [0], [1], [0, 0, 1, 1], [], []>} : vector<16x128xf32>, vector<128x128xf32>, vector<16x128xf32> -> vector<16x128xf32>
    %19 = arith.subf %0, %15 : vector<16x128xf32>
    %cst_10 = arith.constant 9.99999997E-7 : f32
    %20 = vector.broadcast %cst_10 : f32 to vector<16x128xf32>
    %21 = arith.addf %18, %20 : vector<16x128xf32>
    %22 = math.rsqrt %21 : vector<16x128xf32>
    %23 = arith.mulf %19, %22 : vector<16x128xf32>
    %24 = vector.broadcast %5 : vector<1x128xf32> to vector<16x128xf32>
    %25 = arith.mulf %23, %24 : vector<16x128xf32>
    %26 = vector.broadcast %6 : vector<1x128xf32> to vector<16x128xf32>
    %27 = arith.addf %25, %26 : vector<16x128xf32>
    %cst_11 = arith.constant dense<0.000000e+00> : vector<16x128xf32>
    %28 = tpu.matmul %1, %2, %cst_11 {dimension_numbers = #tpu.dot_dimension_numbers<[1], [0], [0], [1], [0, 0, 1, 1], [], []>} : vector<16x128xf32>, vector<128x128xf32>, vector<16x128xf32> -> vector<16x128xf32>
    %29 = arith.subf %1, %28 : vector<16x128xf32>
    %30 = arith.mulf %29, %29 : vector<16x128xf32>
    %cst_12 = arith.constant dense<0.000000e+00> : vector<16x128xf32>
    %31 = tpu.matmul %30, %2, %cst_12 {dimension_numbers = #tpu.dot_dimension_numbers<[1], [0], [0], [1], [0, 0, 1, 1], [], []>} : vector<16x128xf32>, vector<128x128xf32>, vector<16x128xf32> -> vector<16x128xf32>
    %32 = arith.subf %1, %28 : vector<16x128xf32>
    %cst_13 = arith.constant 9.99999997E-7 : f32
    %33 = vector.broadcast %cst_13 : f32 to vector<16x128xf32>
    %34 = arith.addf %31, %33 : vector<16x128xf32>
    %35 = math.rsqrt %34 : vector<16x128xf32>
    %36 = arith.mulf %32, %35 : vector<16x128xf32>
    %37 = vector.broadcast %7 : vector<1x128xf32> to vector<16x128xf32>
    %38 = arith.mulf %36, %37 : vector<16x128xf32>
    %39 = vector.broadcast %8 : vector<1x128xf32> to vector<16x128xf32>
    %40 = arith.addf %38, %39 : vector<16x128xf32>
    %c0_14 = arith.constant 0 : index
    %c0_15 = arith.constant 0 : index
    %c0_16 = arith.constant 0 : index
    %41 = vector.load %arg3[%c0_14, %c0_15, %c0_16] : memref<4x128x128xf32, #tpu.memory_space<vmem>>, vector<1x128x128xf32>
    %42 = vector.shape_cast %41 : vector<1x128x128xf32> to vector<128x128xf32>
    %cst_17 = arith.constant dense<0.000000e+00> : vector<16x128xf32>
    %43 = tpu.matmul %27, %42, %cst_17 {dimension_numbers = #tpu.dot_dimension_numbers<[1], [0], [0], [1], [0, 0, 1, 1], [], []>} : vector<16x128xf32>, vector<128x128xf32>, vector<16x128xf32> -> vector<16x128xf32>
    %44 = vector.broadcast %9 : vector<1x128xf32> to vector<16x128xf32>
    %45 = arith.addf %43, %44 : vector<16x128xf32>
    %c1 = arith.constant 1 : index
    %c0_18 = arith.constant 0 : index
    %c0_19 = arith.constant 0 : index
    %46 = vector.load %arg3[%c1, %c0_18, %c0_19] : memref<4x128x128xf32, #tpu.memory_space<vmem>>, vector<1x128x128xf32>
    %47 = vector.shape_cast %46 : vector<1x128x128xf32> to vector<128x128xf32>
    %cst_20 = arith.constant dense<0.000000e+00> : vector<16x128xf32>
    %48 = tpu.matmul %40, %47, %cst_20 {dimension_numbers = #tpu.dot_dimension_numbers<[1], [0], [0], [1], [0, 0, 1, 1], [], []>} : vector<16x128xf32>, vector<128x128xf32>, vector<16x128xf32> -> vector<16x128xf32>
    %49 = vector.broadcast %10 : vector<1x128xf32> to vector<16x128xf32>
    %50 = arith.addf %48, %49 : vector<16x128xf32>
    %c2 = arith.constant 2 : index
    %c0_21 = arith.constant 0 : index
    %c0_22 = arith.constant 0 : index
    %51 = vector.load %arg3[%c2, %c0_21, %c0_22] : memref<4x128x128xf32, #tpu.memory_space<vmem>>, vector<1x128x128xf32>
    %52 = vector.shape_cast %51 : vector<1x128x128xf32> to vector<128x128xf32>
    %cst_23 = arith.constant dense<0.000000e+00> : vector<16x128xf32>
    %53 = tpu.matmul %0, %52, %cst_23 {dimension_numbers = #tpu.dot_dimension_numbers<[1], [0], [0], [1], [0, 0, 1, 1], [], []>} : vector<16x128xf32>, vector<128x128xf32>, vector<16x128xf32> -> vector<16x128xf32>
    %54 = vector.broadcast %11 : vector<1x128xf32> to vector<16x128xf32>
    %55 = arith.addf %53, %54 : vector<16x128xf32>
    %c3 = arith.constant 3 : index
    %c0_24 = arith.constant 0 : index
    %c0_25 = arith.constant 0 : index
    %56 = vector.load %arg3[%c3, %c0_24, %c0_25] : memref<4x128x128xf32, #tpu.memory_space<vmem>>, vector<1x128x128xf32>
    %57 = vector.shape_cast %56 : vector<1x128x128xf32> to vector<128x128xf32>
    %cst_26 = arith.constant dense<0.000000e+00> : vector<16x128xf32>
    %58 = tpu.matmul %1, %57, %cst_26 {dimension_numbers = #tpu.dot_dimension_numbers<[1], [0], [0], [1], [0, 0, 1, 1], [], []>} : vector<16x128xf32>, vector<128x128xf32>, vector<16x128xf32> -> vector<16x128xf32>
    %59 = vector.broadcast %12 : vector<1x128xf32> to vector<16x128xf32>
    %60 = arith.addf %58, %59 : vector<16x128xf32>
    %61 = vector.extract_strided_slice %45 {offsets = [0, 0], sizes = [16, 8], strides = [1, 1]} : vector<16x128xf32> to vector<16x8xf32>
    %62 = vector.extract_strided_slice %45 {offsets = [0, 8], sizes = [16, 8], strides = [1, 1]} : vector<16x128xf32> to vector<16x8xf32>
    %63 = vector.extract_strided_slice %45 {offsets = [0, 16], sizes = [16, 8], strides = [1, 1]} : vector<16x128xf32> to vector<16x8xf32>
    %64 = vector.extract_strided_slice %45 {offsets = [0, 24], sizes = [16, 8], strides = [1, 1]} : vector<16x128xf32> to vector<16x8xf32>
    %65 = vector.extract_strided_slice %45 {offsets = [0, 32], sizes = [16, 8], strides = [1, 1]} : vector<16x128xf32> to vector<16x8xf32>
    %66 = vector.extract_strided_slice %45 {offsets = [0, 40], sizes = [16, 8], strides = [1, 1]} : vector<16x128xf32> to vector<16x8xf32>
    %67 = vector.extract_strided_slice %45 {offsets = [0, 48], sizes = [16, 8], strides = [1, 1]} : vector<16x128xf32> to vector<16x8xf32>
    %68 = vector.extract_strided_slice %45 {offsets = [0, 56], sizes = [16, 8], strides = [1, 1]} : vector<16x128xf32> to vector<16x8xf32>
    %69 = vector.extract_strided_slice %45 {offsets = [0, 64], sizes = [16, 8], strides = [1, 1]} : vector<16x128xf32> to vector<16x8xf32>
    %70 = vector.extract_strided_slice %45 {offsets = [0, 72], sizes = [16, 8], strides = [1, 1]} : vector<16x128xf32> to vector<16x8xf32>
    %71 = vector.extract_strided_slice %45 {offsets = [0, 80], sizes = [16, 8], strides = [1, 1]} : vector<16x128xf32> to vector<16x8xf32>
    %72 = vector.extract_strided_slice %45 {offsets = [0, 88], sizes = [16, 8], strides = [1, 1]} : vector<16x128xf32> to vector<16x8xf32>
    %73 = vector.extract_strided_slice %45 {offsets = [0, 96], sizes = [16, 8], strides = [1, 1]} : vector<16x128xf32> to vector<16x8xf32>
    %74 = vector.extract_strided_slice %45 {offsets = [0, 104], sizes = [16, 8], strides = [1, 1]} : vector<16x128xf32> to vector<16x8xf32>
    %75 = vector.extract_strided_slice %45 {offsets = [0, 112], sizes = [16, 8], strides = [1, 1]} : vector<16x128xf32> to vector<16x8xf32>
    %76 = vector.extract_strided_slice %45 {offsets = [0, 120], sizes = [16, 8], strides = [1, 1]} : vector<16x128xf32> to vector<16x8xf32>
    %77 = tpu.concatenate %61, %62, %63, %64, %65, %66, %67, %68, %69, %70, %71, %72, %73, %74, %75, %76 in 0 : vector<16x8xf32>, vector<16x8xf32>, vector<16x8xf32>, vector<16x8xf32>, vector<16x8xf32>, vector<16x8xf32>, vector<16x8xf32>, vector<16x8xf32>, vector<16x8xf32>, vector<16x8xf32>, vector<16x8xf32>, vector<16x8xf32>, vector<16x8xf32>, vector<16x8xf32>, vector<16x8xf32>, vector<16x8xf32> -> vector<256x8xf32>
    %78 = vector.extract_strided_slice %50 {offsets = [0, 0], sizes = [16, 8], strides = [1, 1]} : vector<16x128xf32> to vector<16x8xf32>
    %79 = vector.extract_strided_slice %50 {offsets = [0, 8], sizes = [16, 8], strides = [1, 1]} : vector<16x128xf32> to vector<16x8xf32>
    %80 = vector.extract_strided_slice %50 {offsets = [0, 16], sizes = [16, 8], strides = [1, 1]} : vector<16x128xf32> to vector<16x8xf32>
    %81 = vector.extract_strided_slice %50 {offsets = [0, 24], sizes = [16, 8], strides = [1, 1]} : vector<16x128xf32> to vector<16x8xf32>
    %82 = vector.extract_strided_slice %50 {offsets = [0, 32], sizes = [16, 8], strides = [1, 1]} : vector<16x128xf32> to vector<16x8xf32>
    %83 = vector.extract_strided_slice %50 {offsets = [0, 40], sizes = [16, 8], strides = [1, 1]} : vector<16x128xf32> to vector<16x8xf32>
    %84 = vector.extract_strided_slice %50 {offsets = [0, 48], sizes = [16, 8], strides = [1, 1]} : vector<16x128xf32> to vector<16x8xf32>
    %85 = vector.extract_strided_slice %50 {offsets = [0, 56], sizes = [16, 8], strides = [1, 1]} : vector<16x128xf32> to vector<16x8xf32>
    %86 = vector.extract_strided_slice %50 {offsets = [0, 64], sizes = [16, 8], strides = [1, 1]} : vector<16x128xf32> to vector<16x8xf32>
    %87 = vector.extract_strided_slice %50 {offsets = [0, 72], sizes = [16, 8], strides = [1, 1]} : vector<16x128xf32> to vector<16x8xf32>
    %88 = vector.extract_strided_slice %50 {offsets = [0, 80], sizes = [16, 8], strides = [1, 1]} : vector<16x128xf32> to vector<16x8xf32>
    %89 = vector.extract_strided_slice %50 {offsets = [0, 88], sizes = [16, 8], strides = [1, 1]} : vector<16x128xf32> to vector<16x8xf32>
    %90 = vector.extract_strided_slice %50 {offsets = [0, 96], sizes = [16, 8], strides = [1, 1]} : vector<16x128xf32> to vector<16x8xf32>
    %91 = vector.extract_strided_slice %50 {offsets = [0, 104], sizes = [16, 8], strides = [1, 1]} : vector<16x128xf32> to vector<16x8xf32>
    %92 = vector.extract_strided_slice %50 {offsets = [0, 112], sizes = [16, 8], strides = [1, 1]} : vector<16x128xf32> to vector<16x8xf32>
    %93 = vector.extract_strided_slice %50 {offsets = [0, 120], sizes = [16, 8], strides = [1, 1]} : vector<16x128xf32> to vector<16x8xf32>
    %94 = tpu.concatenate %78, %79, %80, %81, %82, %83, %84, %85, %86, %87, %88, %89, %90, %91, %92, %93 in 0 : vector<16x8xf32>, vector<16x8xf32>, vector<16x8xf32>, vector<16x8xf32>, vector<16x8xf32>, vector<16x8xf32>, vector<16x8xf32>, vector<16x8xf32>, vector<16x8xf32>, vector<16x8xf32>, vector<16x8xf32>, vector<16x8xf32>, vector<16x8xf32>, vector<16x8xf32>, vector<16x8xf32>, vector<16x8xf32> -> vector<256x8xf32>
    %95 = vector.extract_strided_slice %55 {offsets = [0, 0], sizes = [16, 8], strides = [1, 1]} : vector<16x128xf32> to vector<16x8xf32>
    %96 = vector.extract_strided_slice %55 {offsets = [0, 8], sizes = [16, 8], strides = [1, 1]} : vector<16x128xf32> to vector<16x8xf32>
    %97 = vector.extract_strided_slice %55 {offsets = [0, 16], sizes = [16, 8], strides = [1, 1]} : vector<16x128xf32> to vector<16x8xf32>
    %98 = vector.extract_strided_slice %55 {offsets = [0, 24], sizes = [16, 8], strides = [1, 1]} : vector<16x128xf32> to vector<16x8xf32>
    %99 = vector.extract_strided_slice %55 {offsets = [0, 32], sizes = [16, 8], strides = [1, 1]} : vector<16x128xf32> to vector<16x8xf32>
    %100 = vector.extract_strided_slice %55 {offsets = [0, 40], sizes = [16, 8], strides = [1, 1]} : vector<16x128xf32> to vector<16x8xf32>
    %101 = vector.extract_strided_slice %55 {offsets = [0, 48], sizes = [16, 8], strides = [1, 1]} : vector<16x128xf32> to vector<16x8xf32>
    %102 = vector.extract_strided_slice %55 {offsets = [0, 56], sizes = [16, 8], strides = [1, 1]} : vector<16x128xf32> to vector<16x8xf32>
    %103 = vector.extract_strided_slice %55 {offsets = [0, 64], sizes = [16, 8], strides = [1, 1]} : vector<16x128xf32> to vector<16x8xf32>
    %104 = vector.extract_strided_slice %55 {offsets = [0, 72], sizes = [16, 8], strides = [1, 1]} : vector<16x128xf32> to vector<16x8xf32>
    %105 = vector.extract_strided_slice %55 {offsets = [0, 80], sizes = [16, 8], strides = [1, 1]} : vector<16x128xf32> to vector<16x8xf32>
    %106 = vector.extract_strided_slice %55 {offsets = [0, 88], sizes = [16, 8], strides = [1, 1]} : vector<16x128xf32> to vector<16x8xf32>
    %107 = vector.extract_strided_slice %55 {offsets = [0, 96], sizes = [16, 8], strides = [1, 1]} : vector<16x128xf32> to vector<16x8xf32>
    %108 = vector.extract_strided_slice %55 {offsets = [0, 104], sizes = [16, 8], strides = [1, 1]} : vector<16x128xf32> to vector<16x8xf32>
    %109 = vector.extract_strided_slice %55 {offsets = [0, 112], sizes = [16, 8], strides = [1, 1]} : vector<16x128xf32> to vector<16x8xf32>
    %110 = vector.extract_strided_slice %55 {offsets = [0, 120], sizes = [16, 8], strides = [1, 1]} : vector<16x128xf32> to vector<16x8xf32>
    %111 = tpu.concatenate %95, %96, %97, %98, %99, %100, %101, %102, %103, %104, %105, %106, %107, %108, %109, %110 in 0 : vector<16x8xf32>, vector<16x8xf32>, vector<16x8xf32>, vector<16x8xf32>, vector<16x8xf32>, vector<16x8xf32>, vector<16x8xf32>, vector<16x8xf32>, vector<16x8xf32>, vector<16x8xf32>, vector<16x8xf32>, vector<16x8xf32>, vector<16x8xf32>, vector<16x8xf32>, vector<16x8xf32>, vector<16x8xf32> -> vector<256x8xf32>
    %112 = vector.extract_strided_slice %60 {offsets = [0, 0], sizes = [16, 8], strides = [1, 1]} : vector<16x128xf32> to vector<16x8xf32>
    %113 = vector.extract_strided_slice %60 {offsets = [0, 8], sizes = [16, 8], strides = [1, 1]} : vector<16x128xf32> to vector<16x8xf32>
    %114 = vector.extract_strided_slice %60 {offsets = [0, 16], sizes = [16, 8], strides = [1, 1]} : vector<16x128xf32> to vector<16x8xf32>
    %115 = vector.extract_strided_slice %60 {offsets = [0, 24], sizes = [16, 8], strides = [1, 1]} : vector<16x128xf32> to vector<16x8xf32>
    %116 = vector.extract_strided_slice %60 {offsets = [0, 32], sizes = [16, 8], strides = [1, 1]} : vector<16x128xf32> to vector<16x8xf32>
    %117 = vector.extract_strided_slice %60 {offsets = [0, 40], sizes = [16, 8], strides = [1, 1]} : vector<16x128xf32> to vector<16x8xf32>
    %118 = vector.extract_strided_slice %60 {offsets = [0, 48], sizes = [16, 8], strides = [1, 1]} : vector<16x128xf32> to vector<16x8xf32>
    %119 = vector.extract_strided_slice %60 {offsets = [0, 56], sizes = [16, 8], strides = [1, 1]} : vector<16x128xf32> to vector<16x8xf32>
    %120 = vector.extract_strided_slice %60 {offsets = [0, 64], sizes = [16, 8], strides = [1, 1]} : vector<16x128xf32> to vector<16x8xf32>
    %121 = vector.extract_strided_slice %60 {offsets = [0, 72], sizes = [16, 8], strides = [1, 1]} : vector<16x128xf32> to vector<16x8xf32>
    %122 = vector.extract_strided_slice %60 {offsets = [0, 80], sizes = [16, 8], strides = [1, 1]} : vector<16x128xf32> to vector<16x8xf32>
    %123 = vector.extract_strided_slice %60 {offsets = [0, 88], sizes = [16, 8], strides = [1, 1]} : vector<16x128xf32> to vector<16x8xf32>
    %124 = vector.extract_strided_slice %60 {offsets = [0, 96], sizes = [16, 8], strides = [1, 1]} : vector<16x128xf32> to vector<16x8xf32>
    %125 = vector.extract_strided_slice %60 {offsets = [0, 104], sizes = [16, 8], strides = [1, 1]} : vector<16x128xf32> to vector<16x8xf32>
    %126 = vector.extract_strided_slice %60 {offsets = [0, 112], sizes = [16, 8], strides = [1, 1]} : vector<16x128xf32> to vector<16x8xf32>
    %127 = vector.extract_strided_slice %60 {offsets = [0, 120], sizes = [16, 8], strides = [1, 1]} : vector<16x128xf32> to vector<16x8xf32>
    %128 = tpu.concatenate %112, %113, %114, %115, %116, %117, %118, %119, %120, %121, %122, %123, %124, %125, %126, %127 in 0 : vector<16x8xf32>, vector<16x8xf32>, vector<16x8xf32>, vector<16x8xf32>, vector<16x8xf32>, vector<16x8xf32>, vector<16x8xf32>, vector<16x8xf32>, vector<16x8xf32>, vector<16x8xf32>, vector<16x8xf32>, vector<16x8xf32>, vector<16x8xf32>, vector<16x8xf32>, vector<16x8xf32>, vector<16x8xf32> -> vector<256x8xf32>
    "tpu.trace_start"() <{level = 10 : i32, message = "nc,mc->nm"}> : () -> ()
    %cst_27 = arith.constant dense<0.000000e+00> : vector<256x256xf32>
    %129 = tpu.matmul %77, %94, %cst_27 {dimension_numbers = #tpu.dot_dimension_numbers<[1], [1], [0], [0], [0, 0, 1, 0], [], []>} : vector<256x8xf32>, vector<256x8xf32>, vector<256x256xf32> -> vector<256x256xf32>
    "tpu.trace_stop"() : () -> ()
    %130 = arith.addf %129, %3 : vector<256x256xf32>
    %131 = tpu.transpose %130, [1, 0] : vector<256x256xf32> -> vector<256x256xf32>
    %cst_28 = arith.constant dense<0xFF800000> : vector<256xf32>
    %132 = vector.multi_reduction <maximumf>, %130, %cst_28 [1] : vector<256x256xf32> to vector<256xf32>
    %133 = vector.shape_cast %132 : vector<256xf32> to vector<256x1xf32>
    %134 = vector.broadcast %133 : vector<256x1xf32> to vector<256x256xf32>
    %135 = arith.subf %130, %134 : vector<256x256xf32>
    %136 = math.exp %135 : vector<256x256xf32>
    %cst_29 = arith.constant dense<0.000000e+00> : vector<256xf32>
    %137 = vector.multi_reduction <add>, %136, %cst_29 [1] : vector<256x256xf32> to vector<256xf32>
    %138 = vector.shape_cast %137 : vector<256xf32> to vector<256x1xf32>
    %139 = vector.broadcast %138 : vector<256x1xf32> to vector<256x256xf32>
    %140 = arith.divf %136, %139 : vector<256x256xf32>
    %cst_30 = arith.constant dense<0xFF800000> : vector<256xf32>
    %141 = vector.multi_reduction <maximumf>, %131, %cst_30 [1] : vector<256x256xf32> to vector<256xf32>
    %142 = vector.shape_cast %141 : vector<256xf32> to vector<256x1xf32>
    %143 = vector.broadcast %142 : vector<256x1xf32> to vector<256x256xf32>
    %144 = arith.subf %131, %143 : vector<256x256xf32>
    %145 = math.exp %144 : vector<256x256xf32>
    %cst_31 = arith.constant dense<0.000000e+00> : vector<256xf32>
    %146 = vector.multi_reduction <add>, %145, %cst_31 [1] : vector<256x256xf32> to vector<256xf32>
    %147 = vector.shape_cast %146 : vector<256xf32> to vector<256x1xf32>
    %148 = vector.broadcast %147 : vector<256x1xf32> to vector<256x256xf32>
    %149 = arith.divf %145, %148 : vector<256x256xf32>
    %cst_32 = arith.constant dense<0.000000e+00> : vector<256x8xf32>
    %150 = tpu.matmul %140, %128, %cst_32 {dimension_numbers = #tpu.dot_dimension_numbers<[1], [0], [0], [1], [0, 0, 1, 1], [], []>} : vector<256x256xf32>, vector<256x8xf32>, vector<256x8xf32> -> vector<256x8xf32>
    %cst_33 = arith.constant dense<0.000000e+00> : vector<256x8xf32>
    %151 = tpu.matmul %149, %111, %cst_33 {dimension_numbers = #tpu.dot_dimension_numbers<[1], [0], [0], [1], [0, 0, 1, 1], [], []>} : vector<256x256xf32>, vector<256x8xf32>, vector<256x8xf32> -> vector<256x8xf32>
    %152 = vector.extract_strided_slice %150 {offsets = [0, 0], sizes = [16, 8], strides = [1, 1]} : vector<256x8xf32> to vector<16x8xf32>
    %153 = vector.extract_strided_slice %150 {offsets = [16, 0], sizes = [16, 8], strides = [1, 1]} : vector<256x8xf32> to vector<16x8xf32>
    %154 = vector.extract_strided_slice %150 {offsets = [32, 0], sizes = [16, 8], strides = [1, 1]} : vector<256x8xf32> to vector<16x8xf32>
    %155 = vector.extract_strided_slice %150 {offsets = [48, 0], sizes = [16, 8], strides = [1, 1]} : vector<256x8xf32> to vector<16x8xf32>
    %156 = vector.extract_strided_slice %150 {offsets = [64, 0], sizes = [16, 8], strides = [1, 1]} : vector<256x8xf32> to vector<16x8xf32>
    %157 = vector.extract_strided_slice %150 {offsets = [80, 0], sizes = [16, 8], strides = [1, 1]} : vector<256x8xf32> to vector<16x8xf32>
    %158 = vector.extract_strided_slice %150 {offsets = [96, 0], sizes = [16, 8], strides = [1, 1]} : vector<256x8xf32> to vector<16x8xf32>
    %159 = vector.extract_strided_slice %150 {offsets = [112, 0], sizes = [16, 8], strides = [1, 1]} : vector<256x8xf32> to vector<16x8xf32>
    %160 = vector.extract_strided_slice %150 {offsets = [128, 0], sizes = [16, 8], strides = [1, 1]} : vector<256x8xf32> to vector<16x8xf32>
    %161 = vector.extract_strided_slice %150 {offsets = [144, 0], sizes = [16, 8], strides = [1, 1]} : vector<256x8xf32> to vector<16x8xf32>
    %162 = vector.extract_strided_slice %150 {offsets = [160, 0], sizes = [16, 8], strides = [1, 1]} : vector<256x8xf32> to vector<16x8xf32>
    %163 = vector.extract_strided_slice %150 {offsets = [176, 0], sizes = [16, 8], strides = [1, 1]} : vector<256x8xf32> to vector<16x8xf32>
    %164 = vector.extract_strided_slice %150 {offsets = [192, 0], sizes = [16, 8], strides = [1, 1]} : vector<256x8xf32> to vector<16x8xf32>
    %165 = vector.extract_strided_slice %150 {offsets = [208, 0], sizes = [16, 8], strides = [1, 1]} : vector<256x8xf32> to vector<16x8xf32>
    %166 = vector.extract_strided_slice %150 {offsets = [224, 0], sizes = [16, 8], strides = [1, 1]} : vector<256x8xf32> to vector<16x8xf32>
    %167 = vector.extract_strided_slice %150 {offsets = [240, 0], sizes = [16, 8], strides = [1, 1]} : vector<256x8xf32> to vector<16x8xf32>
    %168 = tpu.concatenate %152, %153, %154, %155, %156, %157, %158, %159, %160, %161, %162, %163, %164, %165, %166, %167 in 1 : vector<16x8xf32>, vector<16x8xf32>, vector<16x8xf32>, vector<16x8xf32>, vector<16x8xf32>, vector<16x8xf32>, vector<16x8xf32>, vector<16x8xf32>, vector<16x8xf32>, vector<16x8xf32>, vector<16x8xf32>, vector<16x8xf32>, vector<16x8xf32>, vector<16x8xf32>, vector<16x8xf32>, vector<16x8xf32> -> vector<16x128xf32>
    %169 = vector.broadcast %13 : vector<1x128xf32> to vector<16x128xf32>
    %170 = arith.mulf %168, %169 : vector<16x128xf32>
    %171 = arith.addf %0, %170 : vector<16x128xf32>
    %c0_34 = arith.constant 0 : index
    %c0_35 = arith.constant 0 : index
    %172 = vector.load %arg7[%c0_34, %c0_35] : memref<16x128xf32, #tpu.memory_space<vmem>>, vector<16x128xf32>
    tpu.vector_store %arg7[%c0_34, %c0_35], %171 {strides = array<i32>} : memref<16x128xf32, #tpu.memory_space<vmem>>, vector<16x128xf32>,
    %173 = vector.extract_strided_slice %151 {offsets = [0, 0], sizes = [16, 8], strides = [1, 1]} : vector<256x8xf32> to vector<16x8xf32>
    %174 = vector.extract_strided_slice %151 {offsets = [16, 0], sizes = [16, 8], strides = [1, 1]} : vector<256x8xf32> to vector<16x8xf32>
    %175 = vector.extract_strided_slice %151 {offsets = [32, 0], sizes = [16, 8], strides = [1, 1]} : vector<256x8xf32> to vector<16x8xf32>
    %176 = vector.extract_strided_slice %151 {offsets = [48, 0], sizes = [16, 8], strides = [1, 1]} : vector<256x8xf32> to vector<16x8xf32>
    %177 = vector.extract_strided_slice %151 {offsets = [64, 0], sizes = [16, 8], strides = [1, 1]} : vector<256x8xf32> to vector<16x8xf32>
    %178 = vector.extract_strided_slice %151 {offsets = [80, 0], sizes = [16, 8], strides = [1, 1]} : vector<256x8xf32> to vector<16x8xf32>
    %179 = vector.extract_strided_slice %151 {offsets = [96, 0], sizes = [16, 8], strides = [1, 1]} : vector<256x8xf32> to vector<16x8xf32>
    %180 = vector.extract_strided_slice %151 {offsets = [112, 0], sizes = [16, 8], strides = [1, 1]} : vector<256x8xf32> to vector<16x8xf32>
    %181 = vector.extract_strided_slice %151 {offsets = [128, 0], sizes = [16, 8], strides = [1, 1]} : vector<256x8xf32> to vector<16x8xf32>
    %182 = vector.extract_strided_slice %151 {offsets = [144, 0], sizes = [16, 8], strides = [1, 1]} : vector<256x8xf32> to vector<16x8xf32>
    %183 = vector.extract_strided_slice %151 {offsets = [160, 0], sizes = [16, 8], strides = [1, 1]} : vector<256x8xf32> to vector<16x8xf32>
    %184 = vector.extract_strided_slice %151 {offsets = [176, 0], sizes = [16, 8], strides = [1, 1]} : vector<256x8xf32> to vector<16x8xf32>
    %185 = vector.extract_strided_slice %151 {offsets = [192, 0], sizes = [16, 8], strides = [1, 1]} : vector<256x8xf32> to vector<16x8xf32>
    %186 = vector.extract_strided_slice %151 {offsets = [208, 0], sizes = [16, 8], strides = [1, 1]} : vector<256x8xf32> to vector<16x8xf32>
    %187 = vector.extract_strided_slice %151 {offsets = [224, 0], sizes = [16, 8], strides = [1, 1]} : vector<256x8xf32> to vector<16x8xf32>
    %188 = vector.extract_strided_slice %151 {offsets = [240, 0], sizes = [16, 8], strides = [1, 1]} : vector<256x8xf32> to vector<16x8xf32>
    %189 = tpu.concatenate %173, %174, %175, %176, %177, %178, %179, %180, %181, %182, %183, %184, %185, %186, %187, %188 in 1 : vector<16x8xf32>, vector<16x8xf32>, vector<16x8xf32>, vector<16x8xf32>, vector<16x8xf32>, vector<16x8xf32>, vector<16x8xf32>, vector<16x8xf32>, vector<16x8xf32>, vector<16x8xf32>, vector<16x8xf32>, vector<16x8xf32>, vector<16x8xf32>, vector<16x8xf32>, vector<16x8xf32>, vector<16x8xf32> -> vector<16x128xf32>
    %190 = vector.broadcast %14 : vector<1x128xf32> to vector<16x128xf32>
    %191 = arith.mulf %189, %190 : vector<16x128xf32>
    %192 = arith.addf %1, %191 : vector<16x128xf32>
    %c0_36 = arith.constant 0 : index
    %c0_37 = arith.constant 0 : index
    %193 = vector.load %arg8[%c0_36, %c0_37] : memref<16x128xf32, #tpu.memory_space<vmem>>, vector<16x128xf32>
    tpu.vector_store %arg8[%c0_36, %c0_37], %192 {strides = array<i32>} : memref<16x128xf32, #tpu.memory_space<vmem>>, vector<16x128xf32>,
    return
  }
  func.func @transform_0(%arg0: i32) -> (i32, i32) {
    %c0_i32 = arith.constant 0 : i32
    %c0_i32_0 = arith.constant 0 : i32
    return %arg0, %c0_i32 : i32, i32
  }
  func.func @transform_1(%arg0: i32) -> (i32, i32) {
    %c0_i32 = arith.constant 0 : i32
    %c0_i32_0 = arith.constant 0 : i32
    return %arg0, %c0_i32 : i32, i32
  }
  func.func @transform_2(%arg0: i32) -> (i32, i32, i32) {
    %c0_i32 = arith.constant 0 : i32
    %c0_i32_0 = arith.constant 0 : i32
    %c0_i32_1 = arith.constant 0 : i32
    %c0_i32_2 = arith.constant 0 : i32
    return %c0_i32, %c0_i32_0, %c0_i32_1 : i32, i32, i32
  }
  func.func @transform_3(%arg0: i32) -> (i32, i32) {
    %c0_i32 = arith.constant 0 : i32
    %c0_i32_0 = arith.constant 0 : i32
    %c0_i32_1 = arith.constant 0 : i32
    return %c0_i32, %c0_i32_0 : i32, i32
  }
  func.func @transform_4(%arg0: i32) -> (i32, i32) {
    %c0_i32 = arith.constant 0 : i32
    %c0_i32_0 = arith.constant 0 : i32
    %c0_i32_1 = arith.constant 0 : i32
    return %c0_i32, %c0_i32_0 : i32, i32
  }
  func.func @transform_5(%arg0: i32) -> (i32, i32) {
    %c0_i32 = arith.constant 0 : i32
    %c0_i32_0 = arith.constant 0 : i32
    %c0_i32_1 = arith.constant 0 : i32
    return %c0_i32, %c0_i32_0 : i32, i32
  }
  func.func @transform_6(%arg0: i32) -> (i32, i32) {
    %c0_i32 = arith.constant 0 : i32
    %c0_i32_0 = arith.constant 0 : i32
    return %arg0, %c0_i32 : i32, i32
  }
  func.func @transform_7(%arg0: i32) -> (i32, i32) {
    %c0_i32 = arith.constant 0 : i32
    %c0_i32_0 = arith.constant 0 : i32
    return %arg0, %c0_i32 : i32, i32
  }
}

</mosaic_0001>

<llo_original>
// kernel: tpu_custom_call.1
$region0: #{tpu_custom_call.1}
  #allocation0 [shape = 'u32[]', space=smem, size = 0x4, offset = 0x4, fixed_abs, tag = 'smem constant byte address 0x4 - core index']
  #allocation1 [shape = 'u32[144,128]{1,0:T(1,128)}', space=vmem, size = 0x12000, scoped, tag = 'internal scratch']
  %s0 = inlined_call_operand.hbm [shape: f32[16,128], index: 0, kind: input, shape index: {}]
  %s1 = inlined_call_operand.hbm [shape: f32[16,128], index: 1, kind: input, shape index: {}]
  %s2 = inlined_call_operand.hbm [shape: f32[4,128,128], index: 2, kind: input, shape index: {}]
  %s3 = inlined_call_operand.hbm [shape: f32[128,128], index: 3, kind: input, shape index: {}]
  %s4 = inlined_call_operand.hbm [shape: f32[256,256], index: 4, kind: input, shape index: {}]
  %s5 = inlined_call_operand.vmem [shape: f32[10,128], index: 5, kind: input, shape index: {}]
  %s6 = inlined_call_operand.hbm [shape: f32[16,128], index: 6, kind: output, shape index: {0}]
  %s7 = inlined_call_operand.hbm [shape: f32[16,128], index: 7, kind: output, shape index: {1}]
  %8 = xla_tuple %s6, %s7
  %s9 = sld [smem:[#allocation0]]
  $region62: #{tpu_custom_call.1} parent=0
    _
  %s11 = ssub.s32 1, %s9
  %s12 = scalar_select 0, %s11, %s9
  $region1: #{tpu_custom_call.1} parent=0
    #allocation2 [shape = 'u8[8192]{0}', space=vmem, size = 0x2000, scoped, tag = 'input window, operand 0, single buffered']
    #allocation3 [shape = 's32[1]{0}', space=sflag, size = 0x4, scoped, tag = 'scoped memory for tpu_custom_call.1']
    #allocation4 [shape = 's32[1]{0}', space=sflag, size = 0x4, scoped, tag = 'scoped memory for tpu_custom_call.1']
    #allocation5 [shape = 'u8[8192]{0}', space=vmem, size = 0x2000, scoped, tag = 'input window, operand 1, single buffered']
    #allocation6 [shape = 's32[1]{0}', space=sflag, size = 0x4, scoped, tag = 'scoped memory for tpu_custom_call.1']
    #allocation7 [shape = 'u8[262144]{0}', space=vmem, size = 0x40000, scoped, tag = 'input window, operand 2, single buffered']
    #allocation8 [shape = 'u8[65536]{0}', space=vmem, size = 0x10000, scoped, tag = 'input window, operand 3, single buffered']
    #allocation9 [shape = 's32[1]{0}', space=sflag, size = 0x4, scoped, tag = 'scoped memory for tpu_custom_call.1']
    #allocation10 [shape = 'u8[262144]{0}', space=vmem, size = 0x40000, scoped, tag = 'input window, operand 4, single buffered']
    #allocation11 [shape = 'u8[8192]{0}', space=vmem, size = 0x2000, scoped, tag = 'output window, operand 0, single buffered']
    #allocation12 [shape = 'u8[8192]{0}', space=vmem, size = 0x2000, scoped, tag = 'output window, operand 1, single buffered']
    #allocation13 [shape = 's32[1]{0}', space=sflag, size = 0x4, scoped, tag = 'scoped memory for tpu_custom_call.1']
    %13 = vsyncpa [#allocation3], 0
    %14 = vsyncpa [#allocation6], 0
    %15 = vsyncpa [#allocation9], 0
    %16 = vsyncpa [#allocation4], 0
    %17 = vsyncpa [#allocation13], 0
    // Predicated region
    $region2: #{tpu_custom_call.1} parent=1 // pred_check
      _
    $region3: #{tpu_custom_call.1} parent=1 // pred_check_branch
      %19 = sbr.rel (0) target = $region5
    $region4: #{tpu_custom_call.1} parent=1 // pred_region
      %s21 = ssub.s32 256, 256
      %22 = vsyncadd [#allocation3], %s21
      %s23 = sshll.u32 [#allocation2], 4
      %s24 = int_to_ptr.vmem [resolvable:$true] %s23
      %29 = dma.hbm_to_vmem [thread:$0]  %s0, 256, %s24, [#allocation3], 128, 128, 8
    $region5: #{tpu_custom_call.1} parent=1 // pred_fallthru
      _
    // Predicated region
    $region6: #{tpu_custom_call.1} parent=1 // pred_check
      _
    $region7: #{tpu_custom_call.1} parent=1 // pred_check_branch
      %31 = sbr.rel (0) target = $region9
    $region8: #{tpu_custom_call.1} parent=1 // pred_region
      %s33 = ssub.s32 256, 256
      %34 = vsyncadd [#allocation6], %s33
      %s35 = sshll.u32 [#allocation5], 4
      %s36 = int_to_ptr.vmem [resolvable:$true] %s35
      %41 = dma.hbm_to_vmem [thread:$0]  %s1, 256, %s36, [#allocation6], 128, 128, 8
    $region9: #{tpu_custom_call.1} parent=1 // pred_fallthru
      _
    // Predicated region
    $region10: #{tpu_custom_call.1} parent=1 // pred_check
      _
    $region11: #{tpu_custom_call.1} parent=1 // pred_check_branch
      %43 = sbr.rel (0) target = $region13
    $region12: #{tpu_custom_call.1} parent=1 // pred_region
      %s45 = ssub.s32 8192, 8192
      %46 = vsyncadd [#allocation6], %s45
      %s47 = sshll.u32 [#allocation7], 4
      %s48 = int_to_ptr.vmem [resolvable:$true] %s47
      %53 = dma.hbm_to_vmem [thread:$0]  %s2, 8192, %s48, [#allocation6], 128, 128, 8
    $region13: #{tpu_custom_call.1} parent=1 // pred_fallthru
      _
    // Predicated region
    $region14: #{tpu_custom_call.1} parent=1 // pred_check
      _
    $region15: #{tpu_custom_call.1} parent=1 // pred_check_branch
      %55 = sbr.rel (0) target = $region17
    $region16: #{tpu_custom_call.1} parent=1 // pred_region
      %s57 = ssub.s32 2048, 2048
      %58 = vsyncadd [#allocation9], %s57
      %s59 = sshll.u32 [#allocation8], 4
      %s60 = int_to_ptr.vmem [resolvable:$true] %s59
      %65 = dma.hbm_to_vmem [thread:$0]  %s3, 2048, %s60, [#allocation9], 128, 128, 8
    $region17: #{tpu_custom_call.1} parent=1 // pred_fallthru
      _
    // Predicated region
    $region18: #{tpu_custom_call.1} parent=1 // pred_check
      _
    $region19: #{tpu_custom_call.1} parent=1 // pred_check_branch
      %67 = sbr.rel (0) target = $region21
    $region20: #{tpu_custom_call.1} parent=1 // pred_region
      %s69 = ssub.s32 8192, 8192
      %70 = vsyncadd [#allocation9], %s69
      %s71 = sshll.u32 [#allocation10], 4
      %s72 = int_to_ptr.vmem [resolvable:$true] %s71
      %77 = dma.hbm_to_vmem [thread:$0]  %s4, 8192, %s72, [#allocation9], 256, 256, 16
    $region21: #{tpu_custom_call.1} parent=1 // pred_fallthru
      _
    // Predicated region
    $region22: #{tpu_custom_call.1} parent=1 // pred_check
      _
    $region23: #{tpu_custom_call.1} parent=1 // pred_check_branch
      %79 = sbr.rel (0) target = $region25
    $region24: #{tpu_custom_call.1} parent=1 // pred_region
      _
    $region25: #{tpu_custom_call.1} parent=1 // pred_fallthru
      _
    // Predicated region
    $region26: #{tpu_custom_call.1} parent=1 // pred_check
      _
    $region27: #{tpu_custom_call.1} parent=1 // pred_check_branch
      %81 = sbr.rel (0) target = $region29
    $region28: #{tpu_custom_call.1} parent=1 // pred_region
      %82 = dma.done [#allocation3], 256
    $region29: #{tpu_custom_call.1} parent=1 // pred_fallthru
      _
    // Predicated region
    $region30: #{tpu_custom_call.1} parent=1 // pred_check
      _
    $region31: #{tpu_custom_call.1} parent=1 // pred_check_branch
      %84 = sbr.rel (0) target = $region33
    $region32: #{tpu_custom_call.1} parent=1 // pred_region
      %85 = dma.done [#allocation6], 256
    $region33: #{tpu_custom_call.1} parent=1 // pred_fallthru
      _
    // Predicated region
    $region34: #{tpu_custom_call.1} parent=1 // pred_check
      _
    $region35: #{tpu_custom_call.1} parent=1 // pred_check_branch
      %87 = sbr.rel (0) target = $region37
    $region36: #{tpu_custom_call.1} parent=1 // pred_region
      %88 = dma.done [#allocation6], 8192
    $region37: #{tpu_custom_call.1} parent=1 // pred_fallthru
      _
    // Predicated region
    $region38: #{tpu_custom_call.1} parent=1 // pred_check
      _
    $region39: #{tpu_custom_call.1} parent=1 // pred_check_branch
      %90 = sbr.rel (0) target = $region41
    $region40: #{tpu_custom_call.1} parent=1 // pred_region
      %91 = dma.done [#allocation9], 2048
    $region41: #{tpu_custom_call.1} parent=1 // pred_fallthru
      _
    // Predicated region
    $region42: #{tpu_custom_call.1} parent=1 // pred_check
      _
    $region43: #{tpu_custom_call.1} parent=1 // pred_check_branch
      %93 = sbr.rel (0) target = $region45
    $region44: #{tpu_custom_call.1} parent=1 // pred_region
      %94 = dma.done [#allocation9], 8192
    $region45: #{tpu_custom_call.1} parent=1 // pred_fallthru
      _
    %v95 = vld [vmem:[#allocation2] sm:$0xff]
    %v96 = vld [vmem:[#allocation2 + $0x8] sm:$0xff]
    %v97 = vld [vmem:[#allocation5] sm:$0xff]
    %v98 = vld [vmem:[#allocation5 + $0x8] sm:$0xff]
    %v99 = vld [vmem:[#allocation8] sm:$0xff]
    %v100 = vld [vmem:[#allocation8 + $0x8] sm:$0xff]
    %v101 = vld [vmem:[#allocation8 + $0x10] sm:$0xff]
    %v102 = vld [vmem:[#allocation8 + $0x18] sm:$0xff]
    %v103 = vld [vmem:[#allocation8 + $0x20] sm:$0xff]
    %v104 = vld [vmem:[#allocation8 + $0x28] sm:$0xff]
    %v105 = vld [vmem:[#allocation8 + $0x30] sm:$0xff]
    %v106 = vld [vmem:[#allocation8 + $0x38] sm:$0xff]
    %v107 = vld [vmem:[#allocation8 + $0x40] sm:$0xff]
    %v108 = vld [vmem:[#allocation8 + $0x48] sm:$0xff]
    %v109 = vld [vmem:[#allocation8 + $0x50] sm:$0xff]
    %v110 = vld [vmem:[#allocation8 + $0x58] sm:$0xff]
    %v111 = vld [vmem:[#allocation8 + $0x60] sm:$0xff]
    %v112 = vld [vmem:[#allocation8 + $0x68] sm:$0xff]
    %v113 = vld [vmem:[#allocation8 + $0x70] sm:$0xff]
    %v114 = vld [vmem:[#allocation8 + $0x78] sm:$0xff]
    %v115 = vld [vmem:[#allocation10] sm:$0xff]
    %v116 = vld [vmem:[#allocation10 + $0x8] sm:$0xff]
    %v117 = vld [vmem:[#allocation10 + $0x10] sm:$0xff]
    %v118 = vld [vmem:[#allocation10 + $0x18] sm:$0xff]
    %v119 = vld [vmem:[#allocation10 + $0x20] sm:$0xff]
    %v120 = vld [vmem:[#allocation10 + $0x28] sm:$0xff]
    %v121 = vld [vmem:[#allocation10 + $0x30] sm:$0xff]
    %v122 = vld [vmem:[#allocation10 + $0x38] sm:$0xff]
    %v123 = vld [vmem:[#allocation10 + $0x40] sm:$0xff]
    %v124 = vld [vmem:[#allocation10 + $0x48] sm:$0xff]
    %v125 = vld [vmem:[#allocation10 + $0x50] sm:$0xff]
    %v126 = vld [vmem:[#allocation10 + $0x58] sm:$0xff]
    %v127 = vld [vmem:[#allocation10 + $0x60] sm:$0xff]
    %v128 = vld [vmem:[#allocation10 + $0x68] sm:$0xff]
    %v129 = vld [vmem:[#allocation10 + $0x70] sm:$0xff]
    %v130 = vld [vmem:[#allocation10 + $0x78] sm:$0xff]
    %v131 = vld [vmem:[#allocation10 + $0x80] sm:$0xff]
    %v132 = vld [vmem:[#allocation10 + $0x88] sm:$0xff]
    %v133 = vld [vmem:[#allocation10 + $0x90] sm:$0xff]
    %v134 = vld [vmem:[#allocation10 + $0x98] sm:$0xff]
    %v135 = vld [vmem:[#allocation10 + $0xa0] sm:$0xff]
    %v136 = vld [vmem:[#allocation10 + $0xa8] sm:$0xff]
    %v137 = vld [vmem:[#allocation10 + $0xb0] sm:$0xff]
    %v138 = vld [vmem:[#allocation10 + $0xb8] sm:$0xff]
    %v139 = vld [vmem:[#allocation10 + $0xc0] sm:$0xff]
    %v140 = vld [vmem:[#allocation10 + $0xc8] sm:$0xff]
    %v141 = vld [vmem:[#allocation10 + $0xd0] sm:$0xff]
    %v142 = vld [vmem:[#allocation10 + $0xd8] sm:$0xff]
    %v143 = vld [vmem:[#allocation10 + $0xe0] sm:$0xff]
    %v144 = vld [vmem:[#allocation10 + $0xe8] sm:$0xff]
    %v145 = vld [vmem:[#allocation10 + $0xf0] sm:$0xff]
    %v146 = vld [vmem:[#allocation10 + $0xf8] sm:$0xff]
    %v147 = vld [vmem:[#allocation10 + $0x100] sm:$0xff]
    %v148 = vld [vmem:[#allocation10 + $0x108] sm:$0xff]
    %v149 = vld [vmem:[#allocation10 + $0x110] sm:$0xff]
    %v150 = vld [vmem:[#allocation10 + $0x118] sm:$0xff]
    %v151 = vld [vmem:[#allocation10 + $0x120] sm:$0xff]
    %v152 = vld [vmem:[#allocation10 + $0x128] sm:$0xff]
    %v153 = vld [vmem:[#allocation10 + $0x130] sm:$0xff]
    %v154 = vld [vmem:[#allocation10 + $0x138] sm:$0xff]
    %v155 = vld [vmem:[#allocation10 + $0x140] sm:$0xff]
    %v156 = vld [vmem:[#allocation10 + $0x148] sm:$0xff]
    %v157 = vld [vmem:[#allocation10 + $0x150] sm:$0xff]
    %v158 = vld [vmem:[#allocation10 + $0x158] sm:$0xff]
    %v159 = vld [vmem:[#allocation10 + $0x160] sm:$0xff]
    %v160 = vld [vmem:[#allocation10 + $0x168] sm:$0xff]
    %v161 = vld [vmem:[#allocation10 + $0x170] sm:$0xff]
    %v162 = vld [vmem:[#allocation10 + $0x178] sm:$0xff]
    %v163 = vld [vmem:[#allocation10 + $0x180] sm:$0xff]
    %v164 = vld [vmem:[#allocation10 + $0x188] sm:$0xff]
    %v165 = vld [vmem:[#allocation10 + $0x190] sm:$0xff]
    %v166 = vld [vmem:[#allocation10 + $0x198] sm:$0xff]
    %v167 = vld [vmem:[#allocation10 + $0x1a0] sm:$0xff]
    %v168 = vld [vmem:[#allocation10 + $0x1a8] sm:$0xff]
    %v169 = vld [vmem:[#allocation10 + $0x1b0] sm:$0xff]
    %v170 = vld [vmem:[#allocation10 + $0x1b8] sm:$0xff]
    %v171 = vld [vmem:[#allocation10 + $0x1c0] sm:$0xff]
    %v172 = vld [vmem:[#allocation10 + $0x1c8] sm:$0xff]
    %v173 = vld [vmem:[#allocation10 + $0x1d0] sm:$0xff]
    %v174 = vld [vmem:[#allocation10 + $0x1d8] sm:$0xff]
    %v175 = vld [vmem:[#allocation10 + $0x1e0] sm:$0xff]
    %v176 = vld [vmem:[#allocation10 + $0x1e8] sm:$0xff]
    %v177 = vld [vmem:[#allocation10 + $0x1f0] sm:$0xff]
    %v178 = vld [vmem:[#allocation10 + $0x1f8] sm:$0xff]
    %v179 = vld [vmem:[%s5] sm:$0xff]
    %v180 = vld [vmem:[%s5 + $0x8] sm:$0x3]
    %181 = vmatprep.subr.mxu0 0.0
    %182 = vmatpush1.msra.mxu0 %v99
    %183 = vmatprep.subr.mxu0 0.0
    %184 = vmatpush1.msra.mxu0 %v100
    %185 = vmatprep.subr.mxu0 0.0
    %186 = vmatpush1.msra.mxu0 %v101
    %187 = vmatprep.subr.mxu0 0.0
    %188 = vmatpush1.msra.mxu0 %v102
    %189 = vmatprep.subr.mxu0 0.0
    %190 = vmatpush1.msra.mxu0 %v103
    %191 = vmatprep.subr.mxu0 0.0
    %192 = vmatpush1.msra.mxu0 %v104
    %193 = vmatprep.subr.mxu0 0.0
    %194 = vmatpush1.msra.mxu0 %v105
    %195 = vmatprep.subr.mxu0 0.0
    %196 = vmatpush1.msra.mxu0 %v106
    %197 = vmatprep.subr.mxu0 0.0
    %198 = vmatpush1.msra.mxu0 %v107
    %199 = vmatprep.subr.mxu0 0.0
    %200 = vmatpush1.msra.mxu0 %v108
    %201 = vmatprep.subr.mxu0 0.0
    %202 = vmatpush1.msra.mxu0 %v109
    %203 = vmatprep.subr.mxu0 0.0
    %204 = vmatpush1.msra.mxu0 %v110
    %205 = vmatprep.subr.mxu0 0.0
    %206 = vmatpush1.msra.mxu0 %v111
    %207 = vmatprep.subr.mxu0 0.0
    %208 = vmatpush1.msra.mxu0 %v112
    %209 = vmatprep.subr.mxu0 0.0
    %210 = vmatpush1.msra.mxu0 %v113
    %211 = vmatprep.subr.mxu0 0.0
    %212 = vmatpush1.msra.mxu0 %v114
    %213 = vmatprep.subr.mxu0 0.0
    %214 = vmatpush1.msra.mxu0 0.0
    %215 = vmatprep.subr.mxu0 0.0
    %216 = vmatpush1.msra.mxu0 0.0
    %217 = vmatprep.subr.mxu0 0.0
    %218 = vmatpush1.msra.mxu0 0.0
    %219 = vmatprep.subr.mxu0 0.0
    %220 = vmatpush1.msra.mxu0 0.0
    %221 = vmatprep.subr.mxu0 0.0
    %222 = vmatpush1.msra.mxu0 0.0
    %223 = vmatprep.subr.mxu0 0.0
    %224 = vmatpush1.msra.mxu0 0.0
    %225 = vmatprep.subr.mxu0 0.0
    %226 = vmatpush1.msra.mxu0 0.0
    %227 = vmatprep.subr.mxu0 0.0
    %228 = vmatpush1.msra.mxu0 0.0
    %229 = vmatprep.subr.mxu0 0.0
    %230 = vmatpush1.msra.mxu0 0.0
    %231 = vmatprep.subr.mxu0 0.0
    %232 = vmatpush1.msra.mxu0 0.0
    %233 = vmatprep.subr.mxu0 0.0
    %234 = vmatpush1.msra.mxu0 0.0
    %235 = vmatprep.subr.mxu0 0.0
    %236 = vmatpush1.msra.mxu0 0.0
    %237 = vmatprep.subr.mxu0 0.0
    %238 = vmatpush1.msra.mxu0 0.0
    %239 = vmatprep.subr.mxu0 0.0
    %240 = vmatpush1.msra.mxu0 0.0
    %241 = vmatprep.subr.mxu0 0.0
    %242 = vmatpush1.msra.mxu0 0.0
    %243 = vmatprep.subr.mxu0 0.0
    %244 = vmatpush1.msra.mxu0 0.0
    %245 = vmatprep.mubr.f32.mxu0 0.0
    %246 = vmatmul.mubr.f32.gmra.mrb[0].mxu0 %v95
    %v247 = vpop.f32.mrb[0].mxu0
    %v248 = vadd.f32 0.0, %v247
    %v249 = vpop.f32.mrb[0].mxu0
    %250 = vmatprep.mubr.f32.mxu0 0.0
    %251 = vmatmul.mubr.f32.gmra.mrb[0].mxu0 %v96
    %v252 = vpop.f32.mrb[0].mxu0
    %v253 = vadd.f32 0.0, %v252
    %v254 = vpop.f32.mrb[0].mxu0
    %255 = vdwg.mxu0
    %v256 = vsub.f32 %v95, %v248
    %v257 = vsub.f32 %v96, %v253
    %v258 = vmul.f32 %v256, %v256
    %v259 = vmul.f32 %v257, %v257
    %260 = vmatprep.subr.mxu0 0.0
    %261 = vmatpush1.msra.mxu0 %v99
    %262 = vmatprep.subr.mxu0 0.0
    %263 = vmatpush1.msra.mxu0 %v100
    %264 = vmatprep.subr.mxu0 0.0
    %265 = vmatpush1.msra.mxu0 %v101
    %266 = vmatprep.subr.mxu0 0.0
    %267 = vmatpush1.msra.mxu0 %v102
    %268 = vmatprep.subr.mxu0 0.0
    %269 = vmatpush1.msra.mxu0 %v103
    %270 = vmatprep.subr.mxu0 0.0
    %271 = vmatpush1.msra.mxu0 %v104
    %272 = vmatprep.subr.mxu0 0.0
    %273 = vmatpush1.msra.mxu0 %v105
    %274 = vmatprep.subr.mxu0 0.0
    %275 = vmatpush1.msra.mxu0 %v106
    %276 = vmatprep.subr.mxu0 0.0
    %277 = vmatpush1.msra.mxu0 %v107
    %278 = vmatprep.subr.mxu0 0.0
    %279 = vmatpush1.msra.mxu0 %v108
    %280 = vmatprep.subr.mxu0 0.0
    %281 = vmatpush1.msra.mxu0 %v109
    %282 = vmatprep.subr.mxu0 0.0
    %283 = vmatpush1.msra.mxu0 %v110
    %284 = vmatprep.subr.mxu0 0.0
    %285 = vmatpush1.msra.mxu0 %v111
    %286 = vmatprep.subr.mxu0 0.0
    %287 = vmatpush1.msra.mxu0 %v112
    %288 = vmatprep.subr.mxu0 0.0
    %289 = vmatpush1.msra.mxu0 %v113
    %290 = vmatprep.subr.mxu0 0.0
    %291 = vmatpush1.msra.mxu0 %v114
    %292 = vmatprep.subr.mxu0 0.0
    %293 = vmatpush1.msra.mxu0 0.0
    %294 = vmatprep.subr.mxu0 0.0
    %295 = vmatpush1.msra.mxu0 0.0
    %296 = vmatprep.subr.mxu0 0.0
    %297 = vmatpush1.msra.mxu0 0.0
    %298 = vmatprep.subr.mxu0 0.0
    %299 = vmatpush1.msra.mxu0 0.0
    %300 = vmatprep.subr.mxu0 0.0
    %301 = vmatpush1.msra.mxu0 0.0
    %302 = vmatprep.subr.mxu0 0.0
    %303 = vmatpush1.msra.mxu0 0.0
    %304 = vmatprep.subr.mxu0 0.0
    %305 = vmatpush1.msra.mxu0 0.0
    %306 = vmatprep.subr.mxu0 0.0
    %307 = vmatpush1.msra.mxu0 0.0
    %308 = vmatprep.subr.mxu0 0.0
    %309 = vmatpush1.msra.mxu0 0.0
    %310 = vmatprep.subr.mxu0 0.0
    %311 = vmatpush1.msra.mxu0 0.0
    %312 = vmatprep.subr.mxu0 0.0
    %313 = vmatpush1.msra.mxu0 0.0
    %314 = vmatprep.subr.mxu0 0.0
    %315 = vmatpush1.msra.mxu0 0.0
    %316 = vmatprep.subr.mxu0 0.0
    %317 = vmatpush1.msra.mxu0 0.0
    %318 = vmatprep.subr.mxu0 0.0
    %319 = vmatpush1.msra.mxu0 0.0
    %320 = vmatprep.subr.mxu0 0.0
    %321 = vmatpush1.msra.mxu0 0.0
    %322 = vmatprep.subr.mxu0 0.0
    %323 = vmatpush1.msra.mxu0 0.0
    %324 = vmatprep.mubr.f32.mxu0 0.0
    %325 = vmatmul.mubr.f32.gmra.mrb[0].mxu0 %v258
    %v326 = vpop.f32.mrb[0].mxu0
    %v327 = vadd.f32 1e-06, %v326
    %v328 = vpop.f32.mrb[0].mxu0
    %329 = vmatprep.mubr.f32.mxu0 0.0
    %330 = vmatmul.mubr.f32.gmra.mrb[0].mxu0 %v259
    %v331 = vpop.f32.mrb[0].mxu0
    %v332 = vadd.f32 1e-06, %v331
    %v333 = vpop.f32.mrb[0].mxu0
    %334 = vdwg.mxu0
    %v335 = vrsqrt.pop %v327
    %v336 = vrsqrt.pop %v332
    %v337 = vmul.f32 %v256, %v335
    %v338 = vmul.f32 %v257, %v336
    %v339 = vlaneseq
    %v340 = vshrl.u32 %v339, 7
    %v341 = vsub.s32 0, %v340
    %v342 = vrot.slane %v179, %v341
    %v343 = vmul.f32 %v337, %v342
    %v344 = vmul.f32 %v338, %v342
    %v345 = vlaneseq
    %v346 = vshrl.u32 %v345, 7
    %v347 = vsub.s32 1, %v346
    %v348 = vrot.slane %v179, %v347
    %v349 = vadd.f32 %v343, %v348
    %v350 = vadd.f32 %v344, %v348
    %351 = vmatprep.subr.mxu0 0.0
    %352 = vmatpush1.msra.mxu0 %v99
    %353 = vmatprep.subr.mxu0 0.0
    %354 = vmatpush1.msra.mxu0 %v100
    %355 = vmatprep.subr.mxu0 0.0
    %356 = vmatpush1.msra.mxu0 %v101
    %357 = vmatprep.subr.mxu0 0.0
    %358 = vmatpush1.msra.mxu0 %v102
    %359 = vmatprep.subr.mxu0 0.0
    %360 = vmatpush1.msra.mxu0 %v103
    %361 = vmatprep.subr.mxu0 0.0
    %362 = vmatpush1.msra.mxu0 %v104
    %363 = vmatprep.subr.mxu0 0.0
    %364 = vmatpush1.msra.mxu0 %v105
    %365 = vmatprep.subr.mxu0 0.0
    %366 = vmatpush1.msra.mxu0 %v106
    %367 = vmatprep.subr.mxu0 0.0
    %368 = vmatpush1.msra.mxu0 %v107
    %369 = vmatprep.subr.mxu0 0.0
    %370 = vmatpush1.msra.mxu0 %v108
    %371 = vmatprep.subr.mxu0 0.0
    %372 = vmatpush1.msra.mxu0 %v109
    %373 = vmatprep.subr.mxu0 0.0
    %374 = vmatpush1.msra.mxu0 %v110
    %375 = vmatprep.subr.mxu0 0.0
    %376 = vmatpush1.msra.mxu0 %v111
    %377 = vmatprep.subr.mxu0 0.0
    %378 = vmatpush1.msra.mxu0 %v112
    %379 = vmatprep.subr.mxu0 0.0
    %380 = vmatpush1.msra.mxu0 %v113
    %381 = vmatprep.subr.mxu0 0.0
    %382 = vmatpush1.msra.mxu0 %v114
    %383 = vmatprep.subr.mxu0 0.0
    %384 = vmatpush1.msra.mxu0 0.0
    %385 = vmatprep.subr.mxu0 0.0
    %386 = vmatpush1.msra.mxu0 0.0
    %387 = vmatprep.subr.mxu0 0.0
    %388 = vmatpush1.msra.mxu0 0.0
    %389 = vmatprep.subr.mxu0 0.0
    %390 = vmatpush1.msra.mxu0 0.0
    %391 = vmatprep.subr.mxu0 0.0
    %392 = vmatpush1.msra.mxu0 0.0
    %393 = vmatprep.subr.mxu0 0.0
    %394 = vmatpush1.msra.mxu0 0.0
    %395 = vmatprep.subr.mxu0 0.0
    %396 = vmatpush1.msra.mxu0 0.0
    %397 = vmatprep.subr.mxu0 0.0
    %398 = vmatpush1.msra.mxu0 0.0
    %399 = vmatprep.subr.mxu0 0.0
    %400 = vmatpush1.msra.mxu0 0.0
    %401 = vmatprep.subr.mxu0 0.0
    %402 = vmatpush1.msra.mxu0 0.0
    %403 = vmatprep.subr.mxu0 0.0
    %404 = vmatpush1.msra.mxu0 0.0
    %405 = vmatprep.subr.mxu0 0.0
    %406 = vmatpush1.msra.mxu0 0.0
    %407 = vmatprep.subr.mxu0 0.0
    %408 = vmatpush1.msra.mxu0 0.0
    %409 = vmatprep.subr.mxu0 0.0
    %410 = vmatpush1.msra.mxu0 0.0
    %411 = vmatprep.subr.mxu0 0.0
    %412 = vmatpush1.msra.mxu0 0.0
    %413 = vmatprep.subr.mxu0 0.0
    %414 = vmatpush1.msra.mxu0 0.0
    %415 = vmatprep.mubr.f32.mxu0 0.0
    %416 = vmatmul.mubr.f32.gmra.mrb[0].mxu0 %v97
    %v417 = vpop.f32.mrb[0].mxu0
    %v418 = vadd.f32 0.0, %v417
    %v419 = vpop.f32.mrb[0].mxu0
    %420 = vmatprep.mubr.f32.mxu0 0.0
    %421 = vmatmul.mubr.f32.gmra.mrb[0].mxu0 %v98
    %v422 = vpop.f32.mrb[0].mxu0
    %v423 = vadd.f32 0.0, %v422
    %v424 = vpop.f32.mrb[0].mxu0
    %425 = vdwg.mxu0
    %v426 = vsub.f32 %v97, %v418
    %v427 = vsub.f32 %v98, %v423
    %v428 = vmul.f32 %v426, %v426
    %v429 = vmul.f32 %v427, %v427
    %430 = vmatprep.subr.mxu0 0.0
    %431 = vmatpush1.msra.mxu0 %v99
    %432 = vmatprep.subr.mxu0 0.0
    %433 = vmatpush1.msra.mxu0 %v100
    %434 = vmatprep.subr.mxu0 0.0
    %435 = vmatpush1.msra.mxu0 %v101
    %436 = vmatprep.subr.mxu0 0.0
    %437 = vmatpush1.msra.mxu0 %v102
    %438 = vmatprep.subr.mxu0 0.0
    %439 = vmatpush1.msra.mxu0 %v103
    %440 = vmatprep.subr.mxu0 0.0
    %441 = vmatpush1.msra.mxu0 %v104
    %442 = vmatprep.subr.mxu0 0.0
    %443 = vmatpush1.msra.mxu0 %v105
    %444 = vmatprep.subr.mxu0 0.0
    %445 = vmatpush1.msra.mxu0 %v106
    %446 = vmatprep.subr.mxu0 0.0
    %447 = vmatpush1.msra.mxu0 %v107
    %448 = vmatprep.subr.mxu0 0.0
    %449 = vmatpush1.msra.mxu0 %v108
    %450 = vmatprep.subr.mxu0 0.0
    %451 = vmatpush1.msra.mxu0 %v109
    %452 = vmatprep.subr.mxu0 0.0
    %453 = vmatpush1.msra.mxu0 %v110
    %454 = vmatprep.subr.mxu0 0.0
    %455 = vmatpush1.msra.mxu0 %v111
    %456 = vmatprep.subr.mxu0 0.0
    %457 = vmatpush1.msra.mxu0 %v112
    %458 = vmatprep.subr.mxu0 0.0
    %459 = vmatpush1.msra.mxu0 %v113
    %460 = vmatprep.subr.mxu0 0.0
    %461 = vmatpush1.msra.mxu0 %v114
    %462 = vmatprep.subr.mxu0 0.0
    %463 = vmatpush1.msra.mxu0 0.0
    %464 = vmatprep.subr.mxu0 0.0
    %465 = vmatpush1.msra.mxu0 0.0
    %466 = vmatprep.subr.mxu0 0.0
    %467 = vmatpush1.msra.mxu0 0.0
    %468 = vmatprep.subr.mxu0 0.0
    %469 = vmatpush1.msra.mxu0 0.0
    %470 = vmatprep.subr.mxu0 0.0
    %471 = vmatpush1.msra.mxu0 0.0
    %472 = vmatprep.subr.mxu0 0.0
    %473 = vmatpush1.msra.mxu0 0.0
    %474 = vmatprep.subr.mxu0 0.0
    %475 = vmatpush1.msra.mxu0 0.0
    %476 = vmatprep.subr.mxu0 0.0
    %477 = vmatpush1.msra.mxu0 0.0
    %478 = vmatprep.subr.mxu0 0.0
    %479 = vmatpush1.msra.mxu0 0.0
    %480 = vmatprep.subr.mxu0 0.0
    %481 = vmatpush1.msra.mxu0 0.0
    %482 = vmatprep.subr.mxu0 0.0
    %483 = vmatpush1.msra.mxu0 0.0
    %484 = vmatprep.subr.mxu0 0.0
    %485 = vmatpush1.msra.mxu0 0.0
    %486 = vmatprep.subr.mxu0 0.0
    %487 = vmatpush1.msra.mxu0 0.0
    %488 = vmatprep.subr.mxu0 0.0
    %489 = vmatpush1.msra.mxu0 0.0
    %490 = vmatprep.subr.mxu0 0.0
    %491 = vmatpush1.msra.mxu0 0.0
    %492 = vmatprep.subr.mxu0 0.0
    %493 = vmatpush1.msra.mxu0 0.0
    %494 = vmatprep.mubr.f32.mxu0 0.0
    %495 = vmatmul.mubr.f32.gmra.mrb[0].mxu0 %v428
    %v496 = vpop.f32.mrb[0].mxu0
    %v497 = vadd.f32 1e-06, %v496
    %v498 = vpop.f32.mrb[0].mxu0
    %499 = vmatprep.mubr.f32.mxu0 0.0
    %500 = vmatmul.mubr.f32.gmra.mrb[0].mxu0 %v429
    %v501 = vpop.f32.mrb[0].mxu0
    %v502 = vadd.f32 1e-06, %v501
    %v503 = vpop.f32.mrb[0].mxu0
    %504 = vdwg.mxu0
    %v505 = vrsqrt.pop %v497
    %v506 = vrsqrt.pop %v502
    %v507 = vmul.f32 %v426, %v505
    %v508 = vmul.f32 %v427, %v506
    %v509 = vlaneseq
    %v510 = vshrl.u32 %v509, 7
    %v511 = vsub.s32 2, %v510
    %v512 = vrot.slane %v179, %v511
    %v513 = vmul.f32 %v507, %v512
    %v514 = vmul.f32 %v508, %v512
    %v515 = vlaneseq
    %v516 = vshrl.u32 %v515, 7
    %v517 = vsub.s32 3, %v516
    %v518 = vrot.slane %v179, %v517
    %v519 = vadd.f32 %v513, %v518
    %v520 = vadd.f32 %v514, %v518
    %v521 = vld [vmem:[#allocation7] sm:$0xff]
    %v522 = vld [vmem:[#allocation7 + $0x8] sm:$0xff]
    %v523 = vld [vmem:[#allocation7 + $0x10] sm:$0xff]
    %v524 = vld [vmem:[#allocation7 + $0x18] sm:$0xff]
    %v525 = vld [vmem:[#allocation7 + $0x20] sm:$0xff]
    %v526 = vld [vmem:[#allocation7 + $0x28] sm:$0xff]
    %v527 = vld [vmem:[#allocation7 + $0x30] sm:$0xff]
    %v528 = vld [vmem:[#allocation7 + $0x38] sm:$0xff]
    %v529 = vld [vmem:[#allocation7 + $0x40] sm:$0xff]
    %v530 = vld [vmem:[#allocation7 + $0x48] sm:$0xff]
    %v531 = vld [vmem:[#allocation7 + $0x50] sm:$0xff]
    %v532 = vld [vmem:[#allocation7 + $0x58] sm:$0xff]
    %v533 = vld [vmem:[#allocation7 + $0x60] sm:$0xff]
    %v534 = vld [vmem:[#allocation7 + $0x68] sm:$0xff]
    %v535 = vld [vmem:[#allocation7 + $0x70] sm:$0xff]
    %v536 = vld [vmem:[#allocation7 + $0x78] sm:$0xff]
    %v537 = vlaneseq
    %v538 = vshrl.u32 %v537, 7
    %v539 = vsub.s32 4, %v538
    %v540 = vrot.slane %v179, %v539
    %541 = vmatprep.subr.mxu0 0.0
    %542 = vmatpush1.msra.mxu0 %v521
    %543 = vmatprep.subr.mxu0 0.0
    %544 = vmatpush1.msra.mxu0 %v522
    %545 = vmatprep.subr.mxu0 0.0
    %546 = vmatpush1.msra.mxu0 %v523
    %547 = vmatprep.subr.mxu0 0.0
    %548 = vmatpush1.msra.mxu0 %v524
    %549 = vmatprep.subr.mxu0 0.0
    %550 = vmatpush1.msra.mxu0 %v525
    %551 = vmatprep.subr.mxu0 0.0
    %552 = vmatpush1.msra.mxu0 %v526
    %553 = vmatprep.subr.mxu0 0.0
    %554 = vmatpush1.msra.mxu0 %v527
    %555 = vmatprep.subr.mxu0 0.0
    %556 = vmatpush1.msra.mxu0 %v528
    %557 = vmatprep.subr.mxu0 0.0
    %558 = vmatpush1.msra.mxu0 %v529
    %559 = vmatprep.subr.mxu0 0.0
    %560 = vmatpush1.msra.mxu0 %v530
    %561 = vmatprep.subr.mxu0 0.0
    %562 = vmatpush1.msra.mxu0 %v531
    %563 = vmatprep.subr.mxu0 0.0
    %564 = vmatpush1.msra.mxu0 %v532
    %565 = vmatprep.subr.mxu0 0.0
    %566 = vmatpush1.msra.mxu0 %v533
    %567 = vmatprep.subr.mxu0 0.0
    %568 = vmatpush1.msra.mxu0 %v534
    %569 = vmatprep.subr.mxu0 0.0
    %570 = vmatpush1.msra.mxu0 %v535
    %571 = vmatprep.subr.mxu0 0.0
    %572 = vmatpush1.msra.mxu0 %v536
    %573 = vmatprep.subr.mxu0 0.0
    %574 = vmatpush1.msra.mxu0 0.0
    %575 = vmatprep.subr.mxu0 0.0
    %576 = vmatpush1.msra.mxu0 0.0
    %577 = vmatprep.subr.mxu0 0.0
    %578 = vmatpush1.msra.mxu0 0.0
    %579 = vmatprep.subr.mxu0 0.0
    %580 = vmatpush1.msra.mxu0 0.0
    %581 = vmatprep.subr.mxu0 0.0
    %582 = vmatpush1.msra.mxu0 0.0
    %583 = vmatprep.subr.mxu0 0.0
    %584 = vmatpush1.msra.mxu0 0.0
    %585 = vmatprep.subr.mxu0 0.0
    %586 = vmatpush1.msra.mxu0 0.0
    %587 = vmatprep.subr.mxu0 0.0
    %588 = vmatpush1.msra.mxu0 0.0
    %589 = vmatprep.subr.mxu0 0.0
    %590 = vmatpush1.msra.mxu0 0.0
    %591 = vmatprep.subr.mxu0 0.0
    %592 = vmatpush1.msra.mxu0 0.0
    %593 = vmatprep.subr.mxu0 0.0
    %594 = vmatpush1.msra.mxu0 0.0
    %595 = vmatprep.subr.mxu0 0.0
    %596 = vmatpush1.msra.mxu0 0.0
    %597 = vmatprep.subr.mxu0 0.0
    %598 = vmatpush1.msra.mxu0 0.0
    %599 = vmatprep.subr.mxu0 0.0
    %600 = vmatpush1.msra.mxu0 0.0
    %601 = vmatprep.subr.mxu0 0.0
    %602 = vmatpush1.msra.mxu0 0.0
    %603 = vmatprep.subr.mxu0 0.0
    %604 = vmatpush1.msra.mxu0 0.0
    %605 = vmatprep.mubr.f32.mxu0 0.0
    %606 = vmatmul.mubr.f32.gmra.mrb[0].mxu0 %v349
    %v607 = vpop.f32.mrb[0].mxu0
    %v608 = vadd.f32 %v540, %v607
    %v609 = vpop.f32.mrb[0].mxu0
    %610 = vmatprep.mubr.f32.mxu0 0.0
    %611 = vmatmul.mubr.f32.gmra.mrb[0].mxu0 %v350
    %v612 = vpop.f32.mrb[0].mxu0
    %v613 = vadd.f32 %v540, %v612
    %v614 = vpop.f32.mrb[0].mxu0
    %615 = vdwg.mxu0
    %s616 = scalar_lea.vmem [#allocation7], 128
    %v617 = vld [vmem:[%s616] sm:$0xff]
    %v618 = vld [vmem:[%s616 + $0x8] sm:$0xff]
    %v619 = vld [vmem:[%s616 + $0x10] sm:$0xff]
    %v620 = vld [vmem:[%s616 + $0x18] sm:$0xff]
    %v621 = vld [vmem:[%s616 + $0x20] sm:$0xff]
    %v622 = vld [vmem:[%s616 + $0x28] sm:$0xff]
    %v623 = vld [vmem:[%s616 + $0x30] sm:$0xff]
    %v624 = vld [vmem:[%s616 + $0x38] sm:$0xff]
    %v625 = vld [vmem:[%s616 + $0x40] sm:$0xff]
    %v626 = vld [vmem:[%s616 + $0x48] sm:$0xff]
    %v627 = vld [vmem:[%s616 + $0x50] sm:$0xff]
    %v628 = vld [vmem:[%s616 + $0x58] sm:$0xff]
    %v629 = vld [vmem:[%s616 + $0x60] sm:$0xff]
    %v630 = vld [vmem:[%s616 + $0x68] sm:$0xff]
    %v631 = vld [vmem:[%s616 + $0x70] sm:$0xff]
    %v632 = vld [vmem:[%s616 + $0x78] sm:$0xff]
    %v633 = vlaneseq
    %v634 = vshrl.u32 %v633, 7
    %v635 = vsub.s32 5, %v634
    %v636 = vrot.slane %v179, %v635
    %637 = vmatprep.subr.mxu0 0.0
    %638 = vmatpush1.msra.mxu0 %v617
    %639 = vmatprep.subr.mxu0 0.0
    %640 = vmatpush1.msra.mxu0 %v618
    %641 = vmatprep.subr.mxu0 0.0
    %642 = vmatpush1.msra.mxu0 %v619
    %643 = vmatprep.subr.mxu0 0.0
    %644 = vmatpush1.msra.mxu0 %v620
    %645 = vmatprep.subr.mxu0 0.0
    %646 = vmatpush1.msra.mxu0 %v621
    %647 = vmatprep.subr.mxu0 0.0
    %648 = vmatpush1.msra.mxu0 %v622
    %649 = vmatprep.subr.mxu0 0.0
    %650 = vmatpush1.msra.mxu0 %v623
    %651 = vmatprep.subr.mxu0 0.0
    %652 = vmatpush1.msra.mxu0 %v624
    %653 = vmatprep.subr.mxu0 0.0
    %654 = vmatpush1.msra.mxu0 %v625
    %655 = vmatprep.subr.mxu0 0.0
    %656 = vmatpush1.msra.mxu0 %v626
    %657 = vmatprep.subr.mxu0 0.0
    %658 = vmatpush1.msra.mxu0 %v627
    %659 = vmatprep.subr.mxu0 0.0
    %660 = vmatpush1.msra.mxu0 %v628
    %661 = vmatprep.subr.mxu0 0.0
    %662 = vmatpush1.msra.mxu0 %v629
    %663 = vmatprep.subr.mxu0 0.0
    %664 = vmatpush1.msra.mxu0 %v630
    %665 = vmatprep.subr.mxu0 0.0
    %666 = vmatpush1.msra.mxu0 %v631
    %667 = vmatprep.subr.mxu0 0.0
    %668 = vmatpush1.msra.mxu0 %v632
    %669 = vmatprep.subr.mxu0 0.0
    %670 = vmatpush1.msra.mxu0 0.0
    %671 = vmatprep.subr.mxu0 0.0
    %672 = vmatpush1.msra.mxu0 0.0
    %673 = vmatprep.subr.mxu0 0.0
    %674 = vmatpush1.msra.mxu0 0.0
    %675 = vmatprep.subr.mxu0 0.0
    %676 = vmatpush1.msra.mxu0 0.0
    %677 = vmatprep.subr.mxu0 0.0
    %678 = vmatpush1.msra.mxu0 0.0
    %679 = vmatprep.subr.mxu0 0.0
    %680 = vmatpush1.msra.mxu0 0.0
    %681 = vmatprep.subr.mxu0 0.0
    %682 = vmatpush1.msra.mxu0 0.0
    %683 = vmatprep.subr.mxu0 0.0
    %684 = vmatpush1.msra.mxu0 0.0
    %685 = vmatprep.subr.mxu0 0.0
    %686 = vmatpush1.msra.mxu0 0.0
    %687 = vmatprep.subr.mxu0 0.0
    %688 = vmatpush1.msra.mxu0 0.0
    %689 = vmatprep.subr.mxu0 0.0
    %690 = vmatpush1.msra.mxu0 0.0
    %691 = vmatprep.subr.mxu0 0.0
    %692 = vmatpush1.msra.mxu0 0.0
    %693 = vmatprep.subr.mxu0 0.0
    %694 = vmatpush1.msra.mxu0 0.0
    %695 = vmatprep.subr.mxu0 0.0
    %696 = vmatpush1.msra.mxu0 0.0
    %697 = vmatprep.subr.mxu0 0.0
    %698 = vmatpush1.msra.mxu0 0.0
    %699 = vmatprep.subr.mxu0 0.0
    %700 = vmatpush1.msra.mxu0 0.0
    %701 = vmatprep.mubr.f32.mxu0 0.0
    %702 = vmatmul.mubr.f32.gmra.mrb[0].mxu0 %v519
    %v703 = vpop.f32.mrb[0].mxu0
    %v704 = vadd.f32 %v636, %v703
    %v705 = vpop.f32.mrb[0].mxu0
    %706 = vmatprep.mubr.f32.mxu0 0.0
    %707 = vmatmul.mubr.f32.gmra.mrb[0].mxu0 %v520
    %v708 = vpop.f32.mrb[0].mxu0
    %v709 = vadd.f32 %v636, %v708
    %v710 = vpop.f32.mrb[0].mxu0
    %711 = vdwg.mxu0
    %s712 = scalar_lea.vmem [#allocation7], 256
    %v713 = vld [vmem:[%s712] sm:$0xff]
    %v714 = vld [vmem:[%s712 + $0x8] sm:$0xff]
    %v715 = vld [vmem:[%s712 + $0x10] sm:$0xff]
    %v716 = vld [vmem:[%s712 + $0x18] sm:$0xff]
    %v717 = vld [vmem:[%s712 + $0x20] sm:$0xff]
    %v718 = vld [vmem:[%s712 + $0x28] sm:$0xff]
    %v719 = vld [vmem:[%s712 + $0x30] sm:$0xff]
    %v720 = vld [vmem:[%s712 + $0x38] sm:$0xff]
    %v721 = vld [vmem:[%s712 + $0x40] sm:$0xff]
    %v722 = vld [vmem:[%s712 + $0x48] sm:$0xff]
    %v723 = vld [vmem:[%s712 + $0x50] sm:$0xff]
    %v724 = vld [vmem:[%s712 + $0x58] sm:$0xff]
    %v725 = vld [vmem:[%s712 + $0x60] sm:$0xff]
    %v726 = vld [vmem:[%s712 + $0x68] sm:$0xff]
    %v727 = vld [vmem:[%s712 + $0x70] sm:$0xff]
    %v728 = vld [vmem:[%s712 + $0x78] sm:$0xff]
    %v729 = vlaneseq
    %v730 = vshrl.u32 %v729, 7
    %v731 = vsub.s32 6, %v730
    %v732 = vrot.slane %v179, %v731
    %733 = vmatprep.subr.mxu0 0.0
    %734 = vmatpush1.msra.mxu0 %v713
    %735 = vmatprep.subr.mxu0 0.0
    %736 = vmatpush1.msra.mxu0 %v714
    %737 = vmatprep.subr.mxu0 0.0
    %738 = vmatpush1.msra.mxu0 %v715
    %739 = vmatprep.subr.mxu0 0.0
    %740 = vmatpush1.msra.mxu0 %v716
    %741 = vmatprep.subr.mxu0 0.0
    %742 = vmatpush1.msra.mxu0 %v717
    %743 = vmatprep.subr.mxu0 0.0
    %744 = vmatpush1.msra.mxu0 %v718
    %745 = vmatprep.subr.mxu0 0.0
    %746 = vmatpush1.msra.mxu0 %v719
    %747 = vmatprep.subr.mxu0 0.0
    %748 = vmatpush1.msra.mxu0 %v720
    %749 = vmatprep.subr.mxu0 0.0
    %750 = vmatpush1.msra.mxu0 %v721
    %751 = vmatprep.subr.mxu0 0.0
    %752 = vmatpush1.msra.mxu0 %v722
    %753 = vmatprep.subr.mxu0 0.0
    %754 = vmatpush1.msra.mxu0 %v723
    %755 = vmatprep.subr.mxu0 0.0
    %756 = vmatpush1.msra.mxu0 %v724
    %757 = vmatprep.subr.mxu0 0.0
    %758 = vmatpush1.msra.mxu0 %v725
    %759 = vmatprep.subr.mxu0 0.0
    %760 = vmatpush1.msra.mxu0 %v726
    %761 = vmatprep.subr.mxu0 0.0
    %762 = vmatpush1.msra.mxu0 %v727
    %763 = vmatprep.subr.mxu0 0.0
    %764 = vmatpush1.msra.mxu0 %v728
    %765 = vmatprep.subr.mxu0 0.0
    %766 = vmatpush1.msra.mxu0 0.0
    %767 = vmatprep.subr.mxu0 0.0
    %768 = vmatpush1.msra.mxu0 0.0
    %769 = vmatprep.subr.mxu0 0.0
    %770 = vmatpush1.msra.mxu0 0.0
    %771 = vmatprep.subr.mxu0 0.0
    %772 = vmatpush1.msra.mxu0 0.0
    %773 = vmatprep.subr.mxu0 0.0
    %774 = vmatpush1.msra.mxu0 0.0
    %775 = vmatprep.subr.mxu0 0.0
    %776 = vmatpush1.msra.mxu0 0.0
    %777 = vmatprep.subr.mxu0 0.0
    %778 = vmatpush1.msra.mxu0 0.0
    %779 = vmatprep.subr.mxu0 0.0
    %780 = vmatpush1.msra.mxu0 0.0
    %781 = vmatprep.subr.mxu0 0.0
    %782 = vmatpush1.msra.mxu0 0.0
    %783 = vmatprep.subr.mxu0 0.0
    %784 = vmatpush1.msra.mxu0 0.0
    %785 = vmatprep.subr.mxu0 0.0
    %786 = vmatpush1.msra.mxu0 0.0
    %787 = vmatprep.subr.mxu0 0.0
    %788 = vmatpush1.msra.mxu0 0.0
    %789 = vmatprep.subr.mxu0 0.0
    %790 = vmatpush1.msra.mxu0 0.0
    %791 = vmatprep.subr.mxu0 0.0
    %792 = vmatpush1.msra.mxu0 0.0
    %793 = vmatprep.subr.mxu0 0.0
    %794 = vmatpush1.msra.mxu0 0.0
    %795 = vmatprep.subr.mxu0 0.0
    %796 = vmatpush1.msra.mxu0 0.0
    %797 = vmatprep.mubr.f32.mxu0 0.0
    %798 = vmatmul.mubr.f32.gmra.mrb[0].mxu0 %v95
    %v799 = vpop.f32.mrb[0].mxu0
    %v800 = vadd.f32 %v732, %v799
    %v801 = vpop.f32.mrb[0].mxu0
    %802 = vmatprep.mubr.f32.mxu0 0.0
    %803 = vmatmul.mubr.f32.gmra.mrb[0].mxu0 %v96
    %v804 = vpop.f32.mrb[0].mxu0
    %v805 = vadd.f32 %v732, %v804
    %v806 = vpop.f32.mrb[0].mxu0
    %807 = vdwg.mxu0
    %s808 = scalar_lea.vmem [#allocation7], 384
    %v809 = vld [vmem:[%s808] sm:$0xff]
    %v810 = vld [vmem:[%s808 + $0x8] sm:$0xff]
    %v811 = vld [vmem:[%s808 + $0x10] sm:$0xff]
    %v812 = vld [vmem:[%s808 + $0x18] sm:$0xff]
    %v813 = vld [vmem:[%s808 + $0x20] sm:$0xff]
    %v814 = vld [vmem:[%s808 + $0x28] sm:$0xff]
    %v815 = vld [vmem:[%s808 + $0x30] sm:$0xff]
    %v816 = vld [vmem:[%s808 + $0x38] sm:$0xff]
    %v817 = vld [vmem:[%s808 + $0x40] sm:$0xff]
    %v818 = vld [vmem:[%s808 + $0x48] sm:$0xff]
    %v819 = vld [vmem:[%s808 + $0x50] sm:$0xff]
    %v820 = vld [vmem:[%s808 + $0x58] sm:$0xff]
    %v821 = vld [vmem:[%s808 + $0x60] sm:$0xff]
    %v822 = vld [vmem:[%s808 + $0x68] sm:$0xff]
    %v823 = vld [vmem:[%s808 + $0x70] sm:$0xff]
    %v824 = vld [vmem:[%s808 + $0x78] sm:$0xff]
    %v825 = vlaneseq
    %v826 = vshrl.u32 %v825, 7
    %v827 = vsub.s32 7, %v826
    %v828 = vrot.slane %v179, %v827
    %829 = vmatprep.subr.mxu0 0.0
    %830 = vmatpush1.msra.mxu0 %v809
    %831 = vmatprep.subr.mxu0 0.0
    %832 = vmatpush1.msra.mxu0 %v810
    %833 = vmatprep.subr.mxu0 0.0
    %834 = vmatpush1.msra.mxu0 %v811
    %835 = vmatprep.subr.mxu0 0.0
    %836 = vmatpush1.msra.mxu0 %v812
    %837 = vmatprep.subr.mxu0 0.0
    %838 = vmatpush1.msra.mxu0 %v813
    %839 = vmatprep.subr.mxu0 0.0
    %840 = vmatpush1.msra.mxu0 %v814
    %841 = vmatprep.subr.mxu0 0.0
    %842 = vmatpush1.msra.mxu0 %v815
    %843 = vmatprep.subr.mxu0 0.0
    %844 = vmatpush1.msra.mxu0 %v816
    %845 = vmatprep.subr.mxu0 0.0
    %846 = vmatpush1.msra.mxu0 %v817
    %847 = vmatprep.subr.mxu0 0.0
    %848 = vmatpush1.msra.mxu0 %v818
    %849 = vmatprep.subr.mxu0 0.0
    %850 = vmatpush1.msra.mxu0 %v819
    %851 = vmatprep.subr.mxu0 0.0
    %852 = vmatpush1.msra.mxu0 %v820
    %853 = vmatprep.subr.mxu0 0.0
    %854 = vmatpush1.msra.mxu0 %v821
    %855 = vmatprep.subr.mxu0 0.0
    %856 = vmatpush1.msra.mxu0 %v822
    %857 = vmatprep.subr.mxu0 0.0
    %858 = vmatpush1.msra.mxu0 %v823
    %859 = vmatprep.subr.mxu0 0.0
    %860 = vmatpush1.msra.mxu0 %v824
    %861 = vmatprep.subr.mxu0 0.0
    %862 = vmatpush1.msra.mxu0 0.0
    %863 = vmatprep.subr.mxu0 0.0
    %864 = vmatpush1.msra.mxu0 0.0
    %865 = vmatprep.subr.mxu0 0.0
    %866 = vmatpush1.msra.mxu0 0.0
    %867 = vmatprep.subr.mxu0 0.0
    %868 = vmatpush1.msra.mxu0 0.0
    %869 = vmatprep.subr.mxu0 0.0
    %870 = vmatpush1.msra.mxu0 0.0
    %871 = vmatprep.subr.mxu0 0.0
    %872 = vmatpush1.msra.mxu0 0.0
    %873 = vmatprep.subr.mxu0 0.0
    %874 = vmatpush1.msra.mxu0 0.0
    %875 = vmatprep.subr.mxu0 0.0
    %876 = vmatpush1.msra.mxu0 0.0
    %877 = vmatprep.subr.mxu0 0.0
    %878 = vmatpush1.msra.mxu0 0.0
    %879 = vmatprep.subr.mxu0 0.0
    %880 = vmatpush1.msra.mxu0 0.0
    %881 = vmatprep.subr.mxu0 0.0
    %882 = vmatpush1.msra.mxu0 0.0
    %883 = vmatprep.subr.mxu0 0.0
    %884 = vmatpush1.msra.mxu0 0.0
    %885 = vmatprep.subr.mxu0 0.0
    %886 = vmatpush1.msra.mxu0 0.0
    %887 = vmatprep.subr.mxu0 0.0
    %888 = vmatpush1.msra.mxu0 0.0
    %889 = vmatprep.subr.mxu0 0.0
    %890 = vmatpush1.msra.mxu0 0.0
    %891 = vmatprep.subr.mxu0 0.0
    %892 = vmatpush1.msra.mxu0 0.0
    %893 = vmatprep.mubr.f32.mxu0 0.0
    %894 = vmatmul.mubr.f32.gmra.mrb[0].mxu0 %v97
    %v895 = vpop.f32.mrb[0].mxu0
    %v896 = vadd.f32 %v828, %v895
    %v897 = vpop.f32.mrb[0].mxu0
    %898 = vmatprep.mubr.f32.mxu0 0.0
    %899 = vmatmul.mubr.f32.gmra.mrb[0].mxu0 %v98
    %v900 = vpop.f32.mrb[0].mxu0
    %v901 = vadd.f32 %v828, %v900
    %v902 = vpop.f32.mrb[0].mxu0
    %903 = vdwg.mxu0
    %906 = vrot.lane.b32.xlu0 %v608, 120
    %v907 = vpop.permute.xlu0 %906
    %908 = vrot.lane.b32.xlu0 %v613, 120
    %v909 = vpop.permute.xlu0 %908
    %910 = vrot.lane.b32.xlu0 %v608, 112
    %v911 = vpop.permute.xlu0 %910
    %912 = vrot.lane.b32.xlu0 %v613, 112
    %v913 = vpop.permute.xlu0 %912
    %914 = vrot.lane.b32.xlu0 %v608, 104
    %v915 = vpop.permute.xlu0 %914
    %916 = vrot.lane.b32.xlu0 %v613, 104
    %v917 = vpop.permute.xlu0 %916
    %918 = vrot.lane.b32.xlu0 %v608, 96
    %v919 = vpop.permute.xlu0 %918
    %920 = vrot.lane.b32.xlu0 %v613, 96
    %v921 = vpop.permute.xlu0 %920
    %922 = vrot.lane.b32.xlu0 %v608, 88
    %v923 = vpop.permute.xlu0 %922
    %924 = vrot.lane.b32.xlu0 %v613, 88
    %v925 = vpop.permute.xlu0 %924
    %926 = vrot.lane.b32.xlu0 %v608, 80
    %v927 = vpop.permute.xlu0 %926
    %928 = vrot.lane.b32.xlu0 %v613, 80
    %v929 = vpop.permute.xlu0 %928
    %930 = vrot.lane.b32.xlu0 %v608, 72
    %v931 = vpop.permute.xlu0 %930
    %932 = vrot.lane.b32.xlu0 %v613, 72
    %v933 = vpop.permute.xlu0 %932
    %934 = vrot.lane.b32.xlu0 %v608, 64
    %v935 = vpop.permute.xlu0 %934
    %936 = vrot.lane.b32.xlu0 %v613, 64
    %v937 = vpop.permute.xlu0 %936
    %938 = vrot.lane.b32.xlu0 %v608, 56
    %v939 = vpop.permute.xlu0 %938
    %940 = vrot.lane.b32.xlu0 %v613, 56
    %v941 = vpop.permute.xlu0 %940
    %942 = vrot.lane.b32.xlu0 %v608, 48
    %v943 = vpop.permute.xlu0 %942
    %944 = vrot.lane.b32.xlu0 %v613, 48
    %v945 = vpop.permute.xlu0 %944
    %946 = vrot.lane.b32.xlu0 %v608, 40
    %v947 = vpop.permute.xlu0 %946
    %948 = vrot.lane.b32.xlu0 %v613, 40
    %v949 = vpop.permute.xlu0 %948
    %950 = vrot.lane.b32.xlu0 %v608, 32
    %v951 = vpop.permute.xlu0 %950
    %952 = vrot.lane.b32.xlu0 %v613, 32
    %v953 = vpop.permute.xlu0 %952
    %954 = vrot.lane.b32.xlu0 %v608, 24
    %v955 = vpop.permute.xlu0 %954
    %956 = vrot.lane.b32.xlu0 %v613, 24
    %v957 = vpop.permute.xlu0 %956
    %958 = vrot.lane.b32.xlu0 %v608, 16
    %v959 = vpop.permute.xlu0 %958
    %960 = vrot.lane.b32.xlu0 %v613, 16
    %v961 = vpop.permute.xlu0 %960
    %962 = vrot.lane.b32.xlu0 %v608, 8
    %v963 = vpop.permute.xlu0 %962
    %964 = vrot.lane.b32.xlu0 %v613, 8
    %v965 = vpop.permute.xlu0 %964
    %968 = vrot.lane.b32.xlu0 %v704, 120
    %v969 = vpop.permute.xlu0 %968
    %970 = vrot.lane.b32.xlu0 %v709, 120
    %v971 = vpop.permute.xlu0 %970
    %972 = vrot.lane.b32.xlu0 %v704, 112
    %v973 = vpop.permute.xlu0 %972
    %974 = vrot.lane.b32.xlu0 %v709, 112
    %v975 = vpop.permute.xlu0 %974
    %976 = vrot.lane.b32.xlu0 %v704, 104
    %v977 = vpop.permute.xlu0 %976
    %978 = vrot.lane.b32.xlu0 %v709, 104
    %v979 = vpop.permute.xlu0 %978
    %980 = vrot.lane.b32.xlu0 %v704, 96
    %v981 = vpop.permute.xlu0 %980
    %982 = vrot.lane.b32.xlu0 %v709, 96
    %v983 = vpop.permute.xlu0 %982
    %984 = vrot.lane.b32.xlu0 %v704, 88
    %v985 = vpop.permute.xlu0 %984
    %986 = vrot.lane.b32.xlu0 %v709, 88
    %v987 = vpop.permute.xlu0 %986
    %988 = vrot.lane.b32.xlu0 %v704, 80
    %v989 = vpop.permute.xlu0 %988
    %990 = vrot.lane.b32.xlu0 %v709, 80
    %v991 = vpop.permute.xlu0 %990
    %992 = vrot.lane.b32.xlu0 %v704, 72
    %v993 = vpop.permute.xlu0 %992
    %994 = vrot.lane.b32.xlu0 %v709, 72
    %v995 = vpop.permute.xlu0 %994
    %996 = vrot.lane.b32.xlu0 %v704, 64
    %v997 = vpop.permute.xlu0 %996
    %998 = vrot.lane.b32.xlu0 %v709, 64
    %v999 = vpop.permute.xlu0 %998
    %1000 = vrot.lane.b32.xlu0 %v704, 56
    %v1001 = vpop.permute.xlu0 %1000
    %1002 = vrot.lane.b32.xlu0 %v709, 56
    %v1003 = vpop.permute.xlu0 %1002
    %1004 = vrot.lane.b32.xlu0 %v704, 48
    %v1005 = vpop.permute.xlu0 %1004
    %1006 = vrot.lane.b32.xlu0 %v709, 48
    %v1007 = vpop.permute.xlu0 %1006
    %1008 = vrot.lane.b32.xlu0 %v704, 40
    %v1009 = vpop.permute.xlu0 %1008
    %1010 = vrot.lane.b32.xlu0 %v709, 40
    %v1011 = vpop.permute.xlu0 %1010
    %1012 = vrot.lane.b32.xlu0 %v704, 32
    %v1013 = vpop.permute.xlu0 %1012
    %1014 = vrot.lane.b32.xlu0 %v709, 32
    %v1015 = vpop.permute.xlu0 %1014
    %1016 = vrot.lane.b32.xlu0 %v704, 24
    %v1017 = vpop.permute.xlu0 %1016
    %1018 = vrot.lane.b32.xlu0 %v709, 24
    %v1019 = vpop.permute.xlu0 %1018
    %1020 = vrot.lane.b32.xlu0 %v704, 16
    %v1021 = vpop.permute.xlu0 %1020
    %1022 = vrot.lane.b32.xlu0 %v709, 16
    %v1023 = vpop.permute.xlu0 %1022
    %1024 = vrot.lane.b32.xlu0 %v704, 8
    %v1025 = vpop.permute.xlu0 %1024
    %1026 = vrot.lane.b32.xlu0 %v709, 8
    %v1027 = vpop.permute.xlu0 %1026
    %1030 = vrot.lane.b32.xlu0 %v800, 120
    %v1031 = vpop.permute.xlu0 %1030
    %1032 = vrot.lane.b32.xlu0 %v805, 120
    %v1033 = vpop.permute.xlu0 %1032
    %1036 = vrot.lane.b32.xlu0 %v800, 112
    %v1037 = vpop.permute.xlu0 %1036
    %1038 = vrot.lane.b32.xlu0 %v805, 112
    %v1039 = vpop.permute.xlu0 %1038
    %1042 = vrot.lane.b32.xlu0 %v800, 104
    %v1043 = vpop.permute.xlu0 %1042
    %1044 = vrot.lane.b32.xlu0 %v805, 104
    %v1045 = vpop.permute.xlu0 %1044
    %1048 = vrot.lane.b32.xlu0 %v800, 96
    %v1049 = vpop.permute.xlu0 %1048
    %1050 = vrot.lane.b32.xlu0 %v805, 96
    %v1051 = vpop.permute.xlu0 %1050
    %1054 = vrot.lane.b32.xlu0 %v800, 88
    %v1055 = vpop.permute.xlu0 %1054
    %1056 = vrot.lane.b32.xlu0 %v805, 88
    %v1057 = vpop.permute.xlu0 %1056
    %1060 = vrot.lane.b32.xlu0 %v800, 80
    %v1061 = vpop.permute.xlu0 %1060
    %1062 = vrot.lane.b32.xlu0 %v805, 80
    %v1063 = vpop.permute.xlu0 %1062
    %1066 = vrot.lane.b32.xlu0 %v800, 72
    %v1067 = vpop.permute.xlu0 %1066
    %1068 = vrot.lane.b32.xlu0 %v805, 72
    %v1069 = vpop.permute.xlu0 %1068
    %1072 = vrot.lane.b32.xlu0 %v800, 64
    %v1073 = vpop.permute.xlu0 %1072
    %1074 = vrot.lane.b32.xlu0 %v805, 64
    %v1075 = vpop.permute.xlu0 %1074
    %1078 = vrot.lane.b32.xlu0 %v800, 56
    %v1079 = vpop.permute.xlu0 %1078
    %1080 = vrot.lane.b32.xlu0 %v805, 56
    %v1081 = vpop.permute.xlu0 %1080
    %1084 = vrot.lane.b32.xlu0 %v800, 48
    %v1085 = vpop.permute.xlu0 %1084
    %1086 = vrot.lane.b32.xlu0 %v805, 48
    %v1087 = vpop.permute.xlu0 %1086
    %1090 = vrot.lane.b32.xlu0 %v800, 40
    %v1091 = vpop.permute.xlu0 %1090
    %1092 = vrot.lane.b32.xlu0 %v805, 40
    %v1093 = vpop.permute.xlu0 %1092
    %1096 = vrot.lane.b32.xlu0 %v800, 32
    %v1097 = vpop.permute.xlu0 %1096
    %1098 = vrot.lane.b32.xlu0 %v805, 32
    %v1099 = vpop.permute.xlu0 %1098
    %1102 = vrot.lane.b32.xlu0 %v800, 24
    %v1103 = vpop.permute.xlu0 %1102
    %1104 = vrot.lane.b32.xlu0 %v805, 24
    %v1105 = vpop.permute.xlu0 %1104
    %1108 = vrot.lane.b32.xlu0 %v800, 16
    %v1109 = vpop.permute.xlu0 %1108
    %1110 = vrot.lane.b32.xlu0 %v805, 16
    %v1111 = vpop.permute.xlu0 %1110
    %1114 = vrot.lane.b32.xlu0 %v800, 8
    %v1115 = vpop.permute.xlu0 %1114
    %1116 = vrot.lane.b32.xlu0 %v805, 8
    %v1117 = vpop.permute.xlu0 %1116
    %1122 = vrot.lane.b32.xlu0 %v896, 120
    %v1123 = vpop.permute.xlu0 %1122
    %1124 = vrot.lane.b32.xlu0 %v901, 120
    %v1125 = vpop.permute.xlu0 %1124
    %1128 = vrot.lane.b32.xlu0 %v896, 112
    %v1129 = vpop.permute.xlu0 %1128
    %1130 = vrot.lane.b32.xlu0 %v901, 112
    %v1131 = vpop.permute.xlu0 %1130
    %1134 = vrot.lane.b32.xlu0 %v896, 104
    %v1135 = vpop.permute.xlu0 %1134
    %1136 = vrot.lane.b32.xlu0 %v901, 104
    %v1137 = vpop.permute.xlu0 %1136
    %1140 = vrot.lane.b32.xlu0 %v896, 96
    %v1141 = vpop.permute.xlu0 %1140
    %1142 = vrot.lane.b32.xlu0 %v901, 96
    %v1143 = vpop.permute.xlu0 %1142
    %1146 = vrot.lane.b32.xlu0 %v896, 88
    %v1147 = vpop.permute.xlu0 %1146
    %1148 = vrot.lane.b32.xlu0 %v901, 88
    %v1149 = vpop.permute.xlu0 %1148
    %1152 = vrot.lane.b32.xlu0 %v896, 80
    %v1153 = vpop.permute.xlu0 %1152
    %1154 = vrot.lane.b32.xlu0 %v901, 80
    %v1155 = vpop.permute.xlu0 %1154
    %1158 = vrot.lane.b32.xlu0 %v896, 72
    %v1159 = vpop.permute.xlu0 %1158
    %1160 = vrot.lane.b32.xlu0 %v901, 72
    %v1161 = vpop.permute.xlu0 %1160
    %1164 = vrot.lane.b32.xlu0 %v896, 64
    %v1165 = vpop.permute.xlu0 %1164
    %1166 = vrot.lane.b32.xlu0 %v901, 64
    %v1167 = vpop.permute.xlu0 %1166
    %1170 = vrot.lane.b32.xlu0 %v896, 56
    %v1171 = vpop.permute.xlu0 %1170
    %1172 = vrot.lane.b32.xlu0 %v901, 56
    %v1173 = vpop.permute.xlu0 %1172
    %1176 = vrot.lane.b32.xlu0 %v896, 48
    %v1177 = vpop.permute.xlu0 %1176
    %1178 = vrot.lane.b32.xlu0 %v901, 48
    %v1179 = vpop.permute.xlu0 %1178
    %1182 = vrot.lane.b32.xlu0 %v896, 40
    %v1183 = vpop.permute.xlu0 %1182
    %1184 = vrot.lane.b32.xlu0 %v901, 40
    %v1185 = vpop.permute.xlu0 %1184
    %1188 = vrot.lane.b32.xlu0 %v896, 32
    %v1189 = vpop.permute.xlu0 %1188
    %1190 = vrot.lane.b32.xlu0 %v901, 32
    %v1191 = vpop.permute.xlu0 %1190
    %1194 = vrot.lane.b32.xlu0 %v896, 24
    %v1195 = vpop.permute.xlu0 %1194
    %1196 = vrot.lane.b32.xlu0 %v901, 24
    %v1197 = vpop.permute.xlu0 %1196
    %1200 = vrot.lane.b32.xlu0 %v896, 16
    %v1201 = vpop.permute.xlu0 %1200
    %1202 = vrot.lane.b32.xlu0 %v901, 16
    %v1203 = vpop.permute.xlu0 %1202
    %1206 = vrot.lane.b32.xlu0 %v896, 8
    %v1207 = vpop.permute.xlu0 %1206
    %1208 = vrot.lane.b32.xlu0 %v901, 8
    %v1209 = vpop.permute.xlu0 %1208
    %vm1212 = vcmask 64512
    %v1213 = vsel %vm1212, %v608, 0
    %v1215 = vsel %vm1212, %v613, 0
    %v1217 = vsel %vm1212, %v907, 0
    %v1219 = vsel %vm1212, %v909, 0
    %v1221 = vsel %vm1212, %v911, 0
    %v1223 = vsel %vm1212, %v913, 0
    %v1225 = vsel %vm1212, %v915, 0
    %v1227 = vsel %vm1212, %v917, 0
    %v1229 = vsel %vm1212, %v919, 0
    %v1231 = vsel %vm1212, %v921, 0
    %v1233 = vsel %vm1212, %v923, 0
    %v1235 = vsel %vm1212, %v925, 0
    %v1237 = vsel %vm1212, %v927, 0
    %v1239 = vsel %vm1212, %v929, 0
    %v1241 = vsel %vm1212, %v931, 0
    %v1243 = vsel %vm1212, %v933, 0
    %v1245 = vsel %vm1212, %v935, 0
    %v1247 = vsel %vm1212, %v937, 0
    %v1249 = vsel %vm1212, %v939, 0
    %v1251 = vsel %vm1212, %v941, 0
    %v1253 = vsel %vm1212, %v943, 0
    %v1255 = vsel %vm1212, %v945, 0
    %v1257 = vsel %vm1212, %v947, 0
    %v1259 = vsel %vm1212, %v949, 0
    %v1261 = vsel %vm1212, %v951, 0
    %v1263 = vsel %vm1212, %v953, 0
    %v1265 = vsel %vm1212, %v955, 0
    %v1267 = vsel %vm1212, %v957, 0
    %v1269 = vsel %vm1212, %v959, 0
    %v1271 = vsel %vm1212, %v961, 0
    %v1273 = vsel %vm1212, %v963, 0
    %v1275 = vsel %vm1212, %v965, 0
    %v1277 = vsel %vm1212, %v704, 0
    %v1279 = vsel %vm1212, %v709, 0
    %v1281 = vsel %vm1212, %v969, 0
    %v1283 = vsel %vm1212, %v971, 0
    %v1285 = vsel %vm1212, %v973, 0
    %v1287 = vsel %vm1212, %v975, 0
    %v1289 = vsel %vm1212, %v977, 0
    %v1291 = vsel %vm1212, %v979, 0
    %v1293 = vsel %vm1212, %v981, 0
    %v1295 = vsel %vm1212, %v983, 0
    %v1297 = vsel %vm1212, %v985, 0
    %v1299 = vsel %vm1212, %v987, 0
    %v1301 = vsel %vm1212, %v989, 0
    %v1303 = vsel %vm1212, %v991, 0
    %v1305 = vsel %vm1212, %v993, 0
    %v1307 = vsel %vm1212, %v995, 0
    %v1309 = vsel %vm1212, %v997, 0
    %v1311 = vsel %vm1212, %v999, 0
    %v1313 = vsel %vm1212, %v1001, 0
    %v1315 = vsel %vm1212, %v1003, 0
    %v1317 = vsel %vm1212, %v1005, 0
    %v1319 = vsel %vm1212, %v1007, 0
    %v1321 = vsel %vm1212, %v1009, 0
    %v1323 = vsel %vm1212, %v1011, 0
    %v1325 = vsel %vm1212, %v1013, 0
    %v1327 = vsel %vm1212, %v1015, 0
    %v1329 = vsel %vm1212, %v1017, 0
    %v1331 = vsel %vm1212, %v1019, 0
    %v1333 = vsel %vm1212, %v1021, 0
    %v1335 = vsel %vm1212, %v1023, 0
    %v1337 = vsel %vm1212, %v1025, 0
    %v1339 = vsel %vm1212, %v1027, 0
    %1341 = vmatprep.subr.mxu0 0.0
    %1342 = vmatpush1.xpose.msra.mxu0 %v1277
    %1343 = vmatprep.subr.mxu0 0.0
    %1344 = vmatpush1.xpose.msra.mxu0 %v1279
    %1345 = vmatprep.subr.mxu0 0.0
    %1346 = vmatpush1.xpose.msra.mxu0 %v1281
    %1347 = vmatprep.subr.mxu0 0.0
    %1348 = vmatpush1.xpose.msra.mxu0 %v1283
    %1349 = vmatprep.subr.mxu0 0.0
    %1350 = vmatpush1.xpose.msra.mxu0 %v1285
    %1351 = vmatprep.subr.mxu0 0.0
    %1352 = vmatpush1.xpose.msra.mxu0 %v1287
    %1353 = vmatprep.subr.mxu0 0.0
    %1354 = vmatpush1.xpose.msra.mxu0 %v1289
    %1355 = vmatprep.subr.mxu0 0.0
    %1356 = vmatpush1.xpose.msra.mxu0 %v1291
    %1357 = vmatprep.subr.mxu0 0.0
    %1358 = vmatpush1.xpose.msra.mxu0 %v1293
    %1359 = vmatprep.subr.mxu0 0.0
    %1360 = vmatpush1.xpose.msra.mxu0 %v1295
    %1361 = vmatprep.subr.mxu0 0.0
    %1362 = vmatpush1.xpose.msra.mxu0 %v1297
    %1363 = vmatprep.subr.mxu0 0.0
    %1364 = vmatpush1.xpose.msra.mxu0 %v1299
    %1365 = vmatprep.subr.mxu0 0.0
    %1366 = vmatpush1.xpose.msra.mxu0 %v1301
    %1367 = vmatprep.subr.mxu0 0.0
    %1368 = vmatpush1.xpose.msra.mxu0 %v1303
    %1369 = vmatprep.subr.mxu0 0.0
    %1370 = vmatpush1.xpose.msra.mxu0 %v1305
    %1371 = vmatprep.subr.mxu0 0.0
    %1372 = vmatpush1.xpose.msra.mxu0 %v1307
    %1373 = vmatprep.subr.mxu0 0.0
    %1374 = vmatpush1.xpose.msra.mxu0 %v1309
    %1375 = vmatprep.subr.mxu0 0.0
    %1376 = vmatpush1.xpose.msra.mxu0 %v1311
    %1377 = vmatprep.subr.mxu0 0.0
    %1378 = vmatpush1.xpose.msra.mxu0 %v1313
    %1379 = vmatprep.subr.mxu0 0.0
    %1380 = vmatpush1.xpose.msra.mxu0 %v1315
    %1381 = vmatprep.subr.mxu0 0.0
    %1382 = vmatpush1.xpose.msra.mxu0 %v1317
    %1383 = vmatprep.subr.mxu0 0.0
    %1384 = vmatpush1.xpose.msra.mxu0 %v1319
    %1385 = vmatprep.subr.mxu0 0.0
    %1386 = vmatpush1.xpose.msra.mxu0 %v1321
    %1387 = vmatprep.subr.mxu0 0.0
    %1388 = vmatpush1.xpose.msra.mxu0 %v1323
    %1389 = vmatprep.subr.mxu0 0.0
    %1390 = vmatpush1.xpose.msra.mxu0 %v1325
    %1391 = vmatprep.subr.mxu0 0.0
    %1392 = vmatpush1.xpose.msra.mxu0 %v1327
    %1393 = vmatprep.subr.mxu0 0.0
    %1394 = vmatpush1.xpose.msra.mxu0 %v1329
    %1395 = vmatprep.subr.mxu0 0.0
    %1396 = vmatpush1.xpose.msra.mxu0 %v1331
    %1397 = vmatprep.subr.mxu0 0.0
    %1398 = vmatpush1.xpose.msra.mxu0 %v1333
    %1399 = vmatprep.subr.mxu0 0.0
    %1400 = vmatpush1.xpose.msra.mxu0 %v1335
    %1401 = vmatprep.subr.mxu0 0.0
    %1402 = vmatpush1.xpose.msra.mxu0 %v1337
    %1403 = vmatprep.subr.mxu0 0.0
    %1404 = vmatpush1.xpose.msra.mxu0 %v1339
    %1405 = vmatprep.mubr.f32.mxu0 0.0
    %1406 = vmatmul.mubr.f32.gmra.mrb[0].mxu0 %v1213
    %v1407 = vpop.f32.mrb[0].mxu0
    %v1408 = vadd.f32 %v115, %v1407
    %v1409 = vpop.f32.mrb[0].mxu0
    %v1410 = vadd.f32 %v116, %v1409
    %1411 = vmatprep.mubr.f32.mxu0 0.0
    %1412 = vmatmul.mubr.f32.gmra.mrb[0].mxu0 %v1215
    %v1413 = vpop.f32.mrb[0].mxu0
    %v1414 = vadd.f32 %v117, %v1413
    %v1415 = vpop.f32.mrb[0].mxu0
    %v1416 = vadd.f32 %v118, %v1415
    %1417 = vmatprep.mubr.f32.mxu0 0.0
    %1418 = vmatmul.mubr.f32.gmra.mrb[0].mxu0 %v1217
    %v1419 = vpop.f32.mrb[0].mxu0
    %v1420 = vadd.f32 %v119, %v1419
    %v1421 = vpop.f32.mrb[0].mxu0
    %v1422 = vadd.f32 %v120, %v1421
    %1423 = vmatprep.mubr.f32.mxu0 0.0
    %1424 = vmatmul.mubr.f32.gmra.mrb[0].mxu0 %v1219
    %v1425 = vpop.f32.mrb[0].mxu0
    %v1426 = vadd.f32 %v121, %v1425
    %v1427 = vpop.f32.mrb[0].mxu0
    %v1428 = vadd.f32 %v122, %v1427
    %1429 = vmatprep.mubr.f32.mxu0 0.0
    %1430 = vmatmul.mubr.f32.gmra.mrb[0].mxu0 %v1221
    %v1431 = vpop.f32.mrb[0].mxu0
    %v1432 = vadd.f32 %v123, %v1431
    %v1433 = vpop.f32.mrb[0].mxu0
    %v1434 = vadd.f32 %v124, %v1433
    %1435 = vmatprep.mubr.f32.mxu0 0.0
    %1436 = vmatmul.mubr.f32.gmra.mrb[0].mxu0 %v1223
    %v1437 = vpop.f32.mrb[0].mxu0
    %v1438 = vadd.f32 %v125, %v1437
    %v1439 = vpop.f32.mrb[0].mxu0
    %v1440 = vadd.f32 %v126, %v1439
    %1441 = vmatprep.mubr.f32.mxu0 0.0
    %1442 = vmatmul.mubr.f32.gmra.mrb[0].mxu0 %v1225
    %v1443 = vpop.f32.mrb[0].mxu0
    %v1444 = vadd.f32 %v127, %v1443
    %v1445 = vpop.f32.mrb[0].mxu0
    %v1446 = vadd.f32 %v128, %v1445
    %1447 = vmatprep.mubr.f32.mxu0 0.0
    %1448 = vmatmul.mubr.f32.gmra.mrb[0].mxu0 %v1227
    %v1449 = vpop.f32.mrb[0].mxu0
    %v1450 = vadd.f32 %v129, %v1449
    %v1451 = vpop.f32.mrb[0].mxu0
    %v1452 = vadd.f32 %v130, %v1451
    %1453 = vmatprep.mubr.f32.mxu0 0.0
    %1454 = vmatmul.mubr.f32.gmra.mrb[0].mxu0 %v1229
    %v1455 = vpop.f32.mrb[0].mxu0
    %v1456 = vadd.f32 %v131, %v1455
    %v1457 = vpop.f32.mrb[0].mxu0
    %v1458 = vadd.f32 %v132, %v1457
    %1459 = vmatprep.mubr.f32.mxu0 0.0
    %1460 = vmatmul.mubr.f32.gmra.mrb[0].mxu0 %v1231
    %v1461 = vpop.f32.mrb[0].mxu0
    %v1462 = vadd.f32 %v133, %v1461
    %v1463 = vpop.f32.mrb[0].mxu0
    %v1464 = vadd.f32 %v134, %v1463
    %1465 = vmatprep.mubr.f32.mxu0 0.0
    %1466 = vmatmul.mubr.f32.gmra.mrb[0].mxu0 %v1233
    %v1467 = vpop.f32.mrb[0].mxu0
    %v1468 = vadd.f32 %v135, %v1467
    %v1469 = vpop.f32.mrb[0].mxu0
    %v1470 = vadd.f32 %v136, %v1469
    %1471 = vmatprep.mubr.f32.mxu0 0.0
    %1472 = vmatmul.mubr.f32.gmra.mrb[0].mxu0 %v1235
    %v1473 = vpop.f32.mrb[0].mxu0
    %v1474 = vadd.f32 %v137, %v1473
    %v1475 = vpop.f32.mrb[0].mxu0
    %v1476 = vadd.f32 %v138, %v1475
    %1477 = vmatprep.mubr.f32.mxu0 0.0
    %1478 = vmatmul.mubr.f32.gmra.mrb[0].mxu0 %v1237
    %v1479 = vpop.f32.mrb[0].mxu0
    %v1480 = vadd.f32 %v139, %v1479
    %v1481 = vpop.f32.mrb[0].mxu0
    %v1482 = vadd.f32 %v140, %v1481
    %1483 = vmatprep.mubr.f32.mxu0 0.0
    %1484 = vmatmul.mubr.f32.gmra.mrb[0].mxu0 %v1239
    %v1485 = vpop.f32.mrb[0].mxu0
    %v1486 = vadd.f32 %v141, %v1485
    %v1487 = vpop.f32.mrb[0].mxu0
    %v1488 = vadd.f32 %v142, %v1487
    %1489 = vmatprep.mubr.f32.mxu0 0.0
    %1490 = vmatmul.mubr.f32.gmra.mrb[0].mxu0 %v1241
    %v1491 = vpop.f32.mrb[0].mxu0
    %v1492 = vadd.f32 %v143, %v1491
    %v1493 = vpop.f32.mrb[0].mxu0
    %v1494 = vadd.f32 %v144, %v1493
    %1495 = vmatprep.mubr.f32.mxu0 0.0
    %1496 = vmatmul.mubr.f32.gmra.mrb[0].mxu0 %v1243
    %v1497 = vpop.f32.mrb[0].mxu0
    %v1498 = vadd.f32 %v145, %v1497
    %v1499 = vpop.f32.mrb[0].mxu0
    %v1500 = vadd.f32 %v146, %v1499
    %1501 = vmatprep.mubr.f32.mxu0 0.0
    %1502 = vmatmul.mubr.f32.gmra.mrb[0].mxu0 %v1245
    %v1503 = vpop.f32.mrb[0].mxu0
    %v1504 = vadd.f32 %v147, %v1503
    %v1505 = vpop.f32.mrb[0].mxu0
    %v1506 = vadd.f32 %v148, %v1505
    %1507 = vmatprep.mubr.f32.mxu0 0.0
    %1508 = vmatmul.mubr.f32.gmra.mrb[0].mxu0 %v1247
    %v1509 = vpop.f32.mrb[0].mxu0
    %v1510 = vadd.f32 %v149, %v1509
    %v1511 = vpop.f32.mrb[0].mxu0
    %v1512 = vadd.f32 %v150, %v1511
    %1513 = vmatprep.mubr.f32.mxu0 0.0
    %1514 = vmatmul.mubr.f32.gmra.mrb[0].mxu0 %v1249
    %v1515 = vpop.f32.mrb[0].mxu0
    %v1516 = vadd.f32 %v151, %v1515
    %v1517 = vpop.f32.mrb[0].mxu0
    %v1518 = vadd.f32 %v152, %v1517
    %1519 = vmatprep.mubr.f32.mxu0 0.0
    %1520 = vmatmul.mubr.f32.gmra.mrb[0].mxu0 %v1251
    %v1521 = vpop.f32.mrb[0].mxu0
    %v1522 = vadd.f32 %v153, %v1521
    %v1523 = vpop.f32.mrb[0].mxu0
    %v1524 = vadd.f32 %v154, %v1523
    %1525 = vmatprep.mubr.f32.mxu0 0.0
    %1526 = vmatmul.mubr.f32.gmra.mrb[0].mxu0 %v1253
    %v1527 = vpop.f32.mrb[0].mxu0
    %v1528 = vadd.f32 %v155, %v1527
    %v1529 = vpop.f32.mrb[0].mxu0
    %v1530 = vadd.f32 %v156, %v1529
    %1531 = vmatprep.mubr.f32.mxu0 0.0
    %1532 = vmatmul.mubr.f32.gmra.mrb[0].mxu0 %v1255
    %v1533 = vpop.f32.mrb[0].mxu0
    %v1534 = vadd.f32 %v157, %v1533
    %v1535 = vpop.f32.mrb[0].mxu0
    %v1536 = vadd.f32 %v158, %v1535
    %1537 = vmatprep.mubr.f32.mxu0 0.0
    %1538 = vmatmul.mubr.f32.gmra.mrb[0].mxu0 %v1257
    %v1539 = vpop.f32.mrb[0].mxu0
    %v1540 = vadd.f32 %v159, %v1539
    %v1541 = vpop.f32.mrb[0].mxu0
    %v1542 = vadd.f32 %v160, %v1541
    %1543 = vmatprep.mubr.f32.mxu0 0.0
    %1544 = vmatmul.mubr.f32.gmra.mrb[0].mxu0 %v1259
    %v1545 = vpop.f32.mrb[0].mxu0
    %v1546 = vadd.f32 %v161, %v1545
    %v1547 = vpop.f32.mrb[0].mxu0
    %v1548 = vadd.f32 %v162, %v1547
    %1549 = vmatprep.mubr.f32.mxu0 0.0
    %1550 = vmatmul.mubr.f32.gmra.mrb[0].mxu0 %v1261
    %v1551 = vpop.f32.mrb[0].mxu0
    %v1552 = vadd.f32 %v163, %v1551
    %v1553 = vpop.f32.mrb[0].mxu0
    %v1554 = vadd.f32 %v164, %v1553
    %1555 = vmatprep.mubr.f32.mxu0 0.0
    %1556 = vmatmul.mubr.f32.gmra.mrb[0].mxu0 %v1263
    %v1557 = vpop.f32.mrb[0].mxu0
    %v1558 = vadd.f32 %v165, %v1557
    %v1559 = vpop.f32.mrb[0].mxu0
    %v1560 = vadd.f32 %v166, %v1559
    %1561 = vmatprep.mubr.f32.mxu0 0.0
    %1562 = vmatmul.mubr.f32.gmra.mrb[0].mxu0 %v1265
    %v1563 = vpop.f32.mrb[0].mxu0
    %v1564 = vadd.f32 %v167, %v1563
    %v1565 = vpop.f32.mrb[0].mxu0
    %v1566 = vadd.f32 %v168, %v1565
    %1567 = vmatprep.mubr.f32.mxu0 0.0
    %1568 = vmatmul.mubr.f32.gmra.mrb[0].mxu0 %v1267
    %v1569 = vpop.f32.mrb[0].mxu0
    %v1570 = vadd.f32 %v169, %v1569
    %v1571 = vpop.f32.mrb[0].mxu0
    %v1572 = vadd.f32 %v170, %v1571
    %1573 = vmatprep.mubr.f32.mxu0 0.0
    %1574 = vmatmul.mubr.f32.gmra.mrb[0].mxu0 %v1269
    %v1575 = vpop.f32.mrb[0].mxu0
    %v1576 = vadd.f32 %v171, %v1575
    %v1577 = vpop.f32.mrb[0].mxu0
    %v1578 = vadd.f32 %v172, %v1577
    %1579 = vmatprep.mubr.f32.mxu0 0.0
    %1580 = vmatmul.mubr.f32.gmra.mrb[0].mxu0 %v1271
    %v1581 = vpop.f32.mrb[0].mxu0
    %v1582 = vadd.f32 %v173, %v1581
    %v1583 = vpop.f32.mrb[0].mxu0
    %v1584 = vadd.f32 %v174, %v1583
    %1585 = vmatprep.mubr.f32.mxu0 0.0
    %1586 = vmatmul.mubr.f32.gmra.mrb[0].mxu0 %v1273
    %v1587 = vpop.f32.mrb[0].mxu0
    %v1588 = vadd.f32 %v175, %v1587
    %v1589 = vpop.f32.mrb[0].mxu0
    %v1590 = vadd.f32 %v176, %v1589
    %1591 = vmatprep.mubr.f32.mxu0 0.0
    %1592 = vmatmul.mubr.f32.gmra.mrb[0].mxu0 %v1275
    %v1593 = vpop.f32.mrb[0].mxu0
    %v1594 = vadd.f32 %v177, %v1593
    %v1595 = vpop.f32.mrb[0].mxu0
    %v1596 = vadd.f32 %v178, %v1595
    %1597 = vdwg.mxu0
    %1598 = vxpose.xlu0.b32.start [1/16] %v1408, 128
    %1599 = vxpose.xlu0.b32.cont [2/16] %v1414, 128
    %1600 = vxpose.xlu0.b32.cont [3/16] %v1420, 128
    %1601 = vxpose.xlu0.b32.cont [4/16] %v1426, 128
    %1602 = vxpose.xlu0.b32.cont [5/16] %v1432, 128
    %1603 = vxpose.xlu0.b32.cont [6/16] %v1438, 128
    %1604 = vxpose.xlu0.b32.cont [7/16] %v1444, 128
    %1605 = vxpose.xlu0.b32.cont [8/16] %v1450, 128
    %1606 = vxpose.xlu0.b32.cont [9/16] %v1456, 128
    %1607 = vxpose.xlu0.b32.cont [10/16] %v1462, 128
    %1608 = vxpose.xlu0.b32.cont [11/16] %v1468, 128
    %1609 = vxpose.xlu0.b32.cont [12/16] %v1474, 128
    %1610 = vxpose.xlu0.b32.cont [13/16] %v1480, 128
    %1611 = vxpose.xlu0.b32.cont [14/16] %v1486, 128
    %1612 = vxpose.xlu0.b32.cont [15/16] %v1492, 128
    %1613 = vxpose.xlu0.b32.end [16/16] %v1498, 128
    %v1614 = vpop.trf.xlu0
    %v1615 = vpop.trf.xlu0
    %v1616 = vpop.trf.xlu0
    %v1617 = vpop.trf.xlu0
    %v1618 = vpop.trf.xlu0
    %v1619 = vpop.trf.xlu0
    %v1620 = vpop.trf.xlu0
    %v1621 = vpop.trf.xlu0
    %v1622 = vpop.trf.xlu0
    %v1623 = vpop.trf.xlu0
    %v1624 = vpop.trf.xlu0
    %v1625 = vpop.trf.xlu0
    %v1626 = vpop.trf.xlu0
    %v1627 = vpop.trf.xlu0
    %v1628 = vpop.trf.xlu0
    %v1629 = vpop.trf.xlu0
    %1630 = vxpose.xlu0.b32.start [1/16] %v1410, 128
    %1631 = vxpose.xlu0.b32.cont [2/16] %v1416, 128
    %1632 = vxpose.xlu0.b32.cont [3/16] %v1422, 128
    %1633 = vxpose.xlu0.b32.cont [4/16] %v1428, 128
    %1634 = vxpose.xlu0.b32.cont [5/16] %v1434, 128
    %1635 = vxpose.xlu0.b32.cont [6/16] %v1440, 128
    %1636 = vxpose.xlu0.b32.cont [7/16] %v1446, 128
    %1637 = vxpose.xlu0.b32.cont [8/16] %v1452, 128
    %1638 = vxpose.xlu0.b32.cont [9/16] %v1458, 128
    %1639 = vxpose.xlu0.b32.cont [10/16] %v1464, 128
    %1640 = vxpose.xlu0.b32.cont [11/16] %v1470, 128
    %1641 = vxpose.xlu0.b32.cont [12/16] %v1476, 128
    %1642 = vxpose.xlu0.b32.cont [13/16] %v1482, 128
    %1643 = vxpose.xlu0.b32.cont [14/16] %v1488, 128
    %1644 = vxpose.xlu0.b32.cont [15/16] %v1494, 128
    %1645 = vxpose.xlu0.b32.end [16/16] %v1500, 128
    %v1646 = vpop.trf.xlu0
    %v1647 = vpop.trf.xlu0
    %v1648 = vpop.trf.xlu0
    %v1649 = vpop.trf.xlu0
    %v1650 = vpop.trf.xlu0
    %v1651 = vpop.trf.xlu0
    %v1652 = vpop.trf.xlu0
    %v1653 = vpop.trf.xlu0
    %v1654 = vpop.trf.xlu0
    %v1655 = vpop.trf.xlu0
    %v1656 = vpop.trf.xlu0
    %v1657 = vpop.trf.xlu0
    %v1658 = vpop.trf.xlu0
    %v1659 = vpop.trf.xlu0
    %v1660 = vpop.trf.xlu0
    %v1661 = vpop.trf.xlu0
    %1662 = vxpose.xlu0.b32.start [1/16] %v1504, 128
    %1663 = vxpose.xlu0.b32.cont [2/16] %v1510, 128
    %1664 = vxpose.xlu0.b32.cont [3/16] %v1516, 128
    %1665 = vxpose.xlu0.b32.cont [4/16] %v1522, 128
    %1666 = vxpose.xlu0.b32.cont [5/16] %v1528, 128
    %1667 = vxpose.xlu0.b32.cont [6/16] %v1534, 128
    %1668 = vxpose.xlu0.b32.cont [7/16] %v1540, 128
    %1669 = vxpose.xlu0.b32.cont [8/16] %v1546, 128
    %1670 = vxpose.xlu0.b32.cont [9/16] %v1552, 128
    %1671 = vxpose.xlu0.b32.cont [10/16] %v1558, 128
    %1672 = vxpose.xlu0.b32.cont [11/16] %v1564, 128
    %1673 = vxpose.xlu0.b32.cont [12/16] %v1570, 128
    %1674 = vxpose.xlu0.b32.cont [13/16] %v1576, 128
    %1675 = vxpose.xlu0.b32.cont [14/16] %v1582, 128
    %1676 = vxpose.xlu0.b32.cont [15/16] %v1588, 128
    %1677 = vxpose.xlu0.b32.end [16/16] %v1594, 128
    %v1678 = vpop.trf.xlu0
    %v1679 = vpop.trf.xlu0
    %v1680 = vpop.trf.xlu0
    %v1681 = vpop.trf.xlu0
    %v1682 = vpop.trf.xlu0
    %v1683 = vpop.trf.xlu0
    %v1684 = vpop.trf.xlu0
    %v1685 = vpop.trf.xlu0
    %v1686 = vpop.trf.xlu0
    %v1687 = vpop.trf.xlu0
    %v1688 = vpop.trf.xlu0
    %v1689 = vpop.trf.xlu0
    %v1690 = vpop.trf.xlu0
    %v1691 = vpop.trf.xlu0
    %v1692 = vpop.trf.xlu0
    %v1693 = vpop.trf.xlu0
    %1694 = vxpose.xlu0.b32.start [1/16] %v1506, 128
    %1695 = vxpose.xlu0.b32.cont [2/16] %v1512, 128
    %1696 = vxpose.xlu0.b32.cont [3/16] %v1518, 128
    %1697 = vxpose.xlu0.b32.cont [4/16] %v1524, 128
    %1698 = vxpose.xlu0.b32.cont [5/16] %v1530, 128
    %1699 = vxpose.xlu0.b32.cont [6/16] %v1536, 128
    %1700 = vxpose.xlu0.b32.cont [7/16] %v1542, 128
    %1701 = vxpose.xlu0.b32.cont [8/16] %v1548, 128
    %1702 = vxpose.xlu0.b32.cont [9/16] %v1554, 128
    %1703 = vxpose.xlu0.b32.cont [10/16] %v1560, 128
    %1704 = vxpose.xlu0.b32.cont [11/16] %v1566, 128
    %1705 = vxpose.xlu0.b32.cont [12/16] %v1572, 128
    %1706 = vxpose.xlu0.b32.cont [13/16] %v1578, 128
    %1707 = vxpose.xlu0.b32.cont [14/16] %v1584, 128
    %1708 = vxpose.xlu0.b32.cont [15/16] %v1590, 128
    %1709 = vxpose.xlu0.b32.end [16/16] %v1596, 128
    %v1710 = vpop.trf.xlu0
    %v1711 = vpop.trf.xlu0
    %v1712 = vpop.trf.xlu0
    %v1713 = vpop.trf.xlu0
    %v1714 = vpop.trf.xlu0
    %v1715 = vpop.trf.xlu0
    %v1716 = vpop.trf.xlu0
    %v1717 = vpop.trf.xlu0
    %v1718 = vpop.trf.xlu0
    %v1719 = vpop.trf.xlu0
    %v1720 = vpop.trf.xlu0
    %v1721 = vpop.trf.xlu0
    %v1722 = vpop.trf.xlu0
    %v1723 = vpop.trf.xlu0
    %v1724 = vpop.trf.xlu0
    %v1725 = vpop.trf.xlu0
    %v1726 = vmax.f32 %v1408, %v1410
    %1727 = vmax.xlane.f32.xlu0 %v1726
    %v1728 = vpop.xlane.xlu0 %1727
    %v1729 = vmax.f32 %v1414, %v1416
    %1730 = vmax.xlane.f32.xlu0 %v1729
    %v1731 = vpop.xlane.xlu0 %1730
    %v1732 = vmax.f32 %v1420, %v1422
    %1733 = vmax.xlane.f32.xlu0 %v1732
    %v1734 = vpop.xlane.xlu0 %1733
    %v1735 = vmax.f32 %v1426, %v1428
    %1736 = vmax.xlane.f32.xlu0 %v1735
    %v1737 = vpop.xlane.xlu0 %1736
    %v1738 = vmax.f32 %v1432, %v1434
    %1739 = vmax.xlane.f32.xlu0 %v1738
    %v1740 = vpop.xlane.xlu0 %1739
    %v1741 = vmax.f32 %v1438, %v1440
    %1742 = vmax.xlane.f32.xlu0 %v1741
    %v1743 = vpop.xlane.xlu0 %1742
    %v1744 = vmax.f32 %v1444, %v1446
    %1745 = vmax.xlane.f32.xlu0 %v1744
    %v1746 = vpop.xlane.xlu0 %1745
    %v1747 = vmax.f32 %v1450, %v1452
    %1748 = vmax.xlane.f32.xlu0 %v1747
    %v1749 = vpop.xlane.xlu0 %1748
    %v1750 = vmax.f32 %v1456, %v1458
    %1751 = vmax.xlane.f32.xlu0 %v1750
    %v1752 = vpop.xlane.xlu0 %1751
    %v1753 = vmax.f32 %v1462, %v1464
    %1754 = vmax.xlane.f32.xlu0 %v1753
    %v1755 = vpop.xlane.xlu0 %1754
    %v1756 = vmax.f32 %v1468, %v1470
    %1757 = vmax.xlane.f32.xlu0 %v1756
    %v1758 = vpop.xlane.xlu0 %1757
    %v1759 = vmax.f32 %v1474, %v1476
    %1760 = vmax.xlane.f32.xlu0 %v1759
    %v1761 = vpop.xlane.xlu0 %1760
    %v1762 = vmax.f32 %v1480, %v1482
    %1763 = vmax.xlane.f32.xlu0 %v1762
    %v1764 = vpop.xlane.xlu0 %1763
    %v1765 = vmax.f32 %v1486, %v1488
    %1766 = vmax.xlane.f32.xlu0 %v1765
    %v1767 = vpop.xlane.xlu0 %1766
    %v1768 = vmax.f32 %v1492, %v1494
    %1769 = vmax.xlane.f32.xlu0 %v1768
    %v1770 = vpop.xlane.xlu0 %1769
    %v1771 = vmax.f32 %v1498, %v1500
    %1772 = vmax.xlane.f32.xlu0 %v1771
    %v1773 = vpop.xlane.xlu0 %1772
    %v1774 = vmax.f32 %v1504, %v1506
    %1775 = vmax.xlane.f32.xlu0 %v1774
    %v1776 = vpop.xlane.xlu0 %1775
    %v1777 = vmax.f32 %v1510, %v1512
    %1778 = vmax.xlane.f32.xlu0 %v1777
    %v1779 = vpop.xlane.xlu0 %1778
    %v1780 = vmax.f32 %v1516, %v1518
    %1781 = vmax.xlane.f32.xlu0 %v1780
    %v1782 = vpop.xlane.xlu0 %1781
    %v1783 = vmax.f32 %v1522, %v1524
    %1784 = vmax.xlane.f32.xlu0 %v1783
    %v1785 = vpop.xlane.xlu0 %1784
    %v1786 = vmax.f32 %v1528, %v1530
    %1787 = vmax.xlane.f32.xlu0 %v1786
    %v1788 = vpop.xlane.xlu0 %1787
    %v1789 = vmax.f32 %v1534, %v1536
    %1790 = vmax.xlane.f32.xlu0 %v1789
    %v1791 = vpop.xlane.xlu0 %1790
    %v1792 = vmax.f32 %v1540, %v1542
    %1793 = vmax.xlane.f32.xlu0 %v1792
    %v1794 = vpop.xlane.xlu0 %1793
    %v1795 = vmax.f32 %v1546, %v1548
    %1796 = vmax.xlane.f32.xlu0 %v1795
    %v1797 = vpop.xlane.xlu0 %1796
    %v1798 = vmax.f32 %v1552, %v1554
    %1799 = vmax.xlane.f32.xlu0 %v1798
    %v1800 = vpop.xlane.xlu0 %1799
    %v1801 = vmax.f32 %v1558, %v1560
    %1802 = vmax.xlane.f32.xlu0 %v1801
    %v1803 = vpop.xlane.xlu0 %1802
    %v1804 = vmax.f32 %v1564, %v1566
    %1805 = vmax.xlane.f32.xlu0 %v1804
    %v1806 = vpop.xlane.xlu0 %1805
    %v1807 = vmax.f32 %v1570, %v1572
    %1808 = vmax.xlane.f32.xlu0 %v1807
    %v1809 = vpop.xlane.xlu0 %1808
    %v1810 = vmax.f32 %v1576, %v1578
    %1811 = vmax.xlane.f32.xlu0 %v1810
    %v1812 = vpop.xlane.xlu0 %1811
    %v1813 = vmax.f32 %v1582, %v1584
    %1814 = vmax.xlane.f32.xlu0 %v1813
    %v1815 = vpop.xlane.xlu0 %1814
    %v1816 = vmax.f32 %v1588, %v1590
    %1817 = vmax.xlane.f32.xlu0 %v1816
    %v1818 = vpop.xlane.xlu0 %1817
    %v1819 = vmax.f32 %v1594, %v1596
    %1820 = vmax.xlane.f32.xlu0 %v1819
    %v1821 = vpop.xlane.xlu0 %1820
    %v1822 = vsub.f32 %v1408, %v1728
    %v1823 = vsub.f32 %v1410, %v1728
    %v1824 = vsub.f32 %v1414, %v1731
    %v1825 = vsub.f32 %v1416, %v1731
    %v1826 = vsub.f32 %v1420, %v1734
    %v1827 = vsub.f32 %v1422, %v1734
    %v1828 = vsub.f32 %v1426, %v1737
    %v1829 = vsub.f32 %v1428, %v1737
    %v1830 = vsub.f32 %v1432, %v1740
    %v1831 = vsub.f32 %v1434, %v1740
    %v1832 = vsub.f32 %v1438, %v1743
    %v1833 = vsub.f32 %v1440, %v1743
    %v1834 = vsub.f32 %v1444, %v1746
    %v1835 = vsub.f32 %v1446, %v1746
    %v1836 = vsub.f32 %v1450, %v1749
    %v1837 = vsub.f32 %v1452, %v1749
    %v1838 = vsub.f32 %v1456, %v1752
    %v1839 = vsub.f32 %v1458, %v1752
    %v1840 = vsub.f32 %v1462, %v1755
    %v1841 = vsub.f32 %v1464, %v1755
    %v1842 = vsub.f32 %v1468, %v1758
    %v1843 = vsub.f32 %v1470, %v1758
    %v1844 = vsub.f32 %v1474, %v1761
    %v1845 = vsub.f32 %v1476, %v1761
    %v1846 = vsub.f32 %v1480, %v1764
    %v1847 = vsub.f32 %v1482, %v1764
    %v1848 = vsub.f32 %v1486, %v1767
    %v1849 = vsub.f32 %v1488, %v1767
    %v1850 = vsub.f32 %v1492, %v1770
    %v1851 = vsub.f32 %v1494, %v1770
    %v1852 = vsub.f32 %v1498, %v1773
    %v1853 = vsub.f32 %v1500, %v1773
    %v1854 = vsub.f32 %v1504, %v1776
    %v1855 = vsub.f32 %v1506, %v1776
    %v1856 = vsub.f32 %v1510, %v1779
    %v1857 = vsub.f32 %v1512, %v1779
    %v1858 = vsub.f32 %v1516, %v1782
    %v1859 = vsub.f32 %v1518, %v1782
    %v1860 = vsub.f32 %v1522, %v1785
    %v1861 = vsub.f32 %v1524, %v1785
    %v1862 = vsub.f32 %v1528, %v1788
    %v1863 = vsub.f32 %v1530, %v1788
    %v1864 = vsub.f32 %v1534, %v1791
    %v1865 = vsub.f32 %v1536, %v1791
    %v1866 = vsub.f32 %v1540, %v1794
    %v1867 = vsub.f32 %v1542, %v1794
    %v1868 = vsub.f32 %v1546, %v1797
    %v1869 = vsub.f32 %v1548, %v1797
    %v1870 = vsub.f32 %v1552, %v1800
    %v1871 = vsub.f32 %v1554, %v1800
    %v1872 = vsub.f32 %v1558, %v1803
    %v1873 = vsub.f32 %v1560, %v1803
    %v1874 = vsub.f32 %v1564, %v1806
    %v1875 = vsub.f32 %v1566, %v1806
    %v1876 = vsub.f32 %v1570, %v1809
    %v1877 = vsub.f32 %v1572, %v1809
    %v1878 = vsub.f32 %v1576, %v1812
    %v1879 = vsub.f32 %v1578, %v1812
    %v1880 = vsub.f32 %v1582, %v1815
    %v1881 = vsub.f32 %v1584, %v1815
    %v1882 = vsub.f32 %v1588, %v1818
    %v1883 = vsub.f32 %v1590, %v1818
    %v1884 = vsub.f32 %v1594, %v1821
    %v1885 = vsub.f32 %v1596, %v1821
    %v1886 = vmul.f32 %v1822, 1.442695
    %v1887 = vpow.pop %v1886
    %v1888 = vmul.f32 %v1823, 1.442695
    %v1889 = vpow.pop %v1888
    %v1890 = vmul.f32 %v1824, 1.442695
    %v1891 = vpow.pop %v1890
    %v1892 = vmul.f32 %v1825, 1.442695
    %v1893 = vpow.pop %v1892
    %v1894 = vmul.f32 %v1826, 1.442695
    %v1895 = vpow.pop %v1894
    %v1896 = vmul.f32 %v1827, 1.442695
    %v1897 = vpow.pop %v1896
    %v1898 = vmul.f32 %v1828, 1.442695
    %v1899 = vpow.pop %v1898
    %v1900 = vmul.f32 %v1829, 1.442695
    %v1901 = vpow.pop %v1900
    %v1902 = vmul.f32 %v1830, 1.442695
    %v1903 = vpow.pop %v1902
    %v1904 = vmul.f32 %v1831, 1.442695
    %v1905 = vpow.pop %v1904
    %v1906 = vmul.f32 %v1832, 1.442695
    %v1907 = vpow.pop %v1906
    %v1908 = vmul.f32 %v1833, 1.442695
    %v1909 = vpow.pop %v1908
    %v1910 = vmul.f32 %v1834, 1.442695
    %v1911 = vpow.pop %v1910
    %v1912 = vmul.f32 %v1835, 1.442695
    %v1913 = vpow.pop %v1912
    %v1914 = vmul.f32 %v1836, 1.442695
    %v1915 = vpow.pop %v1914
    %v1916 = vmul.f32 %v1837, 1.442695
    %v1917 = vpow.pop %v1916
    %v1918 = vmul.f32 %v1838, 1.442695
    %v1919 = vpow.pop %v1918
    %v1920 = vmul.f32 %v1839, 1.442695
    %v1921 = vpow.pop %v1920
    %v1922 = vmul.f32 %v1840, 1.442695
    %v1923 = vpow.pop %v1922
    %v1924 = vmul.f32 %v1841, 1.442695
    %v1925 = vpow.pop %v1924
    %v1926 = vmul.f32 %v1842, 1.442695
    %v1927 = vpow.pop %v1926
    %v1928 = vmul.f32 %v1843, 1.442695
    %v1929 = vpow.pop %v1928
    %v1930 = vmul.f32 %v1844, 1.442695
    %v1931 = vpow.pop %v1930
    %v1932 = vmul.f32 %v1845, 1.442695
    %v1933 = vpow.pop %v1932
    %v1934 = vmul.f32 %v1846, 1.442695
    %v1935 = vpow.pop %v1934
    %v1936 = vmul.f32 %v1847, 1.442695
    %v1937 = vpow.pop %v1936
    %v1938 = vmul.f32 %v1848, 1.442695
    %v1939 = vpow.pop %v1938
    %v1940 = vmul.f32 %v1849, 1.442695
    %v1941 = vpow.pop %v1940
    %v1942 = vmul.f32 %v1850, 1.442695
    %v1943 = vpow.pop %v1942
    %v1944 = vmul.f32 %v1851, 1.442695
    %v1945 = vpow.pop %v1944
    %v1946 = vmul.f32 %v1852, 1.442695
    %v1947 = vpow.pop %v1946
    %v1948 = vmul.f32 %v1853, 1.442695
    %v1949 = vpow.pop %v1948
    %v1950 = vmul.f32 %v1854, 1.442695
    %v1951 = vpow.pop %v1950
    %v1952 = vmul.f32 %v1855, 1.442695
    %v1953 = vpow.pop %v1952
    %v1954 = vmul.f32 %v1856, 1.442695
    %v1955 = vpow.pop %v1954
    %v1956 = vmul.f32 %v1857, 1.442695
    %v1957 = vpow.pop %v1956
    %v1958 = vmul.f32 %v1858, 1.442695
    %v1959 = vpow.pop %v1958
    %v1960 = vmul.f32 %v1859, 1.442695
    %v1961 = vpow.pop %v1960
    %v1962 = vmul.f32 %v1860, 1.442695
    %v1963 = vpow.pop %v1962
    %v1964 = vmul.f32 %v1861, 1.442695
    %v1965 = vpow.pop %v1964
    %v1966 = vmul.f32 %v1862, 1.442695
    %v1967 = vpow.pop %v1966
    %v1968 = vmul.f32 %v1863, 1.442695
    %v1969 = vpow.pop %v1968
    %v1970 = vmul.f32 %v1864, 1.442695
    %v1971 = vpow.pop %v1970
    %v1972 = vmul.f32 %v1865, 1.442695
    %v1973 = vpow.pop %v1972
    %v1974 = vmul.f32 %v1866, 1.442695
    %v1975 = vpow.pop %v1974
    %v1976 = vmul.f32 %v1867, 1.442695
    %v1977 = vpow.pop %v1976
    %v1978 = vmul.f32 %v1868, 1.442695
    %v1979 = vpow.pop %v1978
    %v1980 = vmul.f32 %v1869, 1.442695
    %v1981 = vpow.pop %v1980
    %v1982 = vmul.f32 %v1870, 1.442695
    %v1983 = vpow.pop %v1982
    %v1984 = vmul.f32 %v1871, 1.442695
    %v1985 = vpow.pop %v1984
    %v1986 = vmul.f32 %v1872, 1.442695
    %v1987 = vpow.pop %v1986
    %v1988 = vmul.f32 %v1873, 1.442695
    %v1989 = vpow.pop %v1988
    %v1990 = vmul.f32 %v1874, 1.442695
    %v1991 = vpow.pop %v1990
    %v1992 = vmul.f32 %v1875, 1.442695
    %v1993 = vpow.pop %v1992
    %v1994 = vmul.f32 %v1876, 1.442695
    %v1995 = vpow.pop %v1994
    %v1996 = vmul.f32 %v1877, 1.442695
    %v1997 = vpow.pop %v1996
    %v1998 = vmul.f32 %v1878, 1.442695
    %v1999 = vpow.pop %v1998
    %v2000 = vmul.f32 %v1879, 1.442695
    %v2001 = vpow.pop %v2000
    %v2002 = vmul.f32 %v1880, 1.442695
    %v2003 = vpow.pop %v2002
    %v2004 = vmul.f32 %v1881, 1.442695
    %v2005 = vpow.pop %v2004
    %v2006 = vmul.f32 %v1882, 1.442695
    %v2007 = vpow.pop %v2006
    %v2008 = vmul.f32 %v1883, 1.442695
    %v2009 = vpow.pop %v2008
    %v2010 = vmul.f32 %v1884, 1.442695
    %v2011 = vpow.pop %v2010
    %v2012 = vmul.f32 %v1885, 1.442695
    %v2013 = vpow.pop %v2012
    %v2014 = vadd.f32 %v1887, %v1889
    %2015 = vadd.xlane.f32.xlu0 %v2014
    %v2016 = vpop.xlane.xlu0 %2015
    %v2017 = vadd.f32 %v1891, %v1893
    %2018 = vadd.xlane.f32.xlu0 %v2017
    %v2019 = vpop.xlane.xlu0 %2018
    %v2020 = vadd.f32 %v1895, %v1897
    %2021 = vadd.xlane.f32.xlu0 %v2020
    %v2022 = vpop.xlane.xlu0 %2021
    %v2023 = vadd.f32 %v1899, %v1901
    %2024 = vadd.xlane.f32.xlu0 %v2023
    %v2025 = vpop.xlane.xlu0 %2024
    %v2026 = vadd.f32 %v1903, %v1905
    %2027 = vadd.xlane.f32.xlu0 %v2026
    %v2028 = vpop.xlane.xlu0 %2027
    %v2029 = vadd.f32 %v1907, %v1909
    %2030 = vadd.xlane.f32.xlu0 %v2029
    %v2031 = vpop.xlane.xlu0 %2030
    %v2032 = vadd.f32 %v1911, %v1913
    %2033 = vadd.xlane.f32.xlu0 %v2032
    %v2034 = vpop.xlane.xlu0 %2033
    %v2035 = vadd.f32 %v1915, %v1917
    %2036 = vadd.xlane.f32.xlu0 %v2035
    %v2037 = vpop.xlane.xlu0 %2036
    %v2038 = vadd.f32 %v1919, %v1921
    %2039 = vadd.xlane.f32.xlu0 %v2038
    %v2040 = vpop.xlane.xlu0 %2039
    %v2041 = vadd.f32 %v1923, %v1925
    %2042 = vadd.xlane.f32.xlu0 %v2041
    %v2043 = vpop.xlane.xlu0 %2042
    %v2044 = vadd.f32 %v1927, %v1929
    %2045 = vadd.xlane.f32.xlu0 %v2044
    %v2046 = vpop.xlane.xlu0 %2045
    %v2047 = vadd.f32 %v1931, %v1933
    %2048 = vadd.xlane.f32.xlu0 %v2047
    %v2049 = vpop.xlane.xlu0 %2048
    %v2050 = vadd.f32 %v1935, %v1937
    %2051 = vadd.xlane.f32.xlu0 %v2050
    %v2052 = vpop.xlane.xlu0 %2051
    %v2053 = vadd.f32 %v1939, %v1941
    %2054 = vadd.xlane.f32.xlu0 %v2053
    %v2055 = vpop.xlane.xlu0 %2054
    %v2056 = vadd.f32 %v1943, %v1945
    %2057 = vadd.xlane.f32.xlu0 %v2056
    %v2058 = vpop.xlane.xlu0 %2057
    %v2059 = vadd.f32 %v1947, %v1949
    %2060 = vadd.xlane.f32.xlu0 %v2059
    %v2061 = vpop.xlane.xlu0 %2060
    %v2062 = vadd.f32 %v1951, %v1953
    %2063 = vadd.xlane.f32.xlu0 %v2062
    %v2064 = vpop.xlane.xlu0 %2063
    %v2065 = vadd.f32 %v1955, %v1957
    %2066 = vadd.xlane.f32.xlu0 %v2065
    %v2067 = vpop.xlane.xlu0 %2066
    %v2068 = vadd.f32 %v1959, %v1961
    %2069 = vadd.xlane.f32.xlu0 %v2068
    %v2070 = vpop.xlane.xlu0 %2069
    %v2071 = vadd.f32 %v1963, %v1965
    %2072 = vadd.xlane.f32.xlu0 %v2071
    %v2073 = vpop.xlane.xlu0 %2072
    %v2074 = vadd.f32 %v1967, %v1969
    %2075 = vadd.xlane.f32.xlu0 %v2074
    %v2076 = vpop.xlane.xlu0 %2075
    %v2077 = vadd.f32 %v1971, %v1973
    %2078 = vadd.xlane.f32.xlu0 %v2077
    %v2079 = vpop.xlane.xlu0 %2078
    %v2080 = vadd.f32 %v1975, %v1977
    %2081 = vadd.xlane.f32.xlu0 %v2080
    %v2082 = vpop.xlane.xlu0 %2081
    %v2083 = vadd.f32 %v1979, %v1981
    %2084 = vadd.xlane.f32.xlu0 %v2083
    %v2085 = vpop.xlane.xlu0 %2084
    %v2086 = vadd.f32 %v1983, %v1985
    %2087 = vadd.xlane.f32.xlu0 %v2086
    %v2088 = vpop.xlane.xlu0 %2087
    %v2089 = vadd.f32 %v1987, %v1989
    %2090 = vadd.xlane.f32.xlu0 %v2089
    %v2091 = vpop.xlane.xlu0 %2090
    %v2092 = vadd.f32 %v1991, %v1993
    %2093 = vadd.xlane.f32.xlu0 %v2092
    %v2094 = vpop.xlane.xlu0 %2093
    %v2095 = vadd.f32 %v1995, %v1997
    %2096 = vadd.xlane.f32.xlu0 %v2095
    %v2097 = vpop.xlane.xlu0 %2096
    %v2098 = vadd.f32 %v1999, %v2001
    %2099 = vadd.xlane.f32.xlu0 %v2098
    %v2100 = vpop.xlane.xlu0 %2099
    %v2101 = vadd.f32 %v2003, %v2005
    %2102 = vadd.xlane.f32.xlu0 %v2101
    %v2103 = vpop.xlane.xlu0 %2102
    %v2104 = vadd.f32 %v2007, %v2009
    %2105 = vadd.xlane.f32.xlu0 %v2104
    %v2106 = vpop.xlane.xlu0 %2105
    %v2107 = vadd.f32 %v2011, %v2013
    %2108 = vadd.xlane.f32.xlu0 %v2107
    %v2109 = vpop.xlane.xlu0 %2108
    %v2110 = vrcp.pop %v2016
    %v2111 = vmul.f32 %v1887, %v2110
    %v2112 = vmul.f32 %v1889, %v2110
    %v2113 = vrcp.pop %v2019
    %v2114 = vmul.f32 %v1891, %v2113
    %v2115 = vmul.f32 %v1893, %v2113
    %v2116 = vrcp.pop %v2022
    %v2117 = vmul.f32 %v1895, %v2116
    %v2118 = vmul.f32 %v1897, %v2116
    %v2119 = vrcp.pop %v2025
    %v2120 = vmul.f32 %v1899, %v2119
    %v2121 = vmul.f32 %v1901, %v2119
    %v2122 = vrcp.pop %v2028
    %v2123 = vmul.f32 %v1903, %v2122
    %v2124 = vmul.f32 %v1905, %v2122
    %v2125 = vrcp.pop %v2031
    %v2126 = vmul.f32 %v1907, %v2125
    %v2127 = vmul.f32 %v1909, %v2125
    %v2128 = vrcp.pop %v2034
    %v2129 = vmul.f32 %v1911, %v2128
    %v2130 = vmul.f32 %v1913, %v2128
    %v2131 = vrcp.pop %v2037
    %v2132 = vmul.f32 %v1915, %v2131
    %v2133 = vmul.f32 %v1917, %v2131
    %v2134 = vrcp.pop %v2040
    %v2135 = vmul.f32 %v1919, %v2134
    %v2136 = vmul.f32 %v1921, %v2134
    %v2137 = vrcp.pop %v2043
    %v2138 = vmul.f32 %v1923, %v2137
    %v2139 = vmul.f32 %v1925, %v2137
    %v2140 = vrcp.pop %v2046
    %v2141 = vmul.f32 %v1927, %v2140
    %v2142 = vmul.f32 %v1929, %v2140
    %v2143 = vrcp.pop %v2049
    %v2144 = vmul.f32 %v1931, %v2143
    %v2145 = vmul.f32 %v1933, %v2143
    %v2146 = vrcp.pop %v2052
    %v2147 = vmul.f32 %v1935, %v2146
    %v2148 = vmul.f32 %v1937, %v2146
    %v2149 = vrcp.pop %v2055
    %v2150 = vmul.f32 %v1939, %v2149
    %v2151 = vmul.f32 %v1941, %v2149
    %v2152 = vrcp.pop %v2058
    %v2153 = vmul.f32 %v1943, %v2152
    %v2154 = vmul.f32 %v1945, %v2152
    %v2155 = vrcp.pop %v2061
    %v2156 = vmul.f32 %v1947, %v2155
    %v2157 = vmul.f32 %v1949, %v2155
    %v2158 = vrcp.pop %v2064
    %v2159 = vmul.f32 %v1951, %v2158
    %v2160 = vmul.f32 %v1953, %v2158
    %v2161 = vrcp.pop %v2067
    %v2162 = vmul.f32 %v1955, %v2161
    %v2163 = vmul.f32 %v1957, %v2161
    %v2164 = vrcp.pop %v2070
    %v2165 = vmul.f32 %v1959, %v2164
    %v2166 = vmul.f32 %v1961, %v2164
    %v2167 = vrcp.pop %v2073
    %v2168 = vmul.f32 %v1963, %v2167
    %v2169 = vmul.f32 %v1965, %v2167
    %v2170 = vrcp.pop %v2076
    %v2171 = vmul.f32 %v1967, %v2170
    %v2172 = vmul.f32 %v1969, %v2170
    %v2173 = vrcp.pop %v2079
    %v2174 = vmul.f32 %v1971, %v2173
    %v2175 = vmul.f32 %v1973, %v2173
    %v2176 = vrcp.pop %v2082
    %v2177 = vmul.f32 %v1975, %v2176
    %v2178 = vmul.f32 %v1977, %v2176
    %v2179 = vrcp.pop %v2085
    %v2180 = vmul.f32 %v1979, %v2179
    %v2181 = vmul.f32 %v1981, %v2179
    %v2182 = vrcp.pop %v2088
    %v2183 = vmul.f32 %v1983, %v2182
    %v2184 = vmul.f32 %v1985, %v2182
    %v2185 = vrcp.pop %v2091
    %v2186 = vmul.f32 %v1987, %v2185
    %v2187 = vmul.f32 %v1989, %v2185
    %v2188 = vrcp.pop %v2094
    %v2189 = vmul.f32 %v1991, %v2188
    %v2190 = vmul.f32 %v1993, %v2188
    %v2191 = vrcp.pop %v2097
    %v2192 = vmul.f32 %v1995, %v2191
    %v2193 = vmul.f32 %v1997, %v2191
    %v2194 = vrcp.pop %v2100
    %v2195 = vmul.f32 %v1999, %v2194
    %v2196 = vmul.f32 %v2001, %v2194
    %v2197 = vrcp.pop %v2103
    %v2198 = vmul.f32 %v2003, %v2197
    %v2199 = vmul.f32 %v2005, %v2197
    %v2200 = vrcp.pop %v2106
    %v2201 = vmul.f32 %v2007, %v2200
    %v2202 = vmul.f32 %v2009, %v2200
    %v2203 = vrcp.pop %v2109
    %v2204 = vmul.f32 %v2011, %v2203
    %v2205 = vmul.f32 %v2013, %v2203
    %v2206 = vmax.f32 %v1614, %v1678
    %2207 = vmax.xlane.f32.xlu0 %v2206
    %v2208 = vpop.xlane.xlu0 %2207
    %v2209 = vmax.f32 %v1615, %v1679
    %2210 = vmax.xlane.f32.xlu0 %v2209
    %v2211 = vpop.xlane.xlu0 %2210
    %v2212 = vmax.f32 %v1616, %v1680
    %2213 = vmax.xlane.f32.xlu0 %v2212
    %v2214 = vpop.xlane.xlu0 %2213
    %v2215 = vmax.f32 %v1617, %v1681
    %2216 = vmax.xlane.f32.xlu0 %v2215
    %v2217 = vpop.xlane.xlu0 %2216
    %v2218 = vmax.f32 %v1618, %v1682
    %2219 = vmax.xlane.f32.xlu0 %v2218
    %v2220 = vpop.xlane.xlu0 %2219
    %v2221 = vmax.f32 %v1619, %v1683
    %2222 = vmax.xlane.f32.xlu0 %v2221
    %v2223 = vpop.xlane.xlu0 %2222
    %v2224 = vmax.f32 %v1620, %v1684
    %2225 = vmax.xlane.f32.xlu0 %v2224
    %v2226 = vpop.xlane.xlu0 %2225
    %v2227 = vmax.f32 %v1621, %v1685
    %2228 = vmax.xlane.f32.xlu0 %v2227
    %v2229 = vpop.xlane.xlu0 %2228
    %v2230 = vmax.f32 %v1622, %v1686
    %2231 = vmax.xlane.f32.xlu0 %v2230
    %v2232 = vpop.xlane.xlu0 %2231
    %v2233 = vmax.f32 %v1623, %v1687
    %2234 = vmax.xlane.f32.xlu0 %v2233
    %v2235 = vpop.xlane.xlu0 %2234
    %v2236 = vmax.f32 %v1624, %v1688
    %2237 = vmax.xlane.f32.xlu0 %v2236
    %v2238 = vpop.xlane.xlu0 %2237
    %v2239 = vmax.f32 %v1625, %v1689
    %2240 = vmax.xlane.f32.xlu0 %v2239
    %v2241 = vpop.xlane.xlu0 %2240
    %v2242 = vmax.f32 %v1626, %v1690
    %2243 = vmax.xlane.f32.xlu0 %v2242
    %v2244 = vpop.xlane.xlu0 %2243
    %v2245 = vmax.f32 %v1627, %v1691
    %2246 = vmax.xlane.f32.xlu0 %v2245
    %v2247 = vpop.xlane.xlu0 %2246
    %v2248 = vmax.f32 %v1628, %v1692
    %2249 = vmax.xlane.f32.xlu0 %v2248
    %v2250 = vpop.xlane.xlu0 %2249
    %v2251 = vmax.f32 %v1629, %v1693
    %2252 = vmax.xlane.f32.xlu0 %v2251
    %v2253 = vpop.xlane.xlu0 %2252
    %v2254 = vmax.f32 %v1646, %v1710
    %2255 = vmax.xlane.f32.xlu0 %v2254
    %v2256 = vpop.xlane.xlu0 %2255
    %v2257 = vmax.f32 %v1647, %v1711
    %2258 = vmax.xlane.f32.xlu0 %v2257
    %v2259 = vpop.xlane.xlu0 %2258
    %v2260 = vmax.f32 %v1648, %v1712
    %2261 = vmax.xlane.f32.xlu0 %v2260
    %v2262 = vpop.xlane.xlu0 %2261
    %v2263 = vmax.f32 %v1649, %v1713
    %2264 = vmax.xlane.f32.xlu0 %v2263
    %v2265 = vpop.xlane.xlu0 %2264
    %v2266 = vmax.f32 %v1650, %v1714
    %2267 = vmax.xlane.f32.xlu0 %v2266
    %v2268 = vpop.xlane.xlu0 %2267
    %v2269 = vmax.f32 %v1651, %v1715
    %2270 = vmax.xlane.f32.xlu0 %v2269
    %v2271 = vpop.xlane.xlu0 %2270
    %v2272 = vmax.f32 %v1652, %v1716
    %2273 = vmax.xlane.f32.xlu0 %v2272
    %v2274 = vpop.xlane.xlu0 %2273
    %v2275 = vmax.f32 %v1653, %v1717
    %2276 = vmax.xlane.f32.xlu0 %v2275
    %v2277 = vpop.xlane.xlu0 %2276
    %v2278 = vmax.f32 %v1654, %v1718
    %2279 = vmax.xlane.f32.xlu0 %v2278
    %v2280 = vpop.xlane.xlu0 %2279
    %v2281 = vmax.f32 %v1655, %v1719
    %2282 = vmax.xlane.f32.xlu0 %v2281
    %v2283 = vpop.xlane.xlu0 %2282
    %v2284 = vmax.f32 %v1656, %v1720
    %2285 = vmax.xlane.f32.xlu0 %v2284
    %v2286 = vpop.xlane.xlu0 %2285
    %v2287 = vmax.f32 %v1657, %v1721
    %2288 = vmax.xlane.f32.xlu0 %v2287
    %v2289 = vpop.xlane.xlu0 %2288
    %v2290 = vmax.f32 %v1658, %v1722
    %2291 = vmax.xlane.f32.xlu0 %v2290
    %v2292 = vpop.xlane.xlu0 %2291
    %v2293 = vmax.f32 %v1659, %v1723
    %2294 = vmax.xlane.f32.xlu0 %v2293
    %v2295 = vpop.xlane.xlu0 %2294
    %v2296 = vmax.f32 %v1660, %v1724
    %2297 = vmax.xlane.f32.xlu0 %v2296
    %v2298 = vpop.xlane.xlu0 %2297
    %v2299 = vmax.f32 %v1661, %v1725
    %2300 = vmax.xlane.f32.xlu0 %v2299
    %v2301 = vpop.xlane.xlu0 %2300
    %v2302 = vsub.f32 %v1614, %v2208
    %v2303 = vsub.f32 %v1678, %v2208
    %v2304 = vsub.f32 %v1615, %v2211
    %v2305 = vsub.f32 %v1679, %v2211
    %v2306 = vsub.f32 %v1616, %v2214
    %v2307 = vsub.f32 %v1680, %v2214
    %v2308 = vsub.f32 %v1617, %v2217
    %v2309 = vsub.f32 %v1681, %v2217
    %v2310 = vsub.f32 %v1618, %v2220
    %v2311 = vsub.f32 %v1682, %v2220
    %v2312 = vsub.f32 %v1619, %v2223
    %v2313 = vsub.f32 %v1683, %v2223
    %v2314 = vsub.f32 %v1620, %v2226
    %v2315 = vsub.f32 %v1684, %v2226
    %v2316 = vsub.f32 %v1621, %v2229
    %v2317 = vsub.f32 %v1685, %v2229
    %v2318 = vsub.f32 %v1622, %v2232
    %v2319 = vsub.f32 %v1686, %v2232
    %v2320 = vsub.f32 %v1623, %v2235
    %v2321 = vsub.f32 %v1687, %v2235
    %v2322 = vsub.f32 %v1624, %v2238
    %v2323 = vsub.f32 %v1688, %v2238
    %v2324 = vsub.f32 %v1625, %v2241
    %v2325 = vsub.f32 %v1689, %v2241
    %v2326 = vsub.f32 %v1626, %v2244
    %v2327 = vsub.f32 %v1690, %v2244
    %v2328 = vsub.f32 %v1627, %v2247
    %v2329 = vsub.f32 %v1691, %v2247
    %v2330 = vsub.f32 %v1628, %v2250
    %v2331 = vsub.f32 %v1692, %v2250
    %v2332 = vsub.f32 %v1629, %v2253
    %v2333 = vsub.f32 %v1693, %v2253
    %v2334 = vsub.f32 %v1646, %v2256
    %v2335 = vsub.f32 %v1710, %v2256
    %v2336 = vsub.f32 %v1647, %v2259
    %v2337 = vsub.f32 %v1711, %v2259
    %v2338 = vsub.f32 %v1648, %v2262
    %v2339 = vsub.f32 %v1712, %v2262
    %v2340 = vsub.f32 %v1649, %v2265
    %v2341 = vsub.f32 %v1713, %v2265
    %v2342 = vsub.f32 %v1650, %v2268
    %v2343 = vsub.f32 %v1714, %v2268
    %v2344 = vsub.f32 %v1651, %v2271
    %v2345 = vsub.f32 %v1715, %v2271
    %v2346 = vsub.f32 %v1652, %v2274
    %v2347 = vsub.f32 %v1716, %v2274
    %v2348 = vsub.f32 %v1653, %v2277
    %v2349 = vsub.f32 %v1717, %v2277
    %v2350 = vsub.f32 %v1654, %v2280
    %v2351 = vsub.f32 %v1718, %v2280
    %v2352 = vsub.f32 %v1655, %v2283
    %v2353 = vsub.f32 %v1719, %v2283
    %v2354 = vsub.f32 %v1656, %v2286
    %v2355 = vsub.f32 %v1720, %v2286
    %v2356 = vsub.f32 %v1657, %v2289
    %v2357 = vsub.f32 %v1721, %v2289
    %v2358 = vsub.f32 %v1658, %v2292
    %v2359 = vsub.f32 %v1722, %v2292
    %v2360 = vsub.f32 %v1659, %v2295
    %v2361 = vsub.f32 %v1723, %v2295
    %v2362 = vsub.f32 %v1660, %v2298
    %v2363 = vsub.f32 %v1724, %v2298
    %v2364 = vsub.f32 %v1661, %v2301
    %v2365 = vsub.f32 %v1725, %v2301
    %v2366 = vmul.f32 %v2302, 1.442695
    %v2367 = vpow.pop %v2366
    %v2368 = vmul.f32 %v2303, 1.442695
    %v2369 = vpow.pop %v2368
    %v2370 = vmul.f32 %v2304, 1.442695
    %v2371 = vpow.pop %v2370
    %v2372 = vmul.f32 %v2305, 1.442695
    %v2373 = vpow.pop %v2372
    %v2374 = vmul.f32 %v2306, 1.442695
    %v2375 = vpow.pop %v2374
    %v2376 = vmul.f32 %v2307, 1.442695
    %v2377 = vpow.pop %v2376
    %v2378 = vmul.f32 %v2308, 1.442695
    %v2379 = vpow.pop %v2378
    %v2380 = vmul.f32 %v2309, 1.442695
    %v2381 = vpow.pop %v2380
    %v2382 = vmul.f32 %v2310, 1.442695
    %v2383 = vpow.pop %v2382
    %v2384 = vmul.f32 %v2311, 1.442695
    %v2385 = vpow.pop %v2384
    %v2386 = vmul.f32 %v2312, 1.442695
    %v2387 = vpow.pop %v2386
    %v2388 = vmul.f32 %v2313, 1.442695
    %v2389 = vpow.pop %v2388
    %v2390 = vmul.f32 %v2314, 1.442695
    %v2391 = vpow.pop %v2390
    %v2392 = vmul.f32 %v2315, 1.442695
    %v2393 = vpow.pop %v2392
    %v2394 = vmul.f32 %v2316, 1.442695
    %v2395 = vpow.pop %v2394
    %v2396 = vmul.f32 %v2317, 1.442695
    %v2397 = vpow.pop %v2396
    %v2398 = vmul.f32 %v2318, 1.442695
    %v2399 = vpow.pop %v2398
    %v2400 = vmul.f32 %v2319, 1.442695
    %v2401 = vpow.pop %v2400
    %v2402 = vmul.f32 %v2320, 1.442695
    %v2403 = vpow.pop %v2402
    %v2404 = vmul.f32 %v2321, 1.442695
    %v2405 = vpow.pop %v2404
    %v2406 = vmul.f32 %v2322, 1.442695
    %v2407 = vpow.pop %v2406
    %v2408 = vmul.f32 %v2323, 1.442695
    %v2409 = vpow.pop %v2408
    %v2410 = vmul.f32 %v2324, 1.442695
    %v2411 = vpow.pop %v2410
    %v2412 = vmul.f32 %v2325, 1.442695
    %v2413 = vpow.pop %v2412
    %v2414 = vmul.f32 %v2326, 1.442695
    %v2415 = vpow.pop %v2414
    %v2416 = vmul.f32 %v2327, 1.442695
    %v2417 = vpow.pop %v2416
    %v2418 = vmul.f32 %v2328, 1.442695
    %v2419 = vpow.pop %v2418
    %v2420 = vmul.f32 %v2329, 1.442695
    %v2421 = vpow.pop %v2420
    %v2422 = vmul.f32 %v2330, 1.442695
    %v2423 = vpow.pop %v2422
    %v2424 = vmul.f32 %v2331, 1.442695
    %v2425 = vpow.pop %v2424
    %v2426 = vmul.f32 %v2332, 1.442695
    %v2427 = vpow.pop %v2426
    %v2428 = vmul.f32 %v2333, 1.442695
    %v2429 = vpow.pop %v2428
    %v2430 = vmul.f32 %v2334, 1.442695
    %v2431 = vpow.pop %v2430
    %v2432 = vmul.f32 %v2335, 1.442695
    %v2433 = vpow.pop %v2432
    %v2434 = vmul.f32 %v2336, 1.442695
    %v2435 = vpow.pop %v2434
    %v2436 = vmul.f32 %v2337, 1.442695
    %v2437 = vpow.pop %v2436
    %v2438 = vmul.f32 %v2338, 1.442695
    %v2439 = vpow.pop %v2438
    %v2440 = vmul.f32 %v2339, 1.442695
    %v2441 = vpow.pop %v2440
    %v2442 = vmul.f32 %v2340, 1.442695
    %v2443 = vpow.pop %v2442
    %v2444 = vmul.f32 %v2341, 1.442695
    %v2445 = vpow.pop %v2444
    %v2446 = vmul.f32 %v2342, 1.442695
    %v2447 = vpow.pop %v2446
    %v2448 = vmul.f32 %v2343, 1.442695
    %v2449 = vpow.pop %v2448
    %v2450 = vmul.f32 %v2344, 1.442695
    %v2451 = vpow.pop %v2450
    %v2452 = vmul.f32 %v2345, 1.442695
    %v2453 = vpow.pop %v2452
    %v2454 = vmul.f32 %v2346, 1.442695
    %v2455 = vpow.pop %v2454
    %v2456 = vmul.f32 %v2347, 1.442695
    %v2457 = vpow.pop %v2456
    %v2458 = vmul.f32 %v2348, 1.442695
    %v2459 = vpow.pop %v2458
    %v2460 = vmul.f32 %v2349, 1.442695
    %v2461 = vpow.pop %v2460
    %v2462 = vmul.f32 %v2350, 1.442695
    %v2463 = vpow.pop %v2462
    %v2464 = vmul.f32 %v2351, 1.442695
    %v2465 = vpow.pop %v2464
    %v2466 = vmul.f32 %v2352, 1.442695
    %v2467 = vpow.pop %v2466
    %v2468 = vmul.f32 %v2353, 1.442695
    %v2469 = vpow.pop %v2468
    %v2470 = vmul.f32 %v2354, 1.442695
    %v2471 = vpow.pop %v2470
    %v2472 = vmul.f32 %v2355, 1.442695
    %v2473 = vpow.pop %v2472
    %v2474 = vmul.f32 %v2356, 1.442695
    %v2475 = vpow.pop %v2474
    %v2476 = vmul.f32 %v2357, 1.442695
    %v2477 = vpow.pop %v2476
    %v2478 = vmul.f32 %v2358, 1.442695
    %v2479 = vpow.pop %v2478
    %v2480 = vmul.f32 %v2359, 1.442695
    %v2481 = vpow.pop %v2480
    %v2482 = vmul.f32 %v2360, 1.442695
    %v2483 = vpow.pop %v2482
    %v2484 = vmul.f32 %v2361, 1.442695
    %v2485 = vpow.pop %v2484
    %v2486 = vmul.f32 %v2362, 1.442695
    %v2487 = vpow.pop %v2486
    %v2488 = vmul.f32 %v2363, 1.442695
    %v2489 = vpow.pop %v2488
    %v2490 = vmul.f32 %v2364, 1.442695
    %v2491 = vpow.pop %v2490
    %v2492 = vmul.f32 %v2365, 1.442695
    %v2493 = vpow.pop %v2492
    %v2494 = vadd.f32 %v2367, %v2369
    %2495 = vadd.xlane.f32.xlu0 %v2494
    %v2496 = vpop.xlane.xlu0 %2495
    %v2497 = vadd.f32 %v2371, %v2373
    %2498 = vadd.xlane.f32.xlu0 %v2497
    %v2499 = vpop.xlane.xlu0 %2498
    %v2500 = vadd.f32 %v2375, %v2377
    %2501 = vadd.xlane.f32.xlu0 %v2500
    %v2502 = vpop.xlane.xlu0 %2501
    %v2503 = vadd.f32 %v2379, %v2381
    %2504 = vadd.xlane.f32.xlu0 %v2503
    %v2505 = vpop.xlane.xlu0 %2504
    %v2506 = vadd.f32 %v2383, %v2385
    %2507 = vadd.xlane.f32.xlu0 %v2506
    %v2508 = vpop.xlane.xlu0 %2507
    %v2509 = vadd.f32 %v2387, %v2389
    %2510 = vadd.xlane.f32.xlu0 %v2509
    %v2511 = vpop.xlane.xlu0 %2510
    %v2512 = vadd.f32 %v2391, %v2393
    %2513 = vadd.xlane.f32.xlu0 %v2512
    %v2514 = vpop.xlane.xlu0 %2513
    %v2515 = vadd.f32 %v2395, %v2397
    %2516 = vadd.xlane.f32.xlu0 %v2515
    %v2517 = vpop.xlane.xlu0 %2516
    %v2518 = vadd.f32 %v2399, %v2401
    %2519 = vadd.xlane.f32.xlu0 %v2518
    %v2520 = vpop.xlane.xlu0 %2519
    %v2521 = vadd.f32 %v2403, %v2405
    %2522 = vadd.xlane.f32.xlu0 %v2521
    %v2523 = vpop.xlane.xlu0 %2522
    %v2524 = vadd.f32 %v2407, %v2409
    %2525 = vadd.xlane.f32.xlu0 %v2524
    %v2526 = vpop.xlane.xlu0 %2525
    %v2527 = vadd.f32 %v2411, %v2413
    %2528 = vadd.xlane.f32.xlu0 %v2527
    %v2529 = vpop.xlane.xlu0 %2528
    %v2530 = vadd.f32 %v2415, %v2417
    %2531 = vadd.xlane.f32.xlu0 %v2530
    %v2532 = vpop.xlane.xlu0 %2531
    %v2533 = vadd.f32 %v2419, %v2421
    %2534 = vadd.xlane.f32.xlu0 %v2533
    %v2535 = vpop.xlane.xlu0 %2534
    %v2536 = vadd.f32 %v2423, %v2425
    %2537 = vadd.xlane.f32.xlu0 %v2536
    %v2538 = vpop.xlane.xlu0 %2537
    %v2539 = vadd.f32 %v2427, %v2429
    %2540 = vadd.xlane.f32.xlu0 %v2539
    %v2541 = vpop.xlane.xlu0 %2540
    %v2542 = vadd.f32 %v2431, %v2433
    %2543 = vadd.xlane.f32.xlu0 %v2542
    %v2544 = vpop.xlane.xlu0 %2543
    %v2545 = vadd.f32 %v2435, %v2437
    %2546 = vadd.xlane.f32.xlu0 %v2545
    %v2547 = vpop.xlane.xlu0 %2546
    %v2548 = vadd.f32 %v2439, %v2441
    %2549 = vadd.xlane.f32.xlu0 %v2548
    %v2550 = vpop.xlane.xlu0 %2549
    %v2551 = vadd.f32 %v2443, %v2445
    %2552 = vadd.xlane.f32.xlu0 %v2551
    %v2553 = vpop.xlane.xlu0 %2552
    %v2554 = vadd.f32 %v2447, %v2449
    %2555 = vadd.xlane.f32.xlu0 %v2554
    %v2556 = vpop.xlane.xlu0 %2555
    %v2557 = vadd.f32 %v2451, %v2453
    %2558 = vadd.xlane.f32.xlu0 %v2557
    %v2559 = vpop.xlane.xlu0 %2558
    %v2560 = vadd.f32 %v2455, %v2457
    %2561 = vadd.xlane.f32.xlu0 %v2560
    %v2562 = vpop.xlane.xlu0 %2561
    %v2563 = vadd.f32 %v2459, %v2461
    %2564 = vadd.xlane.f32.xlu0 %v2563
    %v2565 = vpop.xlane.xlu0 %2564
    %v2566 = vadd.f32 %v2463, %v2465
    %2567 = vadd.xlane.f32.xlu0 %v2566
    %v2568 = vpop.xlane.xlu0 %2567
    %v2569 = vadd.f32 %v2467, %v2469
    %2570 = vadd.xlane.f32.xlu0 %v2569
    %v2571 = vpop.xlane.xlu0 %2570
    %v2572 = vadd.f32 %v2471, %v2473
    %2573 = vadd.xlane.f32.xlu0 %v2572
    %v2574 = vpop.xlane.xlu0 %2573
    %v2575 = vadd.f32 %v2475, %v2477
    %2576 = vadd.xlane.f32.xlu0 %v2575
    %v2577 = vpop.xlane.xlu0 %2576
    %v2578 = vadd.f32 %v2479, %v2481
    %2579 = vadd.xlane.f32.xlu0 %v2578
    %v2580 = vpop.xlane.xlu0 %2579
    %v2581 = vadd.f32 %v2483, %v2485
    %2582 = vadd.xlane.f32.xlu0 %v2581
    %v2583 = vpop.xlane.xlu0 %2582
    %v2584 = vadd.f32 %v2487, %v2489
    %2585 = vadd.xlane.f32.xlu0 %v2584
    %v2586 = vpop.xlane.xlu0 %2585
    %v2587 = vadd.f32 %v2491, %v2493
    %2588 = vadd.xlane.f32.xlu0 %v2587
    %v2589 = vpop.xlane.xlu0 %2588
    %v2590 = vrcp.pop %v2496
    %v2591 = vmul.f32 %v2367, %v2590
    %v2592 = vmul.f32 %v2369, %v2590
    %v2593 = vrcp.pop %v2499
    %v2594 = vmul.f32 %v2371, %v2593
    %v2595 = vmul.f32 %v2373, %v2593
    %v2596 = vrcp.pop %v2502
    %v2597 = vmul.f32 %v2375, %v2596
    %v2598 = vmul.f32 %v2377, %v2596
    %v2599 = vrcp.pop %v2505
    %v2600 = vmul.f32 %v2379, %v2599
    %v2601 = vmul.f32 %v2381, %v2599
    %v2602 = vrcp.pop %v2508
    %v2603 = vmul.f32 %v2383, %v2602
    %v2604 = vmul.f32 %v2385, %v2602
    %v2605 = vrcp.pop %v2511
    %v2606 = vmul.f32 %v2387, %v2605
    %v2607 = vmul.f32 %v2389, %v2605
    %v2608 = vrcp.pop %v2514
    %v2609 = vmul.f32 %v2391, %v2608
    %v2610 = vmul.f32 %v2393, %v2608
    %v2611 = vrcp.pop %v2517
    %v2612 = vmul.f32 %v2395, %v2611
    %v2613 = vmul.f32 %v2397, %v2611
    %v2614 = vrcp.pop %v2520
    %v2615 = vmul.f32 %v2399, %v2614
    %v2616 = vmul.f32 %v2401, %v2614
    %v2617 = vrcp.pop %v2523
    %v2618 = vmul.f32 %v2403, %v2617
    %v2619 = vmul.f32 %v2405, %v2617
    %v2620 = vrcp.pop %v2526
    %v2621 = vmul.f32 %v2407, %v2620
    %v2622 = vmul.f32 %v2409, %v2620
    %v2623 = vrcp.pop %v2529
    %v2624 = vmul.f32 %v2411, %v2623
    %v2625 = vmul.f32 %v2413, %v2623
    %v2626 = vrcp.pop %v2532
    %v2627 = vmul.f32 %v2415, %v2626
    %v2628 = vmul.f32 %v2417, %v2626
    %v2629 = vrcp.pop %v2535
    %v2630 = vmul.f32 %v2419, %v2629
    %v2631 = vmul.f32 %v2421, %v2629
    %v2632 = vrcp.pop %v2538
    %v2633 = vmul.f32 %v2423, %v2632
    %v2634 = vmul.f32 %v2425, %v2632
    %v2635 = vrcp.pop %v2541
    %v2636 = vmul.f32 %v2427, %v2635
    %v2637 = vmul.f32 %v2429, %v2635
    %v2638 = vrcp.pop %v2544
    %v2639 = vmul.f32 %v2431, %v2638
    %v2640 = vmul.f32 %v2433, %v2638
    %v2641 = vrcp.pop %v2547
    %v2642 = vmul.f32 %v2435, %v2641
    %v2643 = vmul.f32 %v2437, %v2641
    %v2644 = vrcp.pop %v2550
    %v2645 = vmul.f32 %v2439, %v2644
    %v2646 = vmul.f32 %v2441, %v2644
    %v2647 = vrcp.pop %v2553
    %v2648 = vmul.f32 %v2443, %v2647
    %v2649 = vmul.f32 %v2445, %v2647
    %v2650 = vrcp.pop %v2556
    %v2651 = vmul.f32 %v2447, %v2650
    %v2652 = vmul.f32 %v2449, %v2650
    %v2653 = vrcp.pop %v2559
    %v2654 = vmul.f32 %v2451, %v2653
    %v2655 = vmul.f32 %v2453, %v2653
    %v2656 = vrcp.pop %v2562
    %v2657 = vmul.f32 %v2455, %v2656
    %v2658 = vmul.f32 %v2457, %v2656
    %v2659 = vrcp.pop %v2565
    %v2660 = vmul.f32 %v2459, %v2659
    %v2661 = vmul.f32 %v2461, %v2659
    %v2662 = vrcp.pop %v2568
    %v2663 = vmul.f32 %v2463, %v2662
    %v2664 = vmul.f32 %v2465, %v2662
    %v2665 = vrcp.pop %v2571
    %v2666 = vmul.f32 %v2467, %v2665
    %v2667 = vmul.f32 %v2469, %v2665
    %v2668 = vrcp.pop %v2574
    %v2669 = vmul.f32 %v2471, %v2668
    %v2670 = vmul.f32 %v2473, %v2668
    %v2671 = vrcp.pop %v2577
    %v2672 = vmul.f32 %v2475, %v2671
    %v2673 = vmul.f32 %v2477, %v2671
    %v2674 = vrcp.pop %v2580
    %v2675 = vmul.f32 %v2479, %v2674
    %v2676 = vmul.f32 %v2481, %v2674
    %v2677 = vrcp.pop %v2583
    %v2678 = vmul.f32 %v2483, %v2677
    %v2679 = vmul.f32 %v2485, %v2677
    %v2680 = vrcp.pop %v2586
    %v2681 = vmul.f32 %v2487, %v2680
    %v2682 = vmul.f32 %v2489, %v2680
    %v2683 = vrcp.pop %v2589
    %v2684 = vmul.f32 %v2491, %v2683
    %v2685 = vmul.f32 %v2493, %v2683
    %2686 = vmatprep.subr.mxu0 0.0
    %2687 = vmatpush1.msra.mxu0 %v896
    %2688 = vmatprep.subr.mxu0 0.0
    %2689 = vmatpush1.msra.mxu0 %v901
    %2690 = vmatprep.subr.mxu0 0.0
    %2691 = vmatpush1.msra.mxu0 %v1123
    %2692 = vmatprep.subr.mxu0 0.0
    %2693 = vmatpush1.msra.mxu0 %v1125
    %2694 = vmatprep.subr.mxu0 0.0
    %2695 = vmatpush1.msra.mxu0 %v1129
    %2696 = vmatprep.subr.mxu0 0.0
    %2697 = vmatpush1.msra.mxu0 %v1131
    %2698 = vmatprep.subr.mxu0 0.0
    %2699 = vmatpush1.msra.mxu0 %v1135
    %2700 = vmatprep.subr.mxu0 0.0
    %2701 = vmatpush1.msra.mxu0 %v1137
    %2702 = vmatprep.subr.mxu0 0.0
    %2703 = vmatpush1.msra.mxu0 %v1141
    %2704 = vmatprep.subr.mxu0 0.0
    %2705 = vmatpush1.msra.mxu0 %v1143
    %2706 = vmatprep.subr.mxu0 0.0
    %2707 = vmatpush1.msra.mxu0 %v1147
    %2708 = vmatprep.subr.mxu0 0.0
    %2709 = vmatpush1.msra.mxu0 %v1149
    %2710 = vmatprep.subr.mxu0 0.0
    %2711 = vmatpush1.msra.mxu0 %v1153
    %2712 = vmatprep.subr.mxu0 0.0
    %2713 = vmatpush1.msra.mxu0 %v1155
    %2714 = vmatprep.subr.mxu0 0.0
    %2715 = vmatpush1.msra.mxu0 %v1159
    %2716 = vmatprep.subr.mxu0 0.0
    %2717 = vmatpush1.msra.mxu0 %v1161
    %2718 = vmatprep.subr.mxu0 0.0
    %2719 = vmatpush1.msra.mxu0 %v1165
    %2720 = vmatprep.subr.mxu0 0.0
    %2721 = vmatpush1.msra.mxu0 %v1167
    %2722 = vmatprep.subr.mxu0 0.0
    %2723 = vmatpush1.msra.mxu0 %v1171
    %2724 = vmatprep.subr.mxu0 0.0
    %2725 = vmatpush1.msra.mxu0 %v1173
    %2726 = vmatprep.subr.mxu0 0.0
    %2727 = vmatpush1.msra.mxu0 %v1177
    %2728 = vmatprep.subr.mxu0 0.0
    %2729 = vmatpush1.msra.mxu0 %v1179
    %2730 = vmatprep.subr.mxu0 0.0
    %2731 = vmatpush1.msra.mxu0 %v1183
    %2732 = vmatprep.subr.mxu0 0.0
    %2733 = vmatpush1.msra.mxu0 %v1185
    %2734 = vmatprep.subr.mxu0 0.0
    %2735 = vmatpush1.msra.mxu0 %v1189
    %2736 = vmatprep.subr.mxu0 0.0
    %2737 = vmatpush1.msra.mxu0 %v1191
    %2738 = vmatprep.subr.mxu0 0.0
    %2739 = vmatpush1.msra.mxu0 %v1195
    %2740 = vmatprep.subr.mxu0 0.0
    %2741 = vmatpush1.msra.mxu0 %v1197
    %2742 = vmatprep.subr.mxu0 0.0
    %2743 = vmatpush1.msra.mxu0 %v1201
    %2744 = vmatprep.subr.mxu0 0.0
    %2745 = vmatpush1.msra.mxu0 %v1203
    %2746 = vmatprep.subr.mxu0 0.0
    %2747 = vmatpush1.msra.mxu0 %v1207
    %2748 = vmatprep.subr.mxu0 0.0
    %2749 = vmatpush1.msra.mxu0 %v1209
    %2750 = vmatprep.mubr.f32.mxu0 %v2112
    %2751 = vmatmul.mubr.f32.gmra.mrb[0].mxu0 %v2111
    %v2752 = vpop.f32.mrb[0].mxu0
    %v2753 = vadd.f32 0.0, %v2752
    %v2754 = vpop.f32.mrb[0].mxu0
    %2755 = vmatprep.mubr.f32.mxu0 %v2115
    %2756 = vmatmul.mubr.f32.gmra.mrb[0].mxu0 %v2114
    %v2757 = vpop.f32.mrb[0].mxu0
    %v2758 = vadd.f32 0.0, %v2757
    %v2759 = vpop.f32.mrb[0].mxu0
    %2760 = vmatprep.mubr.f32.mxu0 %v2118
    %2761 = vmatmul.mubr.f32.gmra.mrb[0].mxu0 %v2117
    %v2762 = vpop.f32.mrb[0].mxu0
    %v2763 = vadd.f32 0.0, %v2762
    %v2764 = vpop.f32.mrb[0].mxu0
    %2765 = vmatprep.mubr.f32.mxu0 %v2121
    %2766 = vmatmul.mubr.f32.gmra.mrb[0].mxu0 %v2120
    %v2767 = vpop.f32.mrb[0].mxu0
    %v2768 = vadd.f32 0.0, %v2767
    %v2769 = vpop.f32.mrb[0].mxu0
    %2770 = vmatprep.mubr.f32.mxu0 %v2124
    %2771 = vmatmul.mubr.f32.gmra.mrb[0].mxu0 %v2123
    %v2772 = vpop.f32.mrb[0].mxu0
    %v2773 = vadd.f32 0.0, %v2772
    %v2774 = vpop.f32.mrb[0].mxu0
    %2775 = vmatprep.mubr.f32.mxu0 %v2127
    %2776 = vmatmul.mubr.f32.gmra.mrb[0].mxu0 %v2126
    %v2777 = vpop.f32.mrb[0].mxu0
    %v2778 = vadd.f32 0.0, %v2777
    %v2779 = vpop.f32.mrb[0].mxu0
    %2780 = vmatprep.mubr.f32.mxu0 %v2130
    %2781 = vmatmul.mubr.f32.gmra.mrb[0].mxu0 %v2129
    %v2782 = vpop.f32.mrb[0].mxu0
    %v2783 = vadd.f32 0.0, %v2782
    %v2784 = vpop.f32.mrb[0].mxu0
    %2785 = vmatprep.mubr.f32.mxu0 %v2133
    %2786 = vmatmul.mubr.f32.gmra.mrb[0].mxu0 %v2132
    %v2787 = vpop.f32.mrb[0].mxu0
    %v2788 = vadd.f32 0.0, %v2787
    %v2789 = vpop.f32.mrb[0].mxu0
    %2790 = vmatprep.mubr.f32.mxu0 %v2136
    %2791 = vmatmul.mubr.f32.gmra.mrb[0].mxu0 %v2135
    %v2792 = vpop.f32.mrb[0].mxu0
    %v2793 = vadd.f32 0.0, %v2792
    %v2794 = vpop.f32.mrb[0].mxu0
    %2795 = vmatprep.mubr.f32.mxu0 %v2139
    %2796 = vmatmul.mubr.f32.gmra.mrb[0].mxu0 %v2138
    %v2797 = vpop.f32.mrb[0].mxu0
    %v2798 = vadd.f32 0.0, %v2797
    %v2799 = vpop.f32.mrb[0].mxu0
    %2800 = vmatprep.mubr.f32.mxu0 %v2142
    %2801 = vmatmul.mubr.f32.gmra.mrb[0].mxu0 %v2141
    %v2802 = vpop.f32.mrb[0].mxu0
    %v2803 = vadd.f32 0.0, %v2802
    %v2804 = vpop.f32.mrb[0].mxu0
    %2805 = vmatprep.mubr.f32.mxu0 %v2145
    %2806 = vmatmul.mubr.f32.gmra.mrb[0].mxu0 %v2144
    %v2807 = vpop.f32.mrb[0].mxu0
    %v2808 = vadd.f32 0.0, %v2807
    %v2809 = vpop.f32.mrb[0].mxu0
    %2810 = vmatprep.mubr.f32.mxu0 %v2148
    %2811 = vmatmul.mubr.f32.gmra.mrb[0].mxu0 %v2147
    %v2812 = vpop.f32.mrb[0].mxu0
    %v2813 = vadd.f32 0.0, %v2812
    %v2814 = vpop.f32.mrb[0].mxu0
    %2815 = vmatprep.mubr.f32.mxu0 %v2151
    %2816 = vmatmul.mubr.f32.gmra.mrb[0].mxu0 %v2150
    %v2817 = vpop.f32.mrb[0].mxu0
    %v2818 = vadd.f32 0.0, %v2817
    %v2819 = vpop.f32.mrb[0].mxu0
    %2820 = vmatprep.mubr.f32.mxu0 %v2154
    %2821 = vmatmul.mubr.f32.gmra.mrb[0].mxu0 %v2153
    %v2822 = vpop.f32.mrb[0].mxu0
    %v2823 = vadd.f32 0.0, %v2822
    %v2824 = vpop.f32.mrb[0].mxu0
    %2825 = vmatprep.mubr.f32.mxu0 %v2157
    %2826 = vmatmul.mubr.f32.gmra.mrb[0].mxu0 %v2156
    %v2827 = vpop.f32.mrb[0].mxu0
    %v2828 = vadd.f32 0.0, %v2827
    %v2829 = vpop.f32.mrb[0].mxu0
    %2830 = vmatprep.mubr.f32.mxu0 %v2160
    %2831 = vmatmul.mubr.f32.gmra.mrb[0].mxu0 %v2159
    %v2832 = vpop.f32.mrb[0].mxu0
    %v2833 = vadd.f32 0.0, %v2832
    %v2834 = vpop.f32.mrb[0].mxu0
    %2835 = vmatprep.mubr.f32.mxu0 %v2163
    %2836 = vmatmul.mubr.f32.gmra.mrb[0].mxu0 %v2162
    %v2837 = vpop.f32.mrb[0].mxu0
    %v2838 = vadd.f32 0.0, %v2837
    %v2839 = vpop.f32.mrb[0].mxu0
    %2840 = vmatprep.mubr.f32.mxu0 %v2166
    %2841 = vmatmul.mubr.f32.gmra.mrb[0].mxu0 %v2165
    %v2842 = vpop.f32.mrb[0].mxu0
    %v2843 = vadd.f32 0.0, %v2842
    %v2844 = vpop.f32.mrb[0].mxu0
    %2845 = vmatprep.mubr.f32.mxu0 %v2169
    %2846 = vmatmul.mubr.f32.gmra.mrb[0].mxu0 %v2168
    %v2847 = vpop.f32.mrb[0].mxu0
    %v2848 = vadd.f32 0.0, %v2847
    %v2849 = vpop.f32.mrb[0].mxu0
    %2850 = vmatprep.mubr.f32.mxu0 %v2172
    %2851 = vmatmul.mubr.f32.gmra.mrb[0].mxu0 %v2171
    %v2852 = vpop.f32.mrb[0].mxu0
    %v2853 = vadd.f32 0.0, %v2852
    %v2854 = vpop.f32.mrb[0].mxu0
    %2855 = vmatprep.mubr.f32.mxu0 %v2175
    %2856 = vmatmul.mubr.f32.gmra.mrb[0].mxu0 %v2174
    %v2857 = vpop.f32.mrb[0].mxu0
    %v2858 = vadd.f32 0.0, %v2857
    %v2859 = vpop.f32.mrb[0].mxu0
    %2860 = vmatprep.mubr.f32.mxu0 %v2178
    %2861 = vmatmul.mubr.f32.gmra.mrb[0].mxu0 %v2177
    %v2862 = vpop.f32.mrb[0].mxu0
    %v2863 = vadd.f32 0.0, %v2862
    %v2864 = vpop.f32.mrb[0].mxu0
    %2865 = vmatprep.mubr.f32.mxu0 %v2181
    %2866 = vmatmul.mubr.f32.gmra.mrb[0].mxu0 %v2180
    %v2867 = vpop.f32.mrb[0].mxu0
    %v2868 = vadd.f32 0.0, %v2867
    %v2869 = vpop.f32.mrb[0].mxu0
    %2870 = vmatprep.mubr.f32.mxu0 %v2184
    %2871 = vmatmul.mubr.f32.gmra.mrb[0].mxu0 %v2183
    %v2872 = vpop.f32.mrb[0].mxu0
    %v2873 = vadd.f32 0.0, %v2872
    %v2874 = vpop.f32.mrb[0].mxu0
    %2875 = vmatprep.mubr.f32.mxu0 %v2187
    %2876 = vmatmul.mubr.f32.gmra.mrb[0].mxu0 %v2186
    %v2877 = vpop.f32.mrb[0].mxu0
    %v2878 = vadd.f32 0.0, %v2877
    %v2879 = vpop.f32.mrb[0].mxu0
    %2880 = vmatprep.mubr.f32.mxu0 %v2190
    %2881 = vmatmul.mubr.f32.gmra.mrb[0].mxu0 %v2189
    %v2882 = vpop.f32.mrb[0].mxu0
    %v2883 = vadd.f32 0.0, %v2882
    %v2884 = vpop.f32.mrb[0].mxu0
    %2885 = vmatprep.mubr.f32.mxu0 %v2193
    %2886 = vmatmul.mubr.f32.gmra.mrb[0].mxu0 %v2192
    %v2887 = vpop.f32.mrb[0].mxu0
    %v2888 = vadd.f32 0.0, %v2887
    %v2889 = vpop.f32.mrb[0].mxu0
    %2890 = vmatprep.mubr.f32.mxu0 %v2196
    %2891 = vmatmul.mubr.f32.gmra.mrb[0].mxu0 %v2195
    %v2892 = vpop.f32.mrb[0].mxu0
    %v2893 = vadd.f32 0.0, %v2892
    %v2894 = vpop.f32.mrb[0].mxu0
    %2895 = vmatprep.mubr.f32.mxu0 %v2199
    %2896 = vmatmul.mubr.f32.gmra.mrb[0].mxu0 %v2198
    %v2897 = vpop.f32.mrb[0].mxu0
    %v2898 = vadd.f32 0.0, %v2897
    %v2899 = vpop.f32.mrb[0].mxu0
    %2900 = vmatprep.mubr.f32.mxu0 %v2202
    %2901 = vmatmul.mubr.f32.gmra.mrb[0].mxu0 %v2201
    %v2902 = vpop.f32.mrb[0].mxu0
    %v2903 = vadd.f32 0.0, %v2902
    %v2904 = vpop.f32.mrb[0].mxu0
    %2905 = vmatprep.mubr.f32.mxu0 %v2205
    %2906 = vmatmul.mubr.f32.gmra.mrb[0].mxu0 %v2204
    %v2907 = vpop.f32.mrb[0].mxu0
    %v2908 = vadd.f32 0.0, %v2907
    %v2909 = vpop.f32.mrb[0].mxu0
    %2910 = vdwg.mxu0
    %2911 = vmatprep.subr.mxu0 0.0
    %2912 = vmatpush1.msra.mxu0 %v800
    %2913 = vmatprep.subr.mxu0 0.0
    %2914 = vmatpush1.msra.mxu0 %v805
    %2915 = vmatprep.subr.mxu0 0.0
    %2916 = vmatpush1.msra.mxu0 %v1031
    %2917 = vmatprep.subr.mxu0 0.0
    %2918 = vmatpush1.msra.mxu0 %v1033
    %2919 = vmatprep.subr.mxu0 0.0
    %2920 = vmatpush1.msra.mxu0 %v1037
    %2921 = vmatprep.subr.mxu0 0.0
    %2922 = vmatpush1.msra.mxu0 %v1039
    %2923 = vmatprep.subr.mxu0 0.0
    %2924 = vmatpush1.msra.mxu0 %v1043
    %2925 = vmatprep.subr.mxu0 0.0
    %2926 = vmatpush1.msra.mxu0 %v1045
    %2927 = vmatprep.subr.mxu0 0.0
    %2928 = vmatpush1.msra.mxu0 %v1049
    %2929 = vmatprep.subr.mxu0 0.0
    %2930 = vmatpush1.msra.mxu0 %v1051
    %2931 = vmatprep.subr.mxu0 0.0
    %2932 = vmatpush1.msra.mxu0 %v1055
    %2933 = vmatprep.subr.mxu0 0.0
    %2934 = vmatpush1.msra.mxu0 %v1057
    %2935 = vmatprep.subr.mxu0 0.0
    %2936 = vmatpush1.msra.mxu0 %v1061
    %2937 = vmatprep.subr.mxu0 0.0
    %2938 = vmatpush1.msra.mxu0 %v1063
    %2939 = vmatprep.subr.mxu0 0.0
    %2940 = vmatpush1.msra.mxu0 %v1067
    %2941 = vmatprep.subr.mxu0 0.0
    %2942 = vmatpush1.msra.mxu0 %v1069
    %2943 = vmatprep.subr.mxu0 0.0
    %2944 = vmatpush1.msra.mxu0 %v1073
    %2945 = vmatprep.subr.mxu0 0.0
    %2946 = vmatpush1.msra.mxu0 %v1075
    %2947 = vmatprep.subr.mxu0 0.0
    %2948 = vmatpush1.msra.mxu0 %v1079
    %2949 = vmatprep.subr.mxu0 0.0
    %2950 = vmatpush1.msra.mxu0 %v1081
    %2951 = vmatprep.subr.mxu0 0.0
    %2952 = vmatpush1.msra.mxu0 %v1085
    %2953 = vmatprep.subr.mxu0 0.0
    %2954 = vmatpush1.msra.mxu0 %v1087
    %2955 = vmatprep.subr.mxu0 0.0
    %2956 = vmatpush1.msra.mxu0 %v1091
    %2957 = vmatprep.subr.mxu0 0.0
    %2958 = vmatpush1.msra.mxu0 %v1093
    %2959 = vmatprep.subr.mxu0 0.0
    %2960 = vmatpush1.msra.mxu0 %v1097
    %2961 = vmatprep.subr.mxu0 0.0
    %2962 = vmatpush1.msra.mxu0 %v1099
    %2963 = vmatprep.subr.mxu0 0.0
    %2964 = vmatpush1.msra.mxu0 %v1103
    %2965 = vmatprep.subr.mxu0 0.0
    %2966 = vmatpush1.msra.mxu0 %v1105
    %2967 = vmatprep.subr.mxu0 0.0
    %2968 = vmatpush1.msra.mxu0 %v1109
    %2969 = vmatprep.subr.mxu0 0.0
    %2970 = vmatpush1.msra.mxu0 %v1111
    %2971 = vmatprep.subr.mxu0 0.0
    %2972 = vmatpush1.msra.mxu0 %v1115
    %2973 = vmatprep.subr.mxu0 0.0
    %2974 = vmatpush1.msra.mxu0 %v1117
    %2975 = vmatprep.mubr.f32.mxu0 %v2592
    %2976 = vmatmul.mubr.f32.gmra.mrb[0].mxu0 %v2591
    %v2977 = vpop.f32.mrb[0].mxu0
    %v2978 = vadd.f32 0.0, %v2977
    %v2979 = vpop.f32.mrb[0].mxu0
    %2980 = vmatprep.mubr.f32.mxu0 %v2595
    %2981 = vmatmul.mubr.f32.gmra.mrb[0].mxu0 %v2594
    %v2982 = vpop.f32.mrb[0].mxu0
    %v2983 = vadd.f32 0.0, %v2982
    %v2984 = vpop.f32.mrb[0].mxu0
    %2985 = vmatprep.mubr.f32.mxu0 %v2598
    %2986 = vmatmul.mubr.f32.gmra.mrb[0].mxu0 %v2597
    %v2987 = vpop.f32.mrb[0].mxu0
    %v2988 = vadd.f32 0.0, %v2987
    %v2989 = vpop.f32.mrb[0].mxu0
    %2990 = vmatprep.mubr.f32.mxu0 %v2601
    %2991 = vmatmul.mubr.f32.gmra.mrb[0].mxu0 %v2600
    %v2992 = vpop.f32.mrb[0].mxu0
    %v2993 = vadd.f32 0.0, %v2992
    %v2994 = vpop.f32.mrb[0].mxu0
    %2995 = vmatprep.mubr.f32.mxu0 %v2604
    %2996 = vmatmul.mubr.f32.gmra.mrb[0].mxu0 %v2603
    %v2997 = vpop.f32.mrb[0].mxu0
    %v2998 = vadd.f32 0.0, %v2997
    %v2999 = vpop.f32.mrb[0].mxu0
    %3000 = vmatprep.mubr.f32.mxu0 %v2607
    %3001 = vmatmul.mubr.f32.gmra.mrb[0].mxu0 %v2606
    %v3002 = vpop.f32.mrb[0].mxu0
    %v3003 = vadd.f32 0.0, %v3002
    %v3004 = vpop.f32.mrb[0].mxu0
    %3005 = vmatprep.mubr.f32.mxu0 %v2610
    %3006 = vmatmul.mubr.f32.gmra.mrb[0].mxu0 %v2609
    %v3007 = vpop.f32.mrb[0].mxu0
    %v3008 = vadd.f32 0.0, %v3007
    %v3009 = vpop.f32.mrb[0].mxu0
    %3010 = vmatprep.mubr.f32.mxu0 %v2613
    %3011 = vmatmul.mubr.f32.gmra.mrb[0].mxu0 %v2612
    %v3012 = vpop.f32.mrb[0].mxu0
    %v3013 = vadd.f32 0.0, %v3012
    %v3014 = vpop.f32.mrb[0].mxu0
    %3015 = vmatprep.mubr.f32.mxu0 %v2616
    %3016 = vmatmul.mubr.f32.gmra.mrb[0].mxu0 %v2615
    %v3017 = vpop.f32.mrb[0].mxu0
    %v3018 = vadd.f32 0.0, %v3017
    %v3019 = vpop.f32.mrb[0].mxu0
    %3020 = vmatprep.mubr.f32.mxu0 %v2619
    %3021 = vmatmul.mubr.f32.gmra.mrb[0].mxu0 %v2618
    %v3022 = vpop.f32.mrb[0].mxu0
    %v3023 = vadd.f32 0.0, %v3022
    %v3024 = vpop.f32.mrb[0].mxu0
    %3025 = vmatprep.mubr.f32.mxu0 %v2622
    %3026 = vmatmul.mubr.f32.gmra.mrb[0].mxu0 %v2621
    %v3027 = vpop.f32.mrb[0].mxu0
    %v3028 = vadd.f32 0.0, %v3027
    %v3029 = vpop.f32.mrb[0].mxu0
    %3030 = vmatprep.mubr.f32.mxu0 %v2625
    %3031 = vmatmul.mubr.f32.gmra.mrb[0].mxu0 %v2624
    %v3032 = vpop.f32.mrb[0].mxu0
    %v3033 = vadd.f32 0.0, %v3032
    %v3034 = vpop.f32.mrb[0].mxu0
    %3035 = vmatprep.mubr.f32.mxu0 %v2628
    %3036 = vmatmul.mubr.f32.gmra.mrb[0].mxu0 %v2627
    %v3037 = vpop.f32.mrb[0].mxu0
    %v3038 = vadd.f32 0.0, %v3037
    %v3039 = vpop.f32.mrb[0].mxu0
    %3040 = vmatprep.mubr.f32.mxu0 %v2631
    %3041 = vmatmul.mubr.f32.gmra.mrb[0].mxu0 %v2630
    %v3042 = vpop.f32.mrb[0].mxu0
    %v3043 = vadd.f32 0.0, %v3042
    %v3044 = vpop.f32.mrb[0].mxu0
    %3045 = vmatprep.mubr.f32.mxu0 %v2634
    %3046 = vmatmul.mubr.f32.gmra.mrb[0].mxu0 %v2633
    %v3047 = vpop.f32.mrb[0].mxu0
    %v3048 = vadd.f32 0.0, %v3047
    %v3049 = vpop.f32.mrb[0].mxu0
    %3050 = vmatprep.mubr.f32.mxu0 %v2637
    %3051 = vmatmul.mubr.f32.gmra.mrb[0].mxu0 %v2636
    %v3052 = vpop.f32.mrb[0].mxu0
    %v3053 = vadd.f32 0.0, %v3052
    %v3054 = vpop.f32.mrb[0].mxu0
    %3055 = vmatprep.mubr.f32.mxu0 %v2640
    %3056 = vmatmul.mubr.f32.gmra.mrb[0].mxu0 %v2639
    %v3057 = vpop.f32.mrb[0].mxu0
    %v3058 = vadd.f32 0.0, %v3057
    %v3059 = vpop.f32.mrb[0].mxu0
    %3060 = vmatprep.mubr.f32.mxu0 %v2643
    %3061 = vmatmul.mubr.f32.gmra.mrb[0].mxu0 %v2642
    %v3062 = vpop.f32.mrb[0].mxu0
    %v3063 = vadd.f32 0.0, %v3062
    %v3064 = vpop.f32.mrb[0].mxu0
    %3065 = vmatprep.mubr.f32.mxu0 %v2646
    %3066 = vmatmul.mubr.f32.gmra.mrb[0].mxu0 %v2645
    %v3067 = vpop.f32.mrb[0].mxu0
    %v3068 = vadd.f32 0.0, %v3067
    %v3069 = vpop.f32.mrb[0].mxu0
    %3070 = vmatprep.mubr.f32.mxu0 %v2649
    %3071 = vmatmul.mubr.f32.gmra.mrb[0].mxu0 %v2648
    %v3072 = vpop.f32.mrb[0].mxu0
    %v3073 = vadd.f32 0.0, %v3072
    %v3074 = vpop.f32.mrb[0].mxu0
    %3075 = vmatprep.mubr.f32.mxu0 %v2652
    %3076 = vmatmul.mubr.f32.gmra.mrb[0].mxu0 %v2651
    %v3077 = vpop.f32.mrb[0].mxu0
    %v3078 = vadd.f32 0.0, %v3077
    %v3079 = vpop.f32.mrb[0].mxu0
    %3080 = vmatprep.mubr.f32.mxu0 %v2655
    %3081 = vmatmul.mubr.f32.gmra.mrb[0].mxu0 %v2654
    %v3082 = vpop.f32.mrb[0].mxu0
    %v3083 = vadd.f32 0.0, %v3082
    %v3084 = vpop.f32.mrb[0].mxu0
    %3085 = vmatprep.mubr.f32.mxu0 %v2658
    %3086 = vmatmul.mubr.f32.gmra.mrb[0].mxu0 %v2657
    %v3087 = vpop.f32.mrb[0].mxu0
    %v3088 = vadd.f32 0.0, %v3087
    %v3089 = vpop.f32.mrb[0].mxu0
    %3090 = vmatprep.mubr.f32.mxu0 %v2661
    %3091 = vmatmul.mubr.f32.gmra.mrb[0].mxu0 %v2660
    %v3092 = vpop.f32.mrb[0].mxu0
    %v3093 = vadd.f32 0.0, %v3092
    %v3094 = vpop.f32.mrb[0].mxu0
    %3095 = vmatprep.mubr.f32.mxu0 %v2664
    %3096 = vmatmul.mubr.f32.gmra.mrb[0].mxu0 %v2663
    %v3097 = vpop.f32.mrb[0].mxu0
    %v3098 = vadd.f32 0.0, %v3097
    %v3099 = vpop.f32.mrb[0].mxu0
    %3100 = vmatprep.mubr.f32.mxu0 %v2667
    %3101 = vmatmul.mubr.f32.gmra.mrb[0].mxu0 %v2666
    %v3102 = vpop.f32.mrb[0].mxu0
    %v3103 = vadd.f32 0.0, %v3102
    %v3104 = vpop.f32.mrb[0].mxu0
    %3105 = vmatprep.mubr.f32.mxu0 %v2670
    %3106 = vmatmul.mubr.f32.gmra.mrb[0].mxu0 %v2669
    %v3107 = vpop.f32.mrb[0].mxu0
    %v3108 = vadd.f32 0.0, %v3107
    %v3109 = vpop.f32.mrb[0].mxu0
    %3110 = vmatprep.mubr.f32.mxu0 %v2673
    %3111 = vmatmul.mubr.f32.gmra.mrb[0].mxu0 %v2672
    %v3112 = vpop.f32.mrb[0].mxu0
    %v3113 = vadd.f32 0.0, %v3112
    %v3114 = vpop.f32.mrb[0].mxu0
    %3115 = vmatprep.mubr.f32.mxu0 %v2676
    %3116 = vmatmul.mubr.f32.gmra.mrb[0].mxu0 %v2675
    %v3117 = vpop.f32.mrb[0].mxu0
    %v3118 = vadd.f32 0.0, %v3117
    %v3119 = vpop.f32.mrb[0].mxu0
    %3120 = vmatprep.mubr.f32.mxu0 %v2679
    %3121 = vmatmul.mubr.f32.gmra.mrb[0].mxu0 %v2678
    %v3122 = vpop.f32.mrb[0].mxu0
    %v3123 = vadd.f32 0.0, %v3122
    %v3124 = vpop.f32.mrb[0].mxu0
    %3125 = vmatprep.mubr.f32.mxu0 %v2682
    %3126 = vmatmul.mubr.f32.gmra.mrb[0].mxu0 %v2681
    %v3127 = vpop.f32.mrb[0].mxu0
    %v3128 = vadd.f32 0.0, %v3127
    %v3129 = vpop.f32.mrb[0].mxu0
    %3130 = vmatprep.mubr.f32.mxu0 %v2685
    %3131 = vmatmul.mubr.f32.gmra.mrb[0].mxu0 %v2684
    %v3132 = vpop.f32.mrb[0].mxu0
    %v3133 = vadd.f32 0.0, %v3132
    %v3134 = vpop.f32.mrb[0].mxu0
    %3135 = vdwg.mxu0
    %3138 = vrot.lane.b32.xlu0 %v2763, 8
    %v3139 = vpop.permute.xlu0 %3138
    %3140 = vrot.lane.b32.xlu0 %v2768, 8
    %v3141 = vpop.permute.xlu0 %3140
    %3146 = vrot.lane.b32.xlu0 %v2773, 16
    %v3147 = vpop.permute.xlu0 %3146
    %3148 = vrot.lane.b32.xlu0 %v2778, 16
    %v3149 = vpop.permute.xlu0 %3148
    %3154 = vrot.lane.b32.xlu0 %v2783, 24
    %v3155 = vpop.permute.xlu0 %3154
    %3156 = vrot.lane.b32.xlu0 %v2788, 24
    %v3157 = vpop.permute.xlu0 %3156
    %3162 = vrot.lane.b32.xlu0 %v2793, 32
    %v3163 = vpop.permute.xlu0 %3162
    %3164 = vrot.lane.b32.xlu0 %v2798, 32
    %v3165 = vpop.permute.xlu0 %3164
    %3170 = vrot.lane.b32.xlu0 %v2803, 40
    %v3171 = vpop.permute.xlu0 %3170
    %3172 = vrot.lane.b32.xlu0 %v2808, 40
    %v3173 = vpop.permute.xlu0 %3172
    %3178 = vrot.lane.b32.xlu0 %v2813, 48
    %v3179 = vpop.permute.xlu0 %3178
    %3180 = vrot.lane.b32.xlu0 %v2818, 48
    %v3181 = vpop.permute.xlu0 %3180
    %3186 = vrot.lane.b32.xlu0 %v2823, 56
    %v3187 = vpop.permute.xlu0 %3186
    %3188 = vrot.lane.b32.xlu0 %v2828, 56
    %v3189 = vpop.permute.xlu0 %3188
    %3194 = vrot.lane.b32.xlu0 %v2833, 64
    %v3195 = vpop.permute.xlu0 %3194
    %3196 = vrot.lane.b32.xlu0 %v2838, 64
    %v3197 = vpop.permute.xlu0 %3196
    %3202 = vrot.lane.b32.xlu0 %v2843, 72
    %v3203 = vpop.permute.xlu0 %3202
    %3204 = vrot.lane.b32.xlu0 %v2848, 72
    %v3205 = vpop.permute.xlu0 %3204
    %3210 = vrot.lane.b32.xlu0 %v2853, 80
    %v3211 = vpop.permute.xlu0 %3210
    %3212 = vrot.lane.b32.xlu0 %v2858, 80
    %v3213 = vpop.permute.xlu0 %3212
    %3218 = vrot.lane.b32.xlu0 %v2863, 88
    %v3219 = vpop.permute.xlu0 %3218
    %3220 = vrot.lane.b32.xlu0 %v2868, 88
    %v3221 = vpop.permute.xlu0 %3220
    %3226 = vrot.lane.b32.xlu0 %v2873, 96
    %v3227 = vpop.permute.xlu0 %3226
    %3228 = vrot.lane.b32.xlu0 %v2878, 96
    %v3229 = vpop.permute.xlu0 %3228
    %3234 = vrot.lane.b32.xlu0 %v2883, 104
    %v3235 = vpop.permute.xlu0 %3234
    %3236 = vrot.lane.b32.xlu0 %v2888, 104
    %v3237 = vpop.permute.xlu0 %3236
    %3242 = vrot.lane.b32.xlu0 %v2893, 112
    %v3243 = vpop.permute.xlu0 %3242
    %3244 = vrot.lane.b32.xlu0 %v2898, 112
    %v3245 = vpop.permute.xlu0 %3244
    %3250 = vrot.lane.b32.xlu0 %v2903, 120
    %v3251 = vpop.permute.xlu0 %3250
    %3252 = vrot.lane.b32.xlu0 %v2908, 120
    %v3253 = vpop.permute.xlu0 %3252
    %v3256 = vsel %vm1212, %v2753, %v3139
    %v3257 = vsel %vm1212, %v2758, %v3141
    %vm3258 = vcmask 130048
    %v3259 = vsel %vm3258, %v3256, %v3147
    %v3260 = vsel %vm3258, %v3257, %v3149
    %vm3261 = vcmask 195584
    %v3262 = vsel %vm3261, %v3259, %v3155
    %v3263 = vsel %vm3261, %v3260, %v3157
    %vm3264 = vcmask 261120
    %v3265 = vsel %vm3264, %v3262, %v3163
    %v3266 = vsel %vm3264, %v3263, %v3165
    %vm3267 = vcmask 326656
    %v3268 = vsel %vm3267, %v3265, %v3171
    %v3269 = vsel %vm3267, %v3266, %v3173
    %vm3270 = vcmask 392192
    %v3271 = vsel %vm3270, %v3268, %v3179
    %v3272 = vsel %vm3270, %v3269, %v3181
    %vm3273 = vcmask 457728
    %v3274 = vsel %vm3273, %v3271, %v3187
    %v3275 = vsel %vm3273, %v3272, %v3189
    %vm3276 = vcmask 523264
    %v3277 = vsel %vm3276, %v3274, %v3195
    %v3278 = vsel %vm3276, %v3275, %v3197
    %vm3279 = vcmask 588800
    %v3280 = vsel %vm3279, %v3277, %v3203
    %v3281 = vsel %vm3279, %v3278, %v3205
    %vm3282 = vcmask 654336
    %v3283 = vsel %vm3282, %v3280, %v3211
    %v3284 = vsel %vm3282, %v3281, %v3213
    %vm3285 = vcmask 719872
    %v3286 = vsel %vm3285, %v3283, %v3219
    %v3287 = vsel %vm3285, %v3284, %v3221
    %vm3288 = vcmask 785408
    %v3289 = vsel %vm3288, %v3286, %v3227
    %v3290 = vsel %vm3288, %v3287, %v3229
    %vm3291 = vcmask 850944
    %v3292 = vsel %vm3291, %v3289, %v3235
    %v3293 = vsel %vm3291, %v3290, %v3237
    %vm3294 = vcmask 916480
    %v3295 = vsel %vm3294, %v3292, %v3243
    %v3296 = vsel %vm3294, %v3293, %v3245
    %vm3297 = vcmask 982016
    %v3298 = vsel %vm3297, %v3295, %v3251
    %v3299 = vsel %vm3297, %v3296, %v3253
    %v3300 = vlaneseq
    %v3301 = vshrl.u32 %v3300, 7
    %v3302 = vsub.s32 0, %v3301
    %v3303 = vrot.slane %v180, %v3302
    %v3304 = vmul.f32 %v3298, %v3303
    %v3305 = vmul.f32 %v3299, %v3303
    %v3306 = vadd.f32 %v95, %v3304
    %v3307 = vadd.f32 %v96, %v3305
    %3308 = vst [vmem:[#allocation11] sm:$0xff] %v3306
    %3309 = vst [vmem:[#allocation11 + $0x8] sm:$0xff] %v3307
    %3312 = vrot.lane.b32.xlu0 %v2988, 8
    %v3313 = vpop.permute.xlu0 %3312
    %3314 = vrot.lane.b32.xlu0 %v2993, 8
    %v3315 = vpop.permute.xlu0 %3314
    %3320 = vrot.lane.b32.xlu0 %v2998, 16
    %v3321 = vpop.permute.xlu0 %3320
    %3322 = vrot.lane.b32.xlu0 %v3003, 16
    %v3323 = vpop.permute.xlu0 %3322
    %3328 = vrot.lane.b32.xlu0 %v3008, 24
    %v3329 = vpop.permute.xlu0 %3328
    %3330 = vrot.lane.b32.xlu0 %v3013, 24
    %v3331 = vpop.permute.xlu0 %3330
    %3336 = vrot.lane.b32.xlu0 %v3018, 32
    %v3337 = vpop.permute.xlu0 %3336
    %3338 = vrot.lane.b32.xlu0 %v3023, 32
    %v3339 = vpop.permute.xlu0 %3338
    %3344 = vrot.lane.b32.xlu0 %v3028, 40
    %v3345 = vpop.permute.xlu0 %3344
    %3346 = vrot.lane.b32.xlu0 %v3033, 40
    %v3347 = vpop.permute.xlu0 %3346
    %3352 = vrot.lane.b32.xlu0 %v3038, 48
    %v3353 = vpop.permute.xlu0 %3352
    %3354 = vrot.lane.b32.xlu0 %v3043, 48
    %v3355 = vpop.permute.xlu0 %3354
    %3360 = vrot.lane.b32.xlu0 %v3048, 56
    %v3361 = vpop.permute.xlu0 %3360
    %3362 = vrot.lane.b32.xlu0 %v3053, 56
    %v3363 = vpop.permute.xlu0 %3362
    %3368 = vrot.lane.b32.xlu0 %v3058, 64
    %v3369 = vpop.permute.xlu0 %3368
    %3370 = vrot.lane.b32.xlu0 %v3063, 64
    %v3371 = vpop.permute.xlu0 %3370
    %3376 = vrot.lane.b32.xlu0 %v3068, 72
    %v3377 = vpop.permute.xlu0 %3376
    %3378 = vrot.lane.b32.xlu0 %v3073, 72
    %v3379 = vpop.permute.xlu0 %3378
    %3384 = vrot.lane.b32.xlu0 %v3078, 80
    %v3385 = vpop.permute.xlu0 %3384
    %3386 = vrot.lane.b32.xlu0 %v3083, 80
    %v3387 = vpop.permute.xlu0 %3386
    %3392 = vrot.lane.b32.xlu0 %v3088, 88
    %v3393 = vpop.permute.xlu0 %3392
    %3394 = vrot.lane.b32.xlu0 %v3093, 88
    %v3395 = vpop.permute.xlu0 %3394
    %3400 = vrot.lane.b32.xlu0 %v3098, 96
    %v3401 = vpop.permute.xlu0 %3400
    %3402 = vrot.lane.b32.xlu0 %v3103, 96
    %v3403 = vpop.permute.xlu0 %3402
    %3408 = vrot.lane.b32.xlu0 %v3108, 104
    %v3409 = vpop.permute.xlu0 %3408
    %3410 = vrot.lane.b32.xlu0 %v3113, 104
    %v3411 = vpop.permute.xlu0 %3410
    %3416 = vrot.lane.b32.xlu0 %v3118, 112
    %v3417 = vpop.permute.xlu0 %3416
    %3418 = vrot.lane.b32.xlu0 %v3123, 112
    %v3419 = vpop.permute.xlu0 %3418
    %3424 = vrot.lane.b32.xlu0 %v3128, 120
    %v3425 = vpop.permute.xlu0 %3424
    %3426 = vrot.lane.b32.xlu0 %v3133, 120
    %v3427 = vpop.permute.xlu0 %3426
    %v3430 = vsel %vm1212, %v2978, %v3313
    %v3431 = vsel %vm1212, %v2983, %v3315
    %v3432 = vsel %vm3258, %v3430, %v3321
    %v3433 = vsel %vm3258, %v3431, %v3323
    %v3434 = vsel %vm3261, %v3432, %v3329
    %v3435 = vsel %vm3261, %v3433, %v3331
    %v3436 = vsel %vm3264, %v3434, %v3337
    %v3437 = vsel %vm3264, %v3435, %v3339
    %v3438 = vsel %vm3267, %v3436, %v3345
    %v3439 = vsel %vm3267, %v3437, %v3347
    %v3440 = vsel %vm3270, %v3438, %v3353
    %v3441 = vsel %vm3270, %v3439, %v3355
    %v3442 = vsel %vm3273, %v3440, %v3361
    %v3443 = vsel %vm3273, %v3441, %v3363
    %v3444 = vsel %vm3276, %v3442, %v3369
    %v3445 = vsel %vm3276, %v3443, %v3371
    %v3446 = vsel %vm3279, %v3444, %v3377
    %v3447 = vsel %vm3279, %v3445, %v3379
    %v3448 = vsel %vm3282, %v3446, %v3385
    %v3449 = vsel %vm3282, %v3447, %v3387
    %v3450 = vsel %vm3285, %v3448, %v3393
    %v3451 = vsel %vm3285, %v3449, %v3395
    %v3452 = vsel %vm3288, %v3450, %v3401
    %v3453 = vsel %vm3288, %v3451, %v3403
    %v3454 = vsel %vm3291, %v3452, %v3409
    %v3455 = vsel %vm3291, %v3453, %v3411
    %v3456 = vsel %vm3294, %v3454, %v3417
    %v3457 = vsel %vm3294, %v3455, %v3419
    %v3458 = vsel %vm3297, %v3456, %v3425
    %v3459 = vsel %vm3297, %v3457, %v3427
    %v3460 = vlaneseq
    %v3461 = vshrl.u32 %v3460, 7
    %v3462 = vsub.s32 1, %v3461
    %v3463 = vrot.slane %v180, %v3462
    %v3464 = vmul.f32 %v3458, %v3463
    %v3465 = vmul.f32 %v3459, %v3463
    %v3466 = vadd.f32 %v97, %v3464
    %v3467 = vadd.f32 %v98, %v3465
    %3468 = vst [vmem:[#allocation12] sm:$0xff] %v3466
    %3469 = vst [vmem:[#allocation12 + $0x8] sm:$0xff] %v3467
    // Predicated region
    $region46: #{tpu_custom_call.1} parent=1 // pred_check
      _
    $region47: #{tpu_custom_call.1} parent=1 // pred_check_branch
      %3471 = sbr.rel (0) target = $region49
    $region48: #{tpu_custom_call.1} parent=1 // pred_region
      %s3473 = ssub.s32 256, 256
      %3474 = vsyncadd [#allocation4], %s3473
      %s3475 = sshll.u32 [#allocation11], 4
      %s3476 = int_to_ptr.vmem [resolvable:$true] %s3475
      %3481 = dma.vmem_to_hbm [thread:$0]  %s3476, 256, %s6, [#allocation4], 128, 128, 8
    $region49: #{tpu_custom_call.1} parent=1 // pred_fallthru
      _
    // Predicated region
    $region50: #{tpu_custom_call.1} parent=1 // pred_check
      _
    $region51: #{tpu_custom_call.1} parent=1 // pred_check_branch
      %3483 = sbr.rel (0) target = $region53
    $region52: #{tpu_custom_call.1} parent=1 // pred_region
      %s3485 = ssub.s32 256, 256
      %3486 = vsyncadd [#allocation13], %s3485
      %s3487 = sshll.u32 [#allocation12], 4
      %s3488 = int_to_ptr.vmem [resolvable:$true] %s3487
      %3493 = dma.vmem_to_hbm [thread:$0]  %s3488, 256, %s7, [#allocation13], 128, 128, 8
    $region53: #{tpu_custom_call.1} parent=1 // pred_fallthru
      _
    // Predicated region
    $region54: #{tpu_custom_call.1} parent=1 // pred_check
      _
    $region55: #{tpu_custom_call.1} parent=1 // pred_check_branch
      %3495 = sbr.rel (0) target = $region57
    $region56: #{tpu_custom_call.1} parent=1 // pred_region
      %3496 = dma.done [#allocation4], 256
    $region57: #{tpu_custom_call.1} parent=1 // pred_fallthru
      _
    // Predicated region
    $region58: #{tpu_custom_call.1} parent=1 // pred_check
      _
    $region59: #{tpu_custom_call.1} parent=1 // pred_check_branch
      %3498 = sbr.rel (0) target = $region61
    $region60: #{tpu_custom_call.1} parent=1 // pred_region
      %3499 = dma.done [#allocation13], 256
    $region61: #{tpu_custom_call.1} parent=1 // pred_fallthru
      _
    %3500 = vsyncpa [#allocation3], 1
    %3501 = vsyncpa [#allocation6], 1
    %3502 = vsyncpa [#allocation9], 1
    %3503 = vsyncpa [#allocation4], 1
    %3504 = vsyncpa [#allocation13], 1

</llo_original>
